<compile_context>
chip_gen: v7x
topology: tpu7x:2x2x1
jax: 0.10.0
libtpu: 0.0.40
codegen_flags: <defaults>
</compile_context>

<pallas_src>
import functools

import jax
import jax.numpy as jnp
from jax.experimental import pallas as pl
from jax.experimental.pallas import tpu as pltpu


# ----------------------------------------------------------------------------
# Globals / helpers
# ----------------------------------------------------------------------------
_INV_SQRT2 = 0.7071067811865476


def _round_up(v, m):
    return v + (-v) % m


def _vmem_limit():
    # generation-aware scoped-VMEM budget (v5e/v6e: 128 MiB, v7x: 64 MiB/TC)
    try:
        cap = int(pltpu.get_tpu_info().vmem_capacity_bytes)
    except Exception:
        cap = 64 * 1024 * 1024
    return int(min(cap * 3 // 4, 96 * 1024 * 1024))


_VMEM_LIMIT = _vmem_limit()


def _pick_tile_m(M, per_col_bytes, fixed_bytes=0):
    """Pick the M tile: budget-complete (all tiled blocks, x2 buffering) and
    core-aware (>=2 tiles when M allows, so v7x's two TensorCores both work)."""
    Mp = _round_up(max(M, 1), 128)
    budget = max(_VMEM_LIMIT // 2 - fixed_bytes, 2 * 1024 * 1024)
    tm = (budget // max(per_col_bytes, 1)) // 128 * 128
    tm = max(128, min(tm, 2048, Mp))
    if Mp >= 256:
        tm = min(tm, _round_up(Mp // 2, 128))
    Mp = _round_up(Mp, tm)
    return tm, Mp


def _gelu(x):
    # exact (erf) GELU, matching torch.nn.GELU default
    return 0.5 * x * (1.0 + jax.lax.erf(x * _INV_SQRT2))


# ----------------------------------------------------------------------------
# Pallas kernels
# ----------------------------------------------------------------------------
def _mm_nt_kernel(*refs, apply_gelu, has_norm, has_res):
    """out(N, tm) = W(N, K) @ gelu(x(K, tm) * scale(1, tm) + shift) (+ res)."""
    i = 0
    x_ref = refs[i]; i += 1
    w_ref = refs[i]; i += 1
    if has_norm:
        sc_ref, sh_ref = refs[i], refs[i + 1]; i += 2
    if has_res:
        r_ref = refs[i]; i += 1
    o_ref = refs[i]

    x = x_ref[...]
    if has_norm:
        x = x * sc_ref[...] + sh_ref[...]            # fused InstanceNorm affine
    if apply_gelu:
        x = _gelu(x)
    w = w_ref[...]
    acc = jnp.dot(w, x.astype(w.dtype), preferred_element_type=jnp.float32)
    if has_res:
        acc = acc + r_ref[...]                       # fused residual epilogue
    o_ref[...] = acc


def _mm_nt2_kernel(x_ref, w1_ref, w2_ref, o_ref):
    """Fused 1x1 -> GELU -> 1x1 (final_conv): intermediate never leaves VMEM."""
    h = jnp.dot(w1_ref[...], x_ref[...], preferred_element_type=jnp.float32)
    h = _gelu(h)
    o_ref[...] = jnp.dot(w2_ref[...], h.astype(w2_ref.dtype),
                         preferred_element_type=jnp.float32)


def _conv3_kernel(x_ref, w_ref, o_ref, *, offs, apply_gelu):
    """3x3 conv via in-kernel 9-tap accumulation over a flat padded slab.

    x_ref : (Kp, Min_p)  zero-padded activation, flat (C, B*Hp*Wp) layout
    w_ref : (9, Np, Kp)  per-tap weight matrices
    o_ref : (Np, Mo_p)   output in padded spatial coordinates (cropped outside)
    """
    x = x_ref[...]
    if apply_gelu:
        x = _gelu(x)                                 # gelu(0)=0 keeps zero-pad exact
    x = x.astype(w_ref.dtype)
    mo = o_ref.shape[-1]
    acc = jnp.zeros(o_ref.shape, jnp.float32)
    for t, off in enumerate(offs):                   # static, unrolled
        acc = acc + jnp.dot(w_ref[t], x[:, off:off + mo],
                            preferred_element_type=jnp.float32)
    o_ref[...] = acc


# ----------------------------------------------------------------------------
# Pallas wrappers
# ----------------------------------------------------------------------------
def matmul_nt(x, w, *, apply_gelu=False, scale=None, shift=None, residual=None,
              w_dtype=jnp.bfloat16):
    """out = w @ f(x) (+ residual), f = GELU(x * scale + shift) as configured.

    x: (K, M) with all batch/group dims pre-folded into the lane-dense M axis.
    w: (N, K).  scale/shift: optional (M,) per-column affine.  residual: (N, M).
    Returns (N, M) float32.
    """
    K, M = x.shape
    N = w.shape[0]
    has_norm = scale is not None
    has_res = residual is not None
    prologue = has_norm or apply_gelu

    x_dtype = jnp.float32 if prologue else w_dtype   # pre-cast when no prologue
    xbytes = jnp.dtype(x_dtype).itemsize
    Kp = _round_up(K, 8 if xbytes == 4 else 16)
    Np = _round_up(N, 8)

    per_col = 2 * (Kp * xbytes + Np * 4)             # x + out, double-buffered
    if has_res:
        per_col += 2 * Np * 4
    if has_norm:
        per_col += 2 * 2 * 4
    fixed = 2 * Np * Kp * jnp.dtype(w_dtype).itemsize
    tm, Mp = _pick_tile_m(M, per_col, fixed)

    xp = jnp.pad(x.astype(x_dtype), ((0, Kp - K), (0, Mp - M)))
    wp = jnp.pad(w.astype(w_dtype), ((0, Np - N), (0, Kp - K)))

    inputs = [xp, wp]
    in_specs = [pl.BlockSpec((Kp, tm), lambda i: (0, i)),
                pl.BlockSpec((Np, Kp), lambda i: (0, 0))]
    if has_norm:
        sp = jnp.pad(scale.astype(jnp.float32)[None, :], ((0, 0), (0, Mp - M)))
        bp = jnp.pad(shift.astype(jnp.float32)[None, :], ((0, 0), (0, Mp - M)))
        inputs += [sp, bp]
        in_specs += [pl.BlockSpec((1, tm), lambda i: (0, i)),
                     pl.BlockSpec((1, tm), lambda i: (0, i))]
    if has_res:
        rp = jnp.pad(residual.astype(jnp.float32), ((0, Np - N), (0, Mp - M)))
        inputs.append(rp)
        in_specs.append(pl.BlockSpec((Np, tm), lambda i: (0, i)))

    out = pl.pallas_call(
        functools.partial(_mm_nt_kernel, apply_gelu=apply_gelu,
                          has_norm=has_norm, has_res=has_res),
        out_shape=jax.ShapeDtypeStruct((Np, Mp), jnp.float32),
        grid=(Mp // tm,),
        in_specs=in_specs,
        out_specs=pl.BlockSpec((Np, tm), lambda i: (0, i)),
        compiler_params=pltpu.CompilerParams(
            dimension_semantics=("parallel",),
            vmem_limit_bytes=_VMEM_LIMIT),
    )(*inputs)
    if Np == N and Mp == M:
        return out
    return out[:N, :M]


def conv3x3(x, W, *, apply_gelu=True):
    """3x3 conv, stride 1, pad 1, no bias.  `x` is already InstanceNorm'ed; the
    GELU is fused in-kernel on the zero-padded slab (gelu(0)=0 => identical to
    PyTorch's zero-pad of the activated tensor).  No HBM im2col."""
    B, C, T, F = x.shape
    Cout = W.shape[0]
    Hp, Wp_ = T + 2, F + 2
    xp = jnp.pad(x.astype(jnp.float32), ((0, 0), (0, 0), (1, 1), (1, 1)))

    Kp = _round_up(C, 8)
    Np = _round_up(Cout, 8)
    Mo = B * Hp * Wp_
    Mo_p = _round_up(Mo, 128)
    Min_p = Mo_p + _round_up(2 * Wp_ + 2, 128)       # halo for the largest tap

    xf = xp.transpose(1, 0, 2, 3).reshape(C, Mo)
    xf = jnp.pad(xf, ((0, Kp - C), (0, Min_p - Mo)))
    wf = jnp.pad(W.transpose(2, 3, 0, 1).astype(jnp.bfloat16),
                 ((0, 0), (0, 0), (0, Np - Cout), (0, Kp - C))).reshape(9, Np, Kp)
    offs = tuple(kh * Wp_ + kw for kh in range(3) for kw in range(3))

    out = pl.pallas_call(
        functools.partial(_conv3_kernel, offs=offs, apply_gelu=apply_gelu),
        out_shape=jax.ShapeDtypeStruct((Np, Mo_p), jnp.float32),
        grid=(1,),
        in_specs=[pl.BlockSpec((Kp, Min_p), lambda i: (0, 0)),
                  pl.BlockSpec((9, Np, Kp), lambda i: (0, 0, 0))],
        out_specs=pl.BlockSpec((Np, Mo_p), lambda i: (0, 0)),
        compiler_params=pltpu.CompilerParams(
            dimension_semantics=("arbitrary",),
            vmem_limit_bytes=_VMEM_LIMIT),
    )(xf, wf)

    out = out[:Cout, :Mo].reshape(Cout, B, Hp, Wp_)[:, :, :T, :F]
    return out.transpose(1, 0, 2, 3)


def conv1x1_pair(x, W1, W2):
    """final_conv: Conv1x1 -> GELU -> Conv1x1 fused into one kernel."""
    B, C, H, Wd = x.shape
    mid, out_c = W1.shape[0], W2.shape[0]
    M = B * H * Wd
    Kp = _round_up(C, 16)
    Hd = _round_up(mid, 16)
    Np = _round_up(out_c, 8)

    per_col = 2 * (Kp * 2 + Np * 4) + Hd * 4
    fixed = 2 * (Hd * Kp + Np * Hd) * 2
    tm, Mp = _pick_tile_m(M, per_col, fixed)

    xm = x.transpose(1, 0, 2, 3).reshape(C, M).astype(jnp.bfloat16)
    xp = jnp.pad(xm, ((0, Kp - C), (0, Mp - M)))
    w1 = jnp.pad(W1.reshape(mid, C).astype(jnp.bfloat16), ((0, Hd - mid), (0, Kp - C)))
    w2 = jnp.pad(W2.reshape(out_c, mid).astype(jnp.bfloat16), ((0, Np - out_c), (0, Hd - mid)))

    out = pl.pallas_call(
        _mm_nt2_kernel,
        out_shape=jax.ShapeDtypeStruct((Np, Mp), jnp.float32),
        grid=(Mp // tm,),
        in_specs=[pl.BlockSpec((Kp, tm), lambda i: (0, i)),
                  pl.BlockSpec((Hd, Kp), lambda i: (0, 0)),
                  pl.BlockSpec((Np, Hd), lambda i: (0, 0))],
        out_specs=pl.BlockSpec((Np, tm), lambda i: (0, i)),
        compiler_params=pltpu.CompilerParams(
            dimension_semantics=("parallel",),
            vmem_limit_bytes=_VMEM_LIMIT),
    )(xp, w1, w2)
    return out[:out_c, :M].reshape(out_c, B, H, Wd).transpose(1, 0, 2, 3)


# ----------------------------------------------------------------------------
# Layer helpers (layout glue in jnp, compute in Pallas)
# ----------------------------------------------------------------------------
def instance_norm_stats(x, gamma, beta, eps=1e-5):
    """Per-(B, C) affine (a, b) such that InstanceNorm(x) = x * a + b."""
    mean = x.mean(axis=(2, 3))
    var = x.var(axis=(2, 3))                         # biased, matches torch
    a = gamma[None, :] * jax.lax.rsqrt(var + eps)
    b = beta[None, :] - mean * a
    return a, b


def instance_norm(x, gamma, beta, eps=1e-5):
    a, b = instance_norm_stats(x, gamma, beta, eps)
    return x * a[:, :, None, None] + b[:, :, None, None]


def conv1x1(x, W, *, apply_gelu=False, residual=None):
    # W: (Cout, Cin, 1, 1), no bias; input pre-cast to bf16 when no prologue
    B, C, H, Wd = x.shape
    Cout = W.shape[0]
    xm = x.transpose(1, 0, 2, 3).reshape(C, B * H * Wd)
    res = None if residual is None else residual.transpose(1, 0, 2, 3).reshape(Cout, -1)
    out = matmul_nt(xm, W.reshape(Cout, C), apply_gelu=apply_gelu, residual=res)
    return out.reshape(Cout, B, H, Wd).transpose(1, 0, 2, 3)


def tdf_linear(x, W, gamma, beta, *, residual=None):
    """TDF linear over the last (freq) axis, NT orientation: the big B*C*T axis
    is lane-dense; InstanceNorm affine fused as per-column scale/shift, GELU and
    residual add fused in-kernel."""
    B, C, T, F = x.shape
    a, b = instance_norm_stats(x, gamma, beta)       # (B, C)
    xT = x.transpose(3, 0, 1, 2).reshape(F, B * C * T)
    sc = jnp.repeat(a.reshape(-1), T)
    sh = jnp.repeat(b.reshape(-1), T)
    res = None
    if residual is not None:
        res = residual.transpose(3, 0, 1, 2).reshape(residual.shape[-1], B * C * T)
    out = matmul_nt(xT, W, apply_gelu=True, scale=sc, shift=sh, residual=res)
    return out.reshape(W.shape[0], B, C, T).transpose(1, 2, 3, 0)


def conv_down2(x, W, gamma, beta):
    # Downscale: norm (jnp) -> GELU (fused) -> conv k=s=(2,2), no bias
    B, C, T, F = x.shape
    Cout = W.shape[0]
    T2, F2 = T // 2, F // 2
    xn = instance_norm(x, gamma, beta)
    p = xn.reshape(B, C, T2, 2, F2, 2).transpose(1, 3, 5, 0, 2, 4)
    p = p.reshape(C * 4, B * T2 * F2)
    out = matmul_nt(p, W.reshape(Cout, C * 4), apply_gelu=True)
    return out.reshape(Cout, B, T2, F2).transpose(1, 0, 2, 3)


def convT_up2(x, W, gamma, beta):
    # Upscale: norm (jnp) -> GELU (fused) -> ConvTranspose2d k=s=(2,2), no bias
    B, C, T, F = x.shape
    Cout = W.shape[1]
    xn = instance_norm(x, gamma, beta)
    xm = xn.transpose(1, 0, 2, 3).reshape(C, B * T * F)
    Wm = W.transpose(1, 2, 3, 0).reshape(Cout * 4, C)        # rows = (cout, dh, dw)
    out = matmul_nt(xm, Wm, apply_gelu=True)                 # (Cout*4, B*T*F)
    out = out.reshape(Cout, 2, 2, B, T, F).transpose(3, 0, 4, 1, 5, 2)
    return out.reshape(B, Cout, 2 * T, 2 * F)


# ----------------------------------------------------------------------------
# Short-Time Hartley Transform (window / 1/N folded into the cas matrices)
# ----------------------------------------------------------------------------
def hamming_window(N):
    n = jnp.arange(N, dtype=jnp.float32)
    return 0.54 - 0.46 * jnp.cos(2.0 * jnp.pi * n / N)       # periodic (torch default)


def cas_matrix(N):
    n = jnp.arange(N, dtype=jnp.float32)
    ang = 2.0 * jnp.pi * jnp.outer(n, n) / N
    return jnp.cos(ang) + jnp.sin(ang)


def stht_transform(signal, n_fft, hop):
    B, C, L = signal.shape
    pad = n_fft // 2
    sp = jnp.pad(signal, ((0, 0), (0, 0), (pad, pad)), mode="reflect")
    NF = (sp.shape[-1] - n_fft) // hop + 1
    idx = (jnp.arange(NF) * hop)[:, None] + jnp.arange(n_fft)[None, :]
    frames = sp[:, :, idx]                                   # (B, C, NF, n_fft)
    framesT = frames.transpose(3, 0, 1, 2).reshape(n_fft, B * C * NF)
    Hm = hamming_window(n_fft)[None, :] * cas_matrix(n_fft)  # window folded in
    out = matmul_nt(framesT, Hm, w_dtype=jnp.float32)        # (n_fft, B*C*NF)
    return out.reshape(n_fft, B, C, NF).transpose(1, 2, 0, 3)


def stht_inverse(coeffs, n_fft, hop, length):
    B, C, _, NF = coeffs.shape
    win = hamming_window(n_fft)
    Hm = cas_matrix(n_fft) * win[:, None] / float(n_fft)     # 1/N and window folded
    XT = coeffs.transpose(2, 0, 1, 3).reshape(n_fft, B * C * NF)
    framesT = matmul_nt(XT, Hm, w_dtype=jnp.float32)         # (n_fft, B*C*NF)
    frames = framesT.reshape(n_fft, B, C, NF).transpose(1, 2, 3, 0)
    total = length + n_fft                                   # center=True
    idx = (jnp.arange(NF) * hop)[:, None] + jnp.arange(n_fft)[None, :]
    # TODO(synk): overlap-add scatter has no clean single-Pallas equivalent; jnp scatter-add.
    rec = jnp.zeros((B, C, total), jnp.float32).at[:, :, idx].add(frames)
    norm = jnp.zeros((total,), jnp.float32).at[idx].add(
        jnp.broadcast_to(win ** 2, (NF, n_fft)))
    eps = jnp.finfo(jnp.float32).eps
    rec = rec / jnp.maximum(norm, eps)[None, None, :]
    pad = n_fft // 2
    return rec[:, :, pad:pad + length]


# ----------------------------------------------------------------------------
# Model config (small, deterministic)
# ----------------------------------------------------------------------------
AUDIO_CH = 2          # config.audio.num_channels
NUM_SUBBANDS = 4      # config.model.num_subbands
N_FFT = 32            # config.audio.n_fft
HOP = 16              # config.audio.hop_length
DIM_F = 16            # config.audio.dim_f
NUM_SCALES = 1        # config.model.num_scales
SCALE = (2, 2)        # config.model.scale
L_BLOCKS = 1          # config.model.num_blocks_per_scale
C0 = 8                # config.model.num_channels
GROWTH = 4            # config.model.growth
BN = 2                # config.model.bottleneck_factor
NUM_TARGETS = 2       # len(prefer_target_instrument(config))
DIM_C = NUM_SUBBANDS * AUDIO_CH


class _KeyGen:
    def __init__(self, seed):
        self.key = jax.random.PRNGKey(seed)

    def __call__(self):
        self.key, sub = jax.random.split(self.key)
        return sub


def init_params(seed=42):
    kg = _KeyGen(seed)

    def w(shape, scale=0.1):
        return jax.random.normal(kg(), shape, jnp.float32) * scale

    def norm_p(c):  # InstanceNorm affine params (gamma, beta)
        return (1.0 + 0.05 * jax.random.normal(kg(), (c,), jnp.float32),
                0.05 * jax.random.normal(kg(), (c,), jnp.float32))

    def make_tfc_tdf(in_c, c, l, f, bn):
        blocks = []
        for _ in range(l):
            blocks.append(dict(
                tfc1_norm=norm_p(in_c), tfc1_w=w((c, in_c, 3, 3)),
                tdf_norm1=norm_p(c), tdf_w1=w((f // bn, f)),
                tdf_norm2=norm_p(c), tdf_w2=w((f, f // bn)),
                tfc2_norm=norm_p(c), tfc2_w=w((c, c, 3, 3)),
                shortcut=w((c, in_c, 1, 1)),
            ))
            in_c = c
        return blocks

    c = C0
    f = DIM_F // (NUM_SUBBANDS // 2)
    params = {"first_conv": w((c, DIM_C, 1, 1))}

    enc = []
    for _ in range(NUM_SCALES):
        enc.append(dict(
            tfc_tdf=make_tfc_tdf(c, c, L_BLOCKS, f, BN),
            down_norm=norm_p(c),
            down_w=w((c + GROWTH, c, SCALE[0], SCALE[1])),
        ))
        f = f // SCALE[1]
        c += GROWTH
    params["encoder"] = enc

    params["bottleneck"] = make_tfc_tdf(c, c, L_BLOCKS, f, BN)

    dec = []
    for _ in range(NUM_SCALES):
        db = dict(up_norm=norm_p(c),
                  up_w=w((c, c - GROWTH, SCALE[0], SCALE[1])))  # ConvTranspose2d: (in, out, kh, kw)
        f = f * SCALE[1]
        c -= GROWTH
        db["tfc_tdf"] = make_tfc_tdf(2 * c, c, L_BLOCKS, f, BN)
        dec.append(db)
    params["decoder"] = dec

    params["final_w1"] = w((c, c + DIM_C, 1, 1))
    params["final_w2"] = w((NUM_TARGETS * DIM_C, c, 1, 1))
    return params


# ----------------------------------------------------------------------------
# Forward pass
# ----------------------------------------------------------------------------
def cac2cws(x, k):
    b, c, f, t = x.shape
    return x.reshape(b, c, k, f // k, t).reshape(b, c * k, f // k, t)


def cws2cac(x, k):
    b, c, f, t = x.shape
    return x.reshape(b, c // k, k, f, t).reshape(b, c // k, f * k, t)


def tfc_tdf_forward(x, blocks):
    for blk in blocks:
        xin = x
        h = instance_norm(xin, *blk["tfc1_norm"])             # zero-pad safety
        x1 = conv3x3(h, blk["tfc1_w"], apply_gelu=True)
        t1 = tdf_linear(x1, blk["tdf_w1"], *blk["tdf_norm1"])
        x2 = tdf_linear(t1, blk["tdf_w2"], *blk["tdf_norm2"],
                        residual=x1)                           # x1 + tdf(x1), fused
        h2 = instance_norm(x2, *blk["tfc2_norm"])
        y2 = conv3x3(h2, blk["tfc2_w"], apply_gelu=True)
        x = conv1x1(xin, blk["shortcut"], residual=y2)         # tfc2(x2)+shortcut, fused
    return x


def forward(params, x):
    length = x.shape[-1]
    X = stht_transform(x, N_FFT, HOP)                      # (B, ch, n_fft, T)
    mix = cac2cws(X, NUM_SUBBANDS)                         # (B, dim_c, n_fft//k, T)
    first = conv1x1(mix, params["first_conv"])             # (B, c, F, T)
    h = jnp.swapaxes(first, -1, -2)                        # (B, c, T, F)

    enc_outs = []
    for eb in params["encoder"]:
        h = tfc_tdf_forward(h, eb["tfc_tdf"])
        enc_outs.append(h)
        h = conv_down2(h, eb["down_w"], *eb["down_norm"])

    h = tfc_tdf_forward(h, params["bottleneck"])

    for db in params["decoder"]:
        h = convT_up2(h, db["up_w"], *db["up_norm"])
        h = jnp.concatenate([h, enc_outs.pop()], axis=1)
        h = tfc_tdf_forward(h, db["tfc_tdf"])

    h = jnp.swapaxes(h, -1, -2)                            # (B, c, F, T)
    h = h * first                                          # skip-multiply (XLA-fused)
    h = jnp.concatenate([mix, h], axis=1)
    h = conv1x1_pair(h, params["final_w1"], params["final_w2"])   # fused 1x1-GELU-1x1
    h = cws2cac(h, NUM_SUBBANDS)                           # (B, nt*audio_ch, n_fft, T)

    b, c, f, t = h.shape
    if NUM_TARGETS > 1:
        h = h.reshape(b * NUM_TARGETS, c // NUM_TARGETS, f, t)
        y = stht_inverse(h, N_FFT, HOP, length)
        y = y.reshape(b, NUM_TARGETS, y.shape[-2], y.shape[-1])
    else:
        y = stht_inverse(h, N_FFT, HOP, length)
    return y


# ----------------------------------------------------------------------------
if __name__ == "__main__":
    params = init_params(seed=42)
    key = jax.random.PRNGKey(0)
    # signal: (batch=2, audio_channels=2, samples=48) -> 4 STHT frames, T=4, F=8
    x = jax.random.normal(key, (2, AUDIO_CH, 48), jnp.float32)

    fwd = jax.jit(forward)
    y = fwd(params, x)
    y = jax.block_until_ready(y)

    assert y.shape == (2, NUM_TARGETS, AUDIO_CH, 48), y.shape
    assert bool(jnp.all(jnp.isfinite(y)))
    print("KERNEL_OK")
</pallas_src>

<mosaic_0001>
module attributes {stable_mosaic.version = 11 : i64} {
  func.func private @main(%arg0: i32) attributes {dimension_semantics = [#tpu.dimension_semantics<core_parallel>], iteration_bounds = array<i64: 2>, tpu.core_type = #tpu.core_type<sc_scalar_subcore>, window_params = []} {
    return
  }
}

module attributes {stable_mosaic.version = 11 : i64} {
  func.func private @main(%arg0: i32) attributes {dimension_semantics = [#tpu.dimension_semantics<core_parallel>], iteration_bounds = array<i64: 2>, tpu.core_type = #tpu.core_type<sc_scalar_subcore>, window_params = []} {
    return
  }
}

module attributes {stable_mosaic.version = 11 : i64} {
  func.func @_mm_nt_kernel(%arg0: i32, %arg1: memref<32x128xf32, #tpu.memory_space<vmem>>, %arg2: memref<32x32xf32, #tpu.memory_space<vmem>>, %arg3: memref<32x128xf32, #tpu.memory_space<vmem>>) attributes {dimension_semantics = [#tpu.dimension_semantics<parallel>], iteration_bounds = array<i64: 1>, scalar_prefetch = 0 : i64, scratch_operands = 0 : i64, tpu.core_type = #tpu.core_type<tc>, window_params = [{transform_indices = @transform_0, window_bounds = array<i64: 32, 128>}, {pipeline_mode = #tpu.pipeline_mode<synchronous>, transform_indices = @transform_1, window_bounds = array<i64: 32, 32>}, {transform_indices = @transform_2, window_bounds = array<i64: 32, 128>}]} {
    %c0 = arith.constant 0 : index
    %c0_0 = arith.constant 0 : index
    %0 = vector.load %arg1[%c0, %c0_0] : memref<32x128xf32, #tpu.memory_space<vmem>>, vector<32x128xf32>
    %c0_1 = arith.constant 0 : index
    %c0_2 = arith.constant 0 : index
    %1 = vector.load %arg2[%c0_1, %c0_2] : memref<32x32xf32, #tpu.memory_space<vmem>>, vector<32x32xf32>
    %cst = arith.constant dense<0.000000e+00> : vector<32x128xf32>
    %2 = tpu.matmul %1, %0, %cst {dimension_numbers = #tpu.dot_dimension_numbers<[1], [0], [0], [1], [0, 0, 1, 1], [], []>} : vector<32x32xf32>, vector<32x128xf32>, vector<32x128xf32> -> vector<32x128xf32>
    %c0_3 = arith.constant 0 : index
    %c0_4 = arith.constant 0 : index
    %3 = vector.load %arg3[%c0_3, %c0_4] : memref<32x128xf32, #tpu.memory_space<vmem>>, vector<32x128xf32>
    tpu.vector_store %arg3[%c0_3, %c0_4], %2 {strides = array<i32>} : memref<32x128xf32, #tpu.memory_space<vmem>>, vector<32x128xf32>,
    return
  }
  func.func @transform_0(%arg0: i32) -> (i32, i32) {
    %c0_i32 = arith.constant 0 : i32
    %c0_i32_0 = arith.constant 0 : i32
    return %c0_i32, %arg0 : i32, i32
  }
  func.func @transform_1(%arg0: i32) -> (i32, i32) {
    %c0_i32 = arith.constant 0 : i32
    %c0_i32_0 = arith.constant 0 : i32
    %c0_i32_1 = arith.constant 0 : i32
    return %c0_i32, %c0_i32_0 : i32, i32
  }
  func.func @transform_2(%arg0: i32) -> (i32, i32) {
    %c0_i32 = arith.constant 0 : i32
    %c0_i32_0 = arith.constant 0 : i32
    return %c0_i32, %arg0 : i32, i32
  }
}

module attributes {stable_mosaic.version = 11 : i64} {
  func.func @_mm_nt_kernel(%arg0: i32, %arg1: memref<16x128xbf16, #tpu.memory_space<vmem>>, %arg2: memref<8x16xbf16, #tpu.memory_space<vmem>>, %arg3: memref<8x128xf32, #tpu.memory_space<vmem>>) attributes {dimension_semantics = [#tpu.dimension_semantics<parallel>], iteration_bounds = array<i64: 1>, scalar_prefetch = 0 : i64, scratch_operands = 0 : i64, tpu.core_type = #tpu.core_type<tc>, window_params = [{transform_indices = @transform_0, window_bounds = array<i64: 16, 128>}, {pipeline_mode = #tpu.pipeline_mode<synchronous>, transform_indices = @transform_1, window_bounds = array<i64: 8, 16>}, {transform_indices = @transform_2, window_bounds = array<i64: 8, 128>}]} {
    %c0 = arith.constant 0 : index
    %c0_0 = arith.constant 0 : index
    %0 = vector.load %arg1[%c0, %c0_0] : memref<16x128xbf16, #tpu.memory_space<vmem>>, vector<16x128xbf16>
    %c0_1 = arith.constant 0 : index
    %c0_2 = arith.constant 0 : index
    %1 = vector.load %arg2[%c0_1, %c0_2] : memref<8x16xbf16, #tpu.memory_space<vmem>>, vector<8x16xbf16>
    %cst = arith.constant dense<0.000000e+00> : vector<8x128xf32>
    %2 = tpu.matmul %1, %0, %cst {dimension_numbers = #tpu.dot_dimension_numbers<[1], [0], [0], [1], [0, 0, 1, 1], [], []>} : vector<8x16xbf16>, vector<16x128xbf16>, vector<8x128xf32> -> vector<8x128xf32>
    %c0_3 = arith.constant 0 : index
    %c0_4 = arith.constant 0 : index
    %3 = vector.load %arg3[%c0_3, %c0_4] : memref<8x128xf32, #tpu.memory_space<vmem>>, vector<8x128xf32>
    tpu.vector_store %arg3[%c0_3, %c0_4], %2 {strides = array<i32>} : memref<8x128xf32, #tpu.memory_space<vmem>>, vector<8x128xf32>,
    return
  }
  func.func @transform_0(%arg0: i32) -> (i32, i32) {
    %c0_i32 = arith.constant 0 : i32
    %c0_i32_0 = arith.constant 0 : i32
    return %c0_i32, %arg0 : i32, i32
  }
  func.func @transform_1(%arg0: i32) -> (i32, i32) {
    %c0_i32 = arith.constant 0 : i32
    %c0_i32_0 = arith.constant 0 : i32
    %c0_i32_1 = arith.constant 0 : i32
    return %c0_i32, %c0_i32_0 : i32, i32
  }
  func.func @transform_2(%arg0: i32) -> (i32, i32) {
    %c0_i32 = arith.constant 0 : i32
    %c0_i32_0 = arith.constant 0 : i32
    return %c0_i32, %arg0 : i32, i32
  }
}

module attributes {stable_mosaic.version = 11 : i64} {
  func.func @_conv3_kernel(%arg0: i32, %arg1: memref<8x256xf32, #tpu.memory_space<vmem>>, %arg2: memref<9x8x8xbf16, #tpu.memory_space<vmem>>, %arg3: memref<8x128xf32, #tpu.memory_space<vmem>>) attributes {dimension_semantics = [#tpu.dimension_semantics<arbitrary>], iteration_bounds = array<i64: 1>, scalar_prefetch = 0 : i64, scratch_operands = 0 : i64, tpu.core_type = #tpu.core_type<tc>, window_params = [{pipeline_mode = #tpu.pipeline_mode<synchronous>, transform_indices = @transform_0, window_bounds = array<i64: 8, 256>}, {pipeline_mode = #tpu.pipeline_mode<synchronous>, transform_indices = @transform_1, window_bounds = array<i64: 9, 8, 8>}, {pipeline_mode = #tpu.pipeline_mode<synchronous>, transform_indices = @transform_2, window_bounds = array<i64: 8, 128>}]} {
    %c0 = arith.constant 0 : index
    %c0_0 = arith.constant 0 : index
    %0 = vector.load %arg1[%c0, %c0_0] : memref<8x256xf32, #tpu.memory_space<vmem>>, vector<8x256xf32>
    %cst = arith.constant 5.000000e-01 : f32
    %1 = vector.broadcast %cst : f32 to vector<8x256xf32>
    %2 = arith.mulf %1, %0 : vector<8x256xf32>
    %cst_1 = arith.constant 0.707106769 : f32
    %3 = vector.broadcast %cst_1 : f32 to vector<8x256xf32>
    %4 = arith.mulf %0, %3 : vector<8x256xf32>
    %5 = math.erf %4 : vector<8x256xf32>
    %cst_2 = arith.constant 1.000000e+00 : f32
    %6 = vector.broadcast %cst_2 : f32 to vector<8x256xf32>
    %7 = arith.addf %6, %5 : vector<8x256xf32>
    %8 = arith.mulf %2, %7 : vector<8x256xf32>
    %9 = arith.truncf %8 : vector<8x256xf32> to vector<8x256xbf16>
    %cst_3 = arith.constant 0.000000e+00 : f32
    %10 = vector.broadcast %cst_3 : f32 to vector<8x128xf32>
    %c0_4 = arith.constant 0 : index
    %c0_5 = arith.constant 0 : index
    %c0_6 = arith.constant 0 : index
    %11 = vector.load %arg2[%c0_4, %c0_5, %c0_6] : memref<9x8x8xbf16, #tpu.memory_space<vmem>>, vector<1x8x8xbf16>
    %12 = vector.shape_cast %11 : vector<1x8x8xbf16> to vector<8x8xbf16>
    %13 = vector.extract_strided_slice %9 {offsets = [0, 0], sizes = [8, 128], strides = [1, 1]} : vector<8x256xbf16> to vector<8x128xbf16>
    %cst_7 = arith.constant dense<0.000000e+00> : vector<8x128xf32>
    %14 = tpu.matmul %12, %13, %cst_7 {dimension_numbers = #tpu.dot_dimension_numbers<[1], [0], [0], [1], [0, 0, 1, 1], [], []>} : vector<8x8xbf16>, vector<8x128xbf16>, vector<8x128xf32> -> vector<8x128xf32>
    %15 = arith.addf %10, %14 : vector<8x128xf32>
    %c1 = arith.constant 1 : index
    %c0_8 = arith.constant 0 : index
    %c0_9 = arith.constant 0 : index
    %16 = vector.load %arg2[%c1, %c0_8, %c0_9] : memref<9x8x8xbf16, #tpu.memory_space<vmem>>, vector<1x8x8xbf16>
    %17 = vector.shape_cast %16 : vector<1x8x8xbf16> to vector<8x8xbf16>
    %18 = vector.extract_strided_slice %9 {offsets = [0, 1], sizes = [8, 128], strides = [1, 1]} : vector<8x256xbf16> to vector<8x128xbf16>
    %cst_10 = arith.constant dense<0.000000e+00> : vector<8x128xf32>
    %19 = tpu.matmul %17, %18, %cst_10 {dimension_numbers = #tpu.dot_dimension_numbers<[1], [0], [0], [1], [0, 0, 1, 1], [], []>} : vector<8x8xbf16>, vector<8x128xbf16>, vector<8x128xf32> -> vector<8x128xf32>
    %20 = arith.addf %15, %19 : vector<8x128xf32>
    %c2 = arith.constant 2 : index
    %c0_11 = arith.constant 0 : index
    %c0_12 = arith.constant 0 : index
    %21 = vector.load %arg2[%c2, %c0_11, %c0_12] : memref<9x8x8xbf16, #tpu.memory_space<vmem>>, vector<1x8x8xbf16>
    %22 = vector.shape_cast %21 : vector<1x8x8xbf16> to vector<8x8xbf16>
    %23 = vector.extract_strided_slice %9 {offsets = [0, 2], sizes = [8, 128], strides = [1, 1]} : vector<8x256xbf16> to vector<8x128xbf16>
    %cst_13 = arith.constant dense<0.000000e+00> : vector<8x128xf32>
    %24 = tpu.matmul %22, %23, %cst_13 {dimension_numbers = #tpu.dot_dimension_numbers<[1], [0], [0], [1], [0, 0, 1, 1], [], []>} : vector<8x8xbf16>, vector<8x128xbf16>, vector<8x128xf32> -> vector<8x128xf32>
    %25 = arith.addf %20, %24 : vector<8x128xf32>
    %c3 = arith.constant 3 : index
    %c0_14 = arith.constant 0 : index
    %c0_15 = arith.constant 0 : index
    %26 = vector.load %arg2[%c3, %c0_14, %c0_15] : memref<9x8x8xbf16, #tpu.memory_space<vmem>>, vector<1x8x8xbf16>
    %27 = vector.shape_cast %26 : vector<1x8x8xbf16> to vector<8x8xbf16>
    %28 = vector.extract_strided_slice %9 {offsets = [0, 10], sizes = [8, 128], strides = [1, 1]} : vector<8x256xbf16> to vector<8x128xbf16>
    %cst_16 = arith.constant dense<0.000000e+00> : vector<8x128xf32>
    %29 = tpu.matmul %27, %28, %cst_16 {dimension_numbers = #tpu.dot_dimension_numbers<[1], [0], [0], [1], [0, 0, 1, 1], [], []>} : vector<8x8xbf16>, vector<8x128xbf16>, vector<8x128xf32> -> vector<8x128xf32>
    %30 = arith.addf %25, %29 : vector<8x128xf32>
    %c4 = arith.constant 4 : index
    %c0_17 = arith.constant 0 : index
    %c0_18 = arith.constant 0 : index
    %31 = vector.load %arg2[%c4, %c0_17, %c0_18] : memref<9x8x8xbf16, #tpu.memory_space<vmem>>, vector<1x8x8xbf16>
    %32 = vector.shape_cast %31 : vector<1x8x8xbf16> to vector<8x8xbf16>
    %33 = vector.extract_strided_slice %9 {offsets = [0, 11], sizes = [8, 128], strides = [1, 1]} : vector<8x256xbf16> to vector<8x128xbf16>
    %cst_19 = arith.constant dense<0.000000e+00> : vector<8x128xf32>
    %34 = tpu.matmul %32, %33, %cst_19 {dimension_numbers = #tpu.dot_dimension_numbers<[1], [0], [0], [1], [0, 0, 1, 1], [], []>} : vector<8x8xbf16>, vector<8x128xbf16>, vector<8x128xf32> -> vector<8x128xf32>
    %35 = arith.addf %30, %34 : vector<8x128xf32>
    %c5 = arith.constant 5 : index
    %c0_20 = arith.constant 0 : index
    %c0_21 = arith.constant 0 : index
    %36 = vector.load %arg2[%c5, %c0_20, %c0_21] : memref<9x8x8xbf16, #tpu.memory_space<vmem>>, vector<1x8x8xbf16>
    %37 = vector.shape_cast %36 : vector<1x8x8xbf16> to vector<8x8xbf16>
    %38 = vector.extract_strided_slice %9 {offsets = [0, 12], sizes = [8, 128], strides = [1, 1]} : vector<8x256xbf16> to vector<8x128xbf16>
    %cst_22 = arith.constant dense<0.000000e+00> : vector<8x128xf32>
    %39 = tpu.matmul %37, %38, %cst_22 {dimension_numbers = #tpu.dot_dimension_numbers<[1], [0], [0], [1], [0, 0, 1, 1], [], []>} : vector<8x8xbf16>, vector<8x128xbf16>, vector<8x128xf32> -> vector<8x128xf32>
    %40 = arith.addf %35, %39 : vector<8x128xf32>
    %c6 = arith.constant 6 : index
    %c0_23 = arith.constant 0 : index
    %c0_24 = arith.constant 0 : index
    %41 = vector.load %arg2[%c6, %c0_23, %c0_24] : memref<9x8x8xbf16, #tpu.memory_space<vmem>>, vector<1x8x8xbf16>
    %42 = vector.shape_cast %41 : vector<1x8x8xbf16> to vector<8x8xbf16>
    %43 = vector.extract_strided_slice %9 {offsets = [0, 20], sizes = [8, 128], strides = [1, 1]} : vector<8x256xbf16> to vector<8x128xbf16>
    %cst_25 = arith.constant dense<0.000000e+00> : vector<8x128xf32>
    %44 = tpu.matmul %42, %43, %cst_25 {dimension_numbers = #tpu.dot_dimension_numbers<[1], [0], [0], [1], [0, 0, 1, 1], [], []>} : vector<8x8xbf16>, vector<8x128xbf16>, vector<8x128xf32> -> vector<8x128xf32>
    %45 = arith.addf %40, %44 : vector<8x128xf32>
    %c7 = arith.constant 7 : index
    %c0_26 = arith.constant 0 : index
    %c0_27 = arith.constant 0 : index
    %46 = vector.load %arg2[%c7, %c0_26, %c0_27] : memref<9x8x8xbf16, #tpu.memory_space<vmem>>, vector<1x8x8xbf16>
    %47 = vector.shape_cast %46 : vector<1x8x8xbf16> to vector<8x8xbf16>
    %48 = vector.extract_strided_slice %9 {offsets = [0, 21], sizes = [8, 128], strides = [1, 1]} : vector<8x256xbf16> to vector<8x128xbf16>
    %cst_28 = arith.constant dense<0.000000e+00> : vector<8x128xf32>
    %49 = tpu.matmul %47, %48, %cst_28 {dimension_numbers = #tpu.dot_dimension_numbers<[1], [0], [0], [1], [0, 0, 1, 1], [], []>} : vector<8x8xbf16>, vector<8x128xbf16>, vector<8x128xf32> -> vector<8x128xf32>
    %50 = arith.addf %45, %49 : vector<8x128xf32>
    %c8 = arith.constant 8 : index
    %c0_29 = arith.constant 0 : index
    %c0_30 = arith.constant 0 : index
    %51 = vector.load %arg2[%c8, %c0_29, %c0_30] : memref<9x8x8xbf16, #tpu.memory_space<vmem>>, vector<1x8x8xbf16>
    %52 = vector.shape_cast %51 : vector<1x8x8xbf16> to vector<8x8xbf16>
    %53 = vector.extract_strided_slice %9 {offsets = [0, 22], sizes = [8, 128], strides = [1, 1]} : vector<8x256xbf16> to vector<8x128xbf16>
    %cst_31 = arith.constant dense<0.000000e+00> : vector<8x128xf32>
    %54 = tpu.matmul %52, %53, %cst_31 {dimension_numbers = #tpu.dot_dimension_numbers<[1], [0], [0], [1], [0, 0, 1, 1], [], []>} : vector<8x8xbf16>, vector<8x128xbf16>, vector<8x128xf32> -> vector<8x128xf32>
    %55 = arith.addf %50, %54 : vector<8x128xf32>
    %c0_32 = arith.constant 0 : index
    %c0_33 = arith.constant 0 : index
    %56 = vector.load %arg3[%c0_32, %c0_33] : memref<8x128xf32, #tpu.memory_space<vmem>>, vector<8x128xf32>
    tpu.vector_store %arg3[%c0_32, %c0_33], %55 {strides = array<i32>} : memref<8x128xf32, #tpu.memory_space<vmem>>, vector<8x128xf32>,
    return
  }
  func.func @transform_0(%arg0: i32) -> (i32, i32) {
    %c0_i32 = arith.constant 0 : i32
    %c0_i32_0 = arith.constant 0 : i32
    %c0_i32_1 = arith.constant 0 : i32
    return %c0_i32, %c0_i32_0 : i32, i32
  }
  func.func @transform_1(%arg0: i32) -> (i32, i32, i32) {
    %c0_i32 = arith.constant 0 : i32
    %c0_i32_0 = arith.constant 0 : i32
    %c0_i32_1 = arith.constant 0 : i32
    %c0_i32_2 = arith.constant 0 : i32
    return %c0_i32, %c0_i32_0, %c0_i32_1 : i32, i32, i32
  }
  func.func @transform_2(%arg0: i32) -> (i32, i32) {
    %c0_i32 = arith.constant 0 : i32
    %c0_i32_0 = arith.constant 0 : i32
    %c0_i32_1 = arith.constant 0 : i32
    return %c0_i32, %c0_i32_0 : i32, i32
  }
}

module attributes {stable_mosaic.version = 11 : i64} {
  func.func @_mm_nt_kernel(%arg0: i32, %arg1: memref<8x128xf32, #tpu.memory_space<vmem>>, %arg2: memref<8x8xbf16, #tpu.memory_space<vmem>>, %arg3: memref<1x128xf32, #tpu.memory_space<vmem>>, %arg4: memref<1x128xf32, #tpu.memory_space<vmem>>, %arg5: memref<8x128xf32, #tpu.memory_space<vmem>>) attributes {dimension_semantics = [#tpu.dimension_semantics<parallel>], iteration_bounds = array<i64: 1>, scalar_prefetch = 0 : i64, scratch_operands = 0 : i64, tpu.core_type = #tpu.core_type<tc>, window_params = [{transform_indices = @transform_0, window_bounds = array<i64: 8, 128>}, {pipeline_mode = #tpu.pipeline_mode<synchronous>, transform_indices = @transform_1, window_bounds = array<i64: 8, 8>}, {transform_indices = @transform_2, window_bounds = array<i64: 1, 128>}, {transform_indices = @transform_3, window_bounds = array<i64: 1, 128>}, {transform_indices = @transform_4, window_bounds = array<i64: 8, 128>}]} {
    %c0 = arith.constant 0 : index
    %c0_0 = arith.constant 0 : index
    %0 = vector.load %arg1[%c0, %c0_0] : memref<8x128xf32, #tpu.memory_space<vmem>>, vector<8x128xf32>
    %c0_1 = arith.constant 0 : index
    %c0_2 = arith.constant 0 : index
    %1 = vector.load %arg3[%c0_1, %c0_2] : memref<1x128xf32, #tpu.memory_space<vmem>>, vector<1x128xf32>
    %2 = vector.broadcast %1 : vector<1x128xf32> to vector<8x128xf32>
    %3 = arith.mulf %0, %2 : vector<8x128xf32>
    %c0_3 = arith.constant 0 : index
    %c0_4 = arith.constant 0 : index
    %4 = vector.load %arg4[%c0_3, %c0_4] : memref<1x128xf32, #tpu.memory_space<vmem>>, vector<1x128xf32>
    %5 = vector.broadcast %4 : vector<1x128xf32> to vector<8x128xf32>
    %6 = arith.addf %3, %5 : vector<8x128xf32>
    %cst = arith.constant 5.000000e-01 : f32
    %7 = vector.broadcast %cst : f32 to vector<8x128xf32>
    %8 = arith.mulf %7, %6 : vector<8x128xf32>
    %cst_5 = arith.constant 0.707106769 : f32
    %9 = vector.broadcast %cst_5 : f32 to vector<8x128xf32>
    %10 = arith.mulf %6, %9 : vector<8x128xf32>
    %11 = math.erf %10 : vector<8x128xf32>
    %cst_6 = arith.constant 1.000000e+00 : f32
    %12 = vector.broadcast %cst_6 : f32 to vector<8x128xf32>
    %13 = arith.addf %12, %11 : vector<8x128xf32>
    %14 = arith.mulf %8, %13 : vector<8x128xf32>
    %c0_7 = arith.constant 0 : index
    %c0_8 = arith.constant 0 : index
    %15 = vector.load %arg2[%c0_7, %c0_8] : memref<8x8xbf16, #tpu.memory_space<vmem>>, vector<8x8xbf16>
    %16 = arith.truncf %14 : vector<8x128xf32> to vector<8x128xbf16>
    %cst_9 = arith.constant dense<0.000000e+00> : vector<8x128xf32>
    %17 = tpu.matmul %15, %16, %cst_9 {dimension_numbers = #tpu.dot_dimension_numbers<[1], [0], [0], [1], [0, 0, 1, 1], [], []>} : vector<8x8xbf16>, vector<8x128xbf16>, vector<8x128xf32> -> vector<8x128xf32>
    %c0_10 = arith.constant 0 : index
    %c0_11 = arith.constant 0 : index
    %18 = vector.load %arg5[%c0_10, %c0_11] : memref<8x128xf32, #tpu.memory_space<vmem>>, vector<8x128xf32>
    tpu.vector_store %arg5[%c0_10, %c0_11], %17 {strides = array<i32>} : memref<8x128xf32, #tpu.memory_space<vmem>>, vector<8x128xf32>,
    return
  }
  func.func @transform_0(%arg0: i32) -> (i32, i32) {
    %c0_i32 = arith.constant 0 : i32
    %c0_i32_0 = arith.constant 0 : i32
    return %c0_i32, %arg0 : i32, i32
  }
  func.func @transform_1(%arg0: i32) -> (i32, i32) {
    %c0_i32 = arith.constant 0 : i32
    %c0_i32_0 = arith.constant 0 : i32
    %c0_i32_1 = arith.constant 0 : i32
    return %c0_i32, %c0_i32_0 : i32, i32
  }
  func.func @transform_2(%arg0: i32) -> (i32, i32) {
    %c0_i32 = arith.constant 0 : i32
    %c0_i32_0 = arith.constant 0 : i32
    return %c0_i32, %arg0 : i32, i32
  }
  func.func @transform_3(%arg0: i32) -> (i32, i32) {
    %c0_i32 = arith.constant 0 : i32
    %c0_i32_0 = arith.constant 0 : i32
    return %c0_i32, %arg0 : i32, i32
  }
  func.func @transform_4(%arg0: i32) -> (i32, i32) {
    %c0_i32 = arith.constant 0 : i32
    %c0_i32_0 = arith.constant 0 : i32
    return %c0_i32, %arg0 : i32, i32
  }
}

module attributes {stable_mosaic.version = 11 : i64} {
  func.func @_mm_nt_kernel(%arg0: i32, %arg1: memref<8x128xf32, #tpu.memory_space<vmem>>, %arg2: memref<8x8xbf16, #tpu.memory_space<vmem>>, %arg3: memref<1x128xf32, #tpu.memory_space<vmem>>, %arg4: memref<1x128xf32, #tpu.memory_space<vmem>>, %arg5: memref<8x128xf32, #tpu.memory_space<vmem>>, %arg6: memref<8x128xf32, #tpu.memory_space<vmem>>) attributes {dimension_semantics = [#tpu.dimension_semantics<parallel>], iteration_bounds = array<i64: 1>, scalar_prefetch = 0 : i64, scratch_operands = 0 : i64, tpu.core_type = #tpu.core_type<tc>, window_params = [{transform_indices = @transform_0, window_bounds = array<i64: 8, 128>}, {pipeline_mode = #tpu.pipeline_mode<synchronous>, transform_indices = @transform_1, window_bounds = array<i64: 8, 8>}, {transform_indices = @transform_2, window_bounds = array<i64: 1, 128>}, {transform_indices = @transform_3, window_bounds = array<i64: 1, 128>}, {transform_indices = @transform_4, window_bounds = array<i64: 8, 128>}, {transform_indices = @transform_5, window_bounds = array<i64: 8, 128>}]} {
    %c0 = arith.constant 0 : index
    %c0_0 = arith.constant 0 : index
    %0 = vector.load %arg1[%c0, %c0_0] : memref<8x128xf32, #tpu.memory_space<vmem>>, vector<8x128xf32>
    %c0_1 = arith.constant 0 : index
    %c0_2 = arith.constant 0 : index
    %1 = vector.load %arg3[%c0_1, %c0_2] : memref<1x128xf32, #tpu.memory_space<vmem>>, vector<1x128xf32>
    %2 = vector.broadcast %1 : vector<1x128xf32> to vector<8x128xf32>
    %3 = arith.mulf %0, %2 : vector<8x128xf32>
    %c0_3 = arith.constant 0 : index
    %c0_4 = arith.constant 0 : index
    %4 = vector.load %arg4[%c0_3, %c0_4] : memref<1x128xf32, #tpu.memory_space<vmem>>, vector<1x128xf32>
    %5 = vector.broadcast %4 : vector<1x128xf32> to vector<8x128xf32>
    %6 = arith.addf %3, %5 : vector<8x128xf32>
    %cst = arith.constant 5.000000e-01 : f32
    %7 = vector.broadcast %cst : f32 to vector<8x128xf32>
    %8 = arith.mulf %7, %6 : vector<8x128xf32>
    %cst_5 = arith.constant 0.707106769 : f32
    %9 = vector.broadcast %cst_5 : f32 to vector<8x128xf32>
    %10 = arith.mulf %6, %9 : vector<8x128xf32>
    %11 = math.erf %10 : vector<8x128xf32>
    %cst_6 = arith.constant 1.000000e+00 : f32
    %12 = vector.broadcast %cst_6 : f32 to vector<8x128xf32>
    %13 = arith.addf %12, %11 : vector<8x128xf32>
    %14 = arith.mulf %8, %13 : vector<8x128xf32>
    %c0_7 = arith.constant 0 : index
    %c0_8 = arith.constant 0 : index
    %15 = vector.load %arg2[%c0_7, %c0_8] : memref<8x8xbf16, #tpu.memory_space<vmem>>, vector<8x8xbf16>
    %16 = arith.truncf %14 : vector<8x128xf32> to vector<8x128xbf16>
    %cst_9 = arith.constant dense<0.000000e+00> : vector<8x128xf32>
    %17 = tpu.matmul %15, %16, %cst_9 {dimension_numbers = #tpu.dot_dimension_numbers<[1], [0], [0], [1], [0, 0, 1, 1], [], []>} : vector<8x8xbf16>, vector<8x128xbf16>, vector<8x128xf32> -> vector<8x128xf32>
    %c0_10 = arith.constant 0 : index
    %c0_11 = arith.constant 0 : index
    %18 = vector.load %arg5[%c0_10, %c0_11] : memref<8x128xf32, #tpu.memory_space<vmem>>, vector<8x128xf32>
    %19 = arith.addf %17, %18 : vector<8x128xf32>
    %c0_12 = arith.constant 0 : index
    %c0_13 = arith.constant 0 : index
    %20 = vector.load %arg6[%c0_12, %c0_13] : memref<8x128xf32, #tpu.memory_space<vmem>>, vector<8x128xf32>
    tpu.vector_store %arg6[%c0_12, %c0_13], %19 {strides = array<i32>} : memref<8x128xf32, #tpu.memory_space<vmem>>, vector<8x128xf32>,
    return
  }
  func.func @transform_0(%arg0: i32) -> (i32, i32) {
    %c0_i32 = arith.constant 0 : i32
    %c0_i32_0 = arith.constant 0 : i32
    return %c0_i32, %arg0 : i32, i32
  }
  func.func @transform_1(%arg0: i32) -> (i32, i32) {
    %c0_i32 = arith.constant 0 : i32
    %c0_i32_0 = arith.constant 0 : i32
    %c0_i32_1 = arith.constant 0 : i32
    return %c0_i32, %c0_i32_0 : i32, i32
  }
  func.func @transform_2(%arg0: i32) -> (i32, i32) {
    %c0_i32 = arith.constant 0 : i32
    %c0_i32_0 = arith.constant 0 : i32
    return %c0_i32, %arg0 : i32, i32
  }
  func.func @transform_3(%arg0: i32) -> (i32, i32) {
    %c0_i32 = arith.constant 0 : i32
    %c0_i32_0 = arith.constant 0 : i32
    return %c0_i32, %arg0 : i32, i32
  }
  func.func @transform_4(%arg0: i32) -> (i32, i32) {
    %c0_i32 = arith.constant 0 : i32
    %c0_i32_0 = arith.constant 0 : i32
    return %c0_i32, %arg0 : i32, i32
  }
  func.func @transform_5(%arg0: i32) -> (i32, i32) {
    %c0_i32 = arith.constant 0 : i32
    %c0_i32_0 = arith.constant 0 : i32
    return %c0_i32, %arg0 : i32, i32
  }
}

module attributes {stable_mosaic.version = 11 : i64} {
  func.func @_mm_nt_kernel(%arg0: i32, %arg1: memref<16x128xbf16, #tpu.memory_space<vmem>>, %arg2: memref<8x16xbf16, #tpu.memory_space<vmem>>, %arg3: memref<8x128xf32, #tpu.memory_space<vmem>>, %arg4: memref<8x128xf32, #tpu.memory_space<vmem>>) attributes {dimension_semantics = [#tpu.dimension_semantics<parallel>], iteration_bounds = array<i64: 1>, scalar_prefetch = 0 : i64, scratch_operands = 0 : i64, tpu.core_type = #tpu.core_type<tc>, window_params = [{transform_indices = @transform_0, window_bounds = array<i64: 16, 128>}, {pipeline_mode = #tpu.pipeline_mode<synchronous>, transform_indices = @transform_1, window_bounds = array<i64: 8, 16>}, {transform_indices = @transform_2, window_bounds = array<i64: 8, 128>}, {transform_indices = @transform_3, window_bounds = array<i64: 8, 128>}]} {
    %c0 = arith.constant 0 : index
    %c0_0 = arith.constant 0 : index
    %0 = vector.load %arg1[%c0, %c0_0] : memref<16x128xbf16, #tpu.memory_space<vmem>>, vector<16x128xbf16>
    %c0_1 = arith.constant 0 : index
    %c0_2 = arith.constant 0 : index
    %1 = vector.load %arg2[%c0_1, %c0_2] : memref<8x16xbf16, #tpu.memory_space<vmem>>, vector<8x16xbf16>
    %cst = arith.constant dense<0.000000e+00> : vector<8x128xf32>
    %2 = tpu.matmul %1, %0, %cst {dimension_numbers = #tpu.dot_dimension_numbers<[1], [0], [0], [1], [0, 0, 1, 1], [], []>} : vector<8x16xbf16>, vector<16x128xbf16>, vector<8x128xf32> -> vector<8x128xf32>
    %c0_3 = arith.constant 0 : index
    %c0_4 = arith.constant 0 : index
    %3 = vector.load %arg3[%c0_3, %c0_4] : memref<8x128xf32, #tpu.memory_space<vmem>>, vector<8x128xf32>
    %4 = arith.addf %2, %3 : vector<8x128xf32>
    %c0_5 = arith.constant 0 : index
    %c0_6 = arith.constant 0 : index
    %5 = vector.load %arg4[%c0_5, %c0_6] : memref<8x128xf32, #tpu.memory_space<vmem>>, vector<8x128xf32>
    tpu.vector_store %arg4[%c0_5, %c0_6], %4 {strides = array<i32>} : memref<8x128xf32, #tpu.memory_space<vmem>>, vector<8x128xf32>,
    return
  }
  func.func @transform_0(%arg0: i32) -> (i32, i32) {
    %c0_i32 = arith.constant 0 : i32
    %c0_i32_0 = arith.constant 0 : i32
    return %c0_i32, %arg0 : i32, i32
  }
  func.func @transform_1(%arg0: i32) -> (i32, i32) {
    %c0_i32 = arith.constant 0 : i32
    %c0_i32_0 = arith.constant 0 : i32
    %c0_i32_1 = arith.constant 0 : i32
    return %c0_i32, %c0_i32_0 : i32, i32
  }
  func.func @transform_2(%arg0: i32) -> (i32, i32) {
    %c0_i32 = arith.constant 0 : i32
    %c0_i32_0 = arith.constant 0 : i32
    return %c0_i32, %arg0 : i32, i32
  }
  func.func @transform_3(%arg0: i32) -> (i32, i32) {
    %c0_i32 = arith.constant 0 : i32
    %c0_i32_0 = arith.constant 0 : i32
    return %c0_i32, %arg0 : i32, i32
  }
}

module attributes {stable_mosaic.version = 11 : i64} {
  func.func @_mm_nt_kernel(%arg0: i32, %arg1: memref<32x128xf32, #tpu.memory_space<vmem>>, %arg2: memref<16x32xbf16, #tpu.memory_space<vmem>>, %arg3: memref<16x128xf32, #tpu.memory_space<vmem>>) attributes {dimension_semantics = [#tpu.dimension_semantics<parallel>], iteration_bounds = array<i64: 1>, scalar_prefetch = 0 : i64, scratch_operands = 0 : i64, tpu.core_type = #tpu.core_type<tc>, window_params = [{transform_indices = @transform_0, window_bounds = array<i64: 32, 128>}, {pipeline_mode = #tpu.pipeline_mode<synchronous>, transform_indices = @transform_1, window_bounds = array<i64: 16, 32>}, {transform_indices = @transform_2, window_bounds = array<i64: 16, 128>}]} {
    %c0 = arith.constant 0 : index
    %c0_0 = arith.constant 0 : index
    %0 = vector.load %arg1[%c0, %c0_0] : memref<32x128xf32, #tpu.memory_space<vmem>>, vector<32x128xf32>
    %cst = arith.constant 5.000000e-01 : f32
    %1 = vector.broadcast %cst : f32 to vector<32x128xf32>
    %2 = arith.mulf %1, %0 : vector<32x128xf32>
    %cst_1 = arith.constant 0.707106769 : f32
    %3 = vector.broadcast %cst_1 : f32 to vector<32x128xf32>
    %4 = arith.mulf %0, %3 : vector<32x128xf32>
    %5 = math.erf %4 : vector<32x128xf32>
    %cst_2 = arith.constant 1.000000e+00 : f32
    %6 = vector.broadcast %cst_2 : f32 to vector<32x128xf32>
    %7 = arith.addf %6, %5 : vector<32x128xf32>
    %8 = arith.mulf %2, %7 : vector<32x128xf32>
    %c0_3 = arith.constant 0 : index
    %c0_4 = arith.constant 0 : index
    %9 = vector.load %arg2[%c0_3, %c0_4] : memref<16x32xbf16, #tpu.memory_space<vmem>>, vector<16x32xbf16>
    %10 = arith.truncf %8 : vector<32x128xf32> to vector<32x128xbf16>
    %cst_5 = arith.constant dense<0.000000e+00> : vector<16x128xf32>
    %11 = tpu.matmul %9, %10, %cst_5 {dimension_numbers = #tpu.dot_dimension_numbers<[1], [0], [0], [1], [0, 0, 1, 1], [], []>} : vector<16x32xbf16>, vector<32x128xbf16>, vector<16x128xf32> -> vector<16x128xf32>
    %c0_6 = arith.constant 0 : index
    %c0_7 = arith.constant 0 : index
    %12 = vector.load %arg3[%c0_6, %c0_7] : memref<16x128xf32, #tpu.memory_space<vmem>>, vector<16x128xf32>
    tpu.vector_store %arg3[%c0_6, %c0_7], %11 {strides = array<i32>} : memref<16x128xf32, #tpu.memory_space<vmem>>, vector<16x128xf32>,
    return
  }
  func.func @transform_0(%arg0: i32) -> (i32, i32) {
    %c0_i32 = arith.constant 0 : i32
    %c0_i32_0 = arith.constant 0 : i32
    return %c0_i32, %arg0 : i32, i32
  }
  func.func @transform_1(%arg0: i32) -> (i32, i32) {
    %c0_i32 = arith.constant 0 : i32
    %c0_i32_0 = arith.constant 0 : i32
    %c0_i32_1 = arith.constant 0 : i32
    return %c0_i32, %c0_i32_0 : i32, i32
  }
  func.func @transform_2(%arg0: i32) -> (i32, i32) {
    %c0_i32 = arith.constant 0 : i32
    %c0_i32_0 = arith.constant 0 : i32
    return %c0_i32, %arg0 : i32, i32
  }
}

module attributes {stable_mosaic.version = 11 : i64} {
  func.func @_conv3_kernel(%arg0: i32, %arg1: memref<16x256xf32, #tpu.memory_space<vmem>>, %arg2: memref<9x16x16xbf16, #tpu.memory_space<vmem>>, %arg3: memref<16x128xf32, #tpu.memory_space<vmem>>) attributes {dimension_semantics = [#tpu.dimension_semantics<arbitrary>], iteration_bounds = array<i64: 1>, scalar_prefetch = 0 : i64, scratch_operands = 0 : i64, tpu.core_type = #tpu.core_type<tc>, window_params = [{pipeline_mode = #tpu.pipeline_mode<synchronous>, transform_indices = @transform_0, window_bounds = array<i64: 16, 256>}, {pipeline_mode = #tpu.pipeline_mode<synchronous>, transform_indices = @transform_1, window_bounds = array<i64: 9, 16, 16>}, {pipeline_mode = #tpu.pipeline_mode<synchronous>, transform_indices = @transform_2, window_bounds = array<i64: 16, 128>}]} {
    %c0 = arith.constant 0 : index
    %c0_0 = arith.constant 0 : index
    %0 = vector.load %arg1[%c0, %c0_0] : memref<16x256xf32, #tpu.memory_space<vmem>>, vector<16x256xf32>
    %cst = arith.constant 5.000000e-01 : f32
    %1 = vector.broadcast %cst : f32 to vector<16x256xf32>
    %2 = arith.mulf %1, %0 : vector<16x256xf32>
    %cst_1 = arith.constant 0.707106769 : f32
    %3 = vector.broadcast %cst_1 : f32 to vector<16x256xf32>
    %4 = arith.mulf %0, %3 : vector<16x256xf32>
    %5 = math.erf %4 : vector<16x256xf32>
    %cst_2 = arith.constant 1.000000e+00 : f32
    %6 = vector.broadcast %cst_2 : f32 to vector<16x256xf32>
    %7 = arith.addf %6, %5 : vector<16x256xf32>
    %8 = arith.mulf %2, %7 : vector<16x256xf32>
    %9 = arith.truncf %8 : vector<16x256xf32> to vector<16x256xbf16>
    %cst_3 = arith.constant 0.000000e+00 : f32
    %10 = vector.broadcast %cst_3 : f32 to vector<16x128xf32>
    %c0_4 = arith.constant 0 : index
    %c0_5 = arith.constant 0 : index
    %c0_6 = arith.constant 0 : index
    %11 = vector.load %arg2[%c0_4, %c0_5, %c0_6] : memref<9x16x16xbf16, #tpu.memory_space<vmem>>, vector<1x16x16xbf16>
    %12 = vector.shape_cast %11 : vector<1x16x16xbf16> to vector<16x16xbf16>
    %13 = vector.extract_strided_slice %9 {offsets = [0, 0], sizes = [16, 128], strides = [1, 1]} : vector<16x256xbf16> to vector<16x128xbf16>
    %cst_7 = arith.constant dense<0.000000e+00> : vector<16x128xf32>
    %14 = tpu.matmul %12, %13, %cst_7 {dimension_numbers = #tpu.dot_dimension_numbers<[1], [0], [0], [1], [0, 0, 1, 1], [], []>} : vector<16x16xbf16>, vector<16x128xbf16>, vector<16x128xf32> -> vector<16x128xf32>
    %15 = arith.addf %10, %14 : vector<16x128xf32>
    %c1 = arith.constant 1 : index
    %c0_8 = arith.constant 0 : index
    %c0_9 = arith.constant 0 : index
    %16 = vector.load %arg2[%c1, %c0_8, %c0_9] : memref<9x16x16xbf16, #tpu.memory_space<vmem>>, vector<1x16x16xbf16>
    %17 = vector.shape_cast %16 : vector<1x16x16xbf16> to vector<16x16xbf16>
    %18 = vector.extract_strided_slice %9 {offsets = [0, 1], sizes = [16, 128], strides = [1, 1]} : vector<16x256xbf16> to vector<16x128xbf16>
    %cst_10 = arith.constant dense<0.000000e+00> : vector<16x128xf32>
    %19 = tpu.matmul %17, %18, %cst_10 {dimension_numbers = #tpu.dot_dimension_numbers<[1], [0], [0], [1], [0, 0, 1, 1], [], []>} : vector<16x16xbf16>, vector<16x128xbf16>, vector<16x128xf32> -> vector<16x128xf32>
    %20 = arith.addf %15, %19 : vector<16x128xf32>
    %c2 = arith.constant 2 : index
    %c0_11 = arith.constant 0 : index
    %c0_12 = arith.constant 0 : index
    %21 = vector.load %arg2[%c2, %c0_11, %c0_12] : memref<9x16x16xbf16, #tpu.memory_space<vmem>>, vector<1x16x16xbf16>
    %22 = vector.shape_cast %21 : vector<1x16x16xbf16> to vector<16x16xbf16>
    %23 = vector.extract_strided_slice %9 {offsets = [0, 2], sizes = [16, 128], strides = [1, 1]} : vector<16x256xbf16> to vector<16x128xbf16>
    %cst_13 = arith.constant dense<0.000000e+00> : vector<16x128xf32>
    %24 = tpu.matmul %22, %23, %cst_13 {dimension_numbers = #tpu.dot_dimension_numbers<[1], [0], [0], [1], [0, 0, 1, 1], [], []>} : vector<16x16xbf16>, vector<16x128xbf16>, vector<16x128xf32> -> vector<16x128xf32>
    %25 = arith.addf %20, %24 : vector<16x128xf32>
    %c3 = arith.constant 3 : index
    %c0_14 = arith.constant 0 : index
    %c0_15 = arith.constant 0 : index
    %26 = vector.load %arg2[%c3, %c0_14, %c0_15] : memref<9x16x16xbf16, #tpu.memory_space<vmem>>, vector<1x16x16xbf16>
    %27 = vector.shape_cast %26 : vector<1x16x16xbf16> to vector<16x16xbf16>
    %28 = vector.extract_strided_slice %9 {offsets = [0, 6], sizes = [16, 128], strides = [1, 1]} : vector<16x256xbf16> to vector<16x128xbf16>
    %cst_16 = arith.constant dense<0.000000e+00> : vector<16x128xf32>
    %29 = tpu.matmul %27, %28, %cst_16 {dimension_numbers = #tpu.dot_dimension_numbers<[1], [0], [0], [1], [0, 0, 1, 1], [], []>} : vector<16x16xbf16>, vector<16x128xbf16>, vector<16x128xf32> -> vector<16x128xf32>
    %30 = arith.addf %25, %29 : vector<16x128xf32>
    %c4 = arith.constant 4 : index
    %c0_17 = arith.constant 0 : index
    %c0_18 = arith.constant 0 : index
    %31 = vector.load %arg2[%c4, %c0_17, %c0_18] : memref<9x16x16xbf16, #tpu.memory_space<vmem>>, vector<1x16x16xbf16>
    %32 = vector.shape_cast %31 : vector<1x16x16xbf16> to vector<16x16xbf16>
    %33 = vector.extract_strided_slice %9 {offsets = [0, 7], sizes = [16, 128], strides = [1, 1]} : vector<16x256xbf16> to vector<16x128xbf16>
    %cst_19 = arith.constant dense<0.000000e+00> : vector<16x128xf32>
    %34 = tpu.matmul %32, %33, %cst_19 {dimension_numbers = #tpu.dot_dimension_numbers<[1], [0], [0], [1], [0, 0, 1, 1], [], []>} : vector<16x16xbf16>, vector<16x128xbf16>, vector<16x128xf32> -> vector<16x128xf32>
    %35 = arith.addf %30, %34 : vector<16x128xf32>
    %c5 = arith.constant 5 : index
    %c0_20 = arith.constant 0 : index
    %c0_21 = arith.constant 0 : index
    %36 = vector.load %arg2[%c5, %c0_20, %c0_21] : memref<9x16x16xbf16, #tpu.memory_space<vmem>>, vector<1x16x16xbf16>
    %37 = vector.shape_cast %36 : vector<1x16x16xbf16> to vector<16x16xbf16>
    %38 = vector.extract_strided_slice %9 {offsets = [0, 8], sizes = [16, 128], strides = [1, 1]} : vector<16x256xbf16> to vector<16x128xbf16>
    %cst_22 = arith.constant dense<0.000000e+00> : vector<16x128xf32>
    %39 = tpu.matmul %37, %38, %cst_22 {dimension_numbers = #tpu.dot_dimension_numbers<[1], [0], [0], [1], [0, 0, 1, 1], [], []>} : vector<16x16xbf16>, vector<16x128xbf16>, vector<16x128xf32> -> vector<16x128xf32>
    %40 = arith.addf %35, %39 : vector<16x128xf32>
    %c6 = arith.constant 6 : index
    %c0_23 = arith.constant 0 : index
    %c0_24 = arith.constant 0 : index
    %41 = vector.load %arg2[%c6, %c0_23, %c0_24] : memref<9x16x16xbf16, #tpu.memory_space<vmem>>, vector<1x16x16xbf16>
    %42 = vector.shape_cast %41 : vector<1x16x16xbf16> to vector<16x16xbf16>
    %43 = vector.extract_strided_slice %9 {offsets = [0, 12], sizes = [16, 128], strides = [1, 1]} : vector<16x256xbf16> to vector<16x128xbf16>
    %cst_25 = arith.constant dense<0.000000e+00> : vector<16x128xf32>
    %44 = tpu.matmul %42, %43, %cst_25 {dimension_numbers = #tpu.dot_dimension_numbers<[1], [0], [0], [1], [0, 0, 1, 1], [], []>} : vector<16x16xbf16>, vector<16x128xbf16>, vector<16x128xf32> -> vector<16x128xf32>
    %45 = arith.addf %40, %44 : vector<16x128xf32>
    %c7 = arith.constant 7 : index
    %c0_26 = arith.constant 0 : index
    %c0_27 = arith.constant 0 : index
    %46 = vector.load %arg2[%c7, %c0_26, %c0_27] : memref<9x16x16xbf16, #tpu.memory_space<vmem>>, vector<1x16x16xbf16>
    %47 = vector.shape_cast %46 : vector<1x16x16xbf16> to vector<16x16xbf16>
    %48 = vector.extract_strided_slice %9 {offsets = [0, 13], sizes = [16, 128], strides = [1, 1]} : vector<16x256xbf16> to vector<16x128xbf16>
    %cst_28 = arith.constant dense<0.000000e+00> : vector<16x128xf32>
    %49 = tpu.matmul %47, %48, %cst_28 {dimension_numbers = #tpu.dot_dimension_numbers<[1], [0], [0], [1], [0, 0, 1, 1], [], []>} : vector<16x16xbf16>, vector<16x128xbf16>, vector<16x128xf32> -> vector<16x128xf32>
    %50 = arith.addf %45, %49 : vector<16x128xf32>
    %c8 = arith.constant 8 : index
    %c0_29 = arith.constant 0 : index
    %c0_30 = arith.constant 0 : index
    %51 = vector.load %arg2[%c8, %c0_29, %c0_30] : memref<9x16x16xbf16, #tpu.memory_space<vmem>>, vector<1x16x16xbf16>
    %52 = vector.shape_cast %51 : vector<1x16x16xbf16> to vector<16x16xbf16>
    %53 = vector.extract_strided_slice %9 {offsets = [0, 14], sizes = [16, 128], strides = [1, 1]} : vector<16x256xbf16> to vector<16x128xbf16>
    %cst_31 = arith.constant dense<0.000000e+00> : vector<16x128xf32>
    %54 = tpu.matmul %52, %53, %cst_31 {dimension_numbers = #tpu.dot_dimension_numbers<[1], [0], [0], [1], [0, 0, 1, 1], [], []>} : vector<16x16xbf16>, vector<16x128xbf16>, vector<16x128xf32> -> vector<16x128xf32>
    %55 = arith.addf %50, %54 : vector<16x128xf32>
    %c0_32 = arith.constant 0 : index
    %c0_33 = arith.constant 0 : index
    %56 = vector.load %arg3[%c0_32, %c0_33] : memref<16x128xf32, #tpu.memory_space<vmem>>, vector<16x128xf32>
    tpu.vector_store %arg3[%c0_32, %c0_33], %55 {strides = array<i32>} : memref<16x128xf32, #tpu.memory_space<vmem>>, vector<16x128xf32>,
    return
  }
  func.func @transform_0(%arg0: i32) -> (i32, i32) {
    %c0_i32 = arith.constant 0 : i32
    %c0_i32_0 = arith.constant 0 : i32
    %c0_i32_1 = arith.constant 0 : i32
    return %c0_i32, %c0_i32_0 : i32, i32
  }
  func.func @transform_1(%arg0: i32) -> (i32, i32, i32) {
    %c0_i32 = arith.constant 0 : i32
    %c0_i32_0 = arith.constant 0 : i32
    %c0_i32_1 = arith.constant 0 : i32
    %c0_i32_2 = arith.constant 0 : i32
    return %c0_i32, %c0_i32_0, %c0_i32_1 : i32, i32, i32
  }
  func.func @transform_2(%arg0: i32) -> (i32, i32) {
    %c0_i32 = arith.constant 0 : i32
    %c0_i32_0 = arith.constant 0 : i32
    %c0_i32_1 = arith.constant 0 : i32
    return %c0_i32, %c0_i32_0 : i32, i32
  }
}

module attributes {stable_mosaic.version = 11 : i64} {
  func.func @_mm_nt_kernel(%arg0: i32, %arg1: memref<16x128xbf16, #tpu.memory_space<vmem>>, %arg2: memref<16x16xbf16, #tpu.memory_space<vmem>>, %arg3: memref<16x128xf32, #tpu.memory_space<vmem>>, %arg4: memref<16x128xf32, #tpu.memory_space<vmem>>) attributes {dimension_semantics = [#tpu.dimension_semantics<parallel>], iteration_bounds = array<i64: 1>, scalar_prefetch = 0 : i64, scratch_operands = 0 : i64, tpu.core_type = #tpu.core_type<tc>, window_params = [{transform_indices = @transform_0, window_bounds = array<i64: 16, 128>}, {pipeline_mode = #tpu.pipeline_mode<synchronous>, transform_indices = @transform_1, window_bounds = array<i64: 16, 16>}, {transform_indices = @transform_2, window_bounds = array<i64: 16, 128>}, {transform_indices = @transform_3, window_bounds = array<i64: 16, 128>}]} {
    %c0 = arith.constant 0 : index
    %c0_0 = arith.constant 0 : index
    %0 = vector.load %arg1[%c0, %c0_0] : memref<16x128xbf16, #tpu.memory_space<vmem>>, vector<16x128xbf16>
    %c0_1 = arith.constant 0 : index
    %c0_2 = arith.constant 0 : index
    %1 = vector.load %arg2[%c0_1, %c0_2] : memref<16x16xbf16, #tpu.memory_space<vmem>>, vector<16x16xbf16>
    %cst = arith.constant dense<0.000000e+00> : vector<16x128xf32>
    %2 = tpu.matmul %1, %0, %cst {dimension_numbers = #tpu.dot_dimension_numbers<[1], [0], [0], [1], [0, 0, 1, 1], [], []>} : vector<16x16xbf16>, vector<16x128xbf16>, vector<16x128xf32> -> vector<16x128xf32>
    %c0_3 = arith.constant 0 : index
    %c0_4 = arith.constant 0 : index
    %3 = vector.load %arg3[%c0_3, %c0_4] : memref<16x128xf32, #tpu.memory_space<vmem>>, vector<16x128xf32>
    %4 = arith.addf %2, %3 : vector<16x128xf32>
    %c0_5 = arith.constant 0 : index
    %c0_6 = arith.constant 0 : index
    %5 = vector.load %arg4[%c0_5, %c0_6] : memref<16x128xf32, #tpu.memory_space<vmem>>, vector<16x128xf32>
    tpu.vector_store %arg4[%c0_5, %c0_6], %4 {strides = array<i32>} : memref<16x128xf32, #tpu.memory_space<vmem>>, vector<16x128xf32>,
    return
  }
  func.func @transform_0(%arg0: i32) -> (i32, i32) {
    %c0_i32 = arith.constant 0 : i32
    %c0_i32_0 = arith.constant 0 : i32
    return %c0_i32, %arg0 : i32, i32
  }
  func.func @transform_1(%arg0: i32) -> (i32, i32) {
    %c0_i32 = arith.constant 0 : i32
    %c0_i32_0 = arith.constant 0 : i32
    %c0_i32_1 = arith.constant 0 : i32
    return %c0_i32, %c0_i32_0 : i32, i32
  }
  func.func @transform_2(%arg0: i32) -> (i32, i32) {
    %c0_i32 = arith.constant 0 : i32
    %c0_i32_0 = arith.constant 0 : i32
    return %c0_i32, %arg0 : i32, i32
  }
  func.func @transform_3(%arg0: i32) -> (i32, i32) {
    %c0_i32 = arith.constant 0 : i32
    %c0_i32_0 = arith.constant 0 : i32
    return %c0_i32, %arg0 : i32, i32
  }
}

module attributes {stable_mosaic.version = 11 : i64} {
  func.func @_mm_nt_kernel(%arg0: i32, %arg1: memref<16x128xf32, #tpu.memory_space<vmem>>, %arg2: memref<32x16xbf16, #tpu.memory_space<vmem>>, %arg3: memref<32x128xf32, #tpu.memory_space<vmem>>) attributes {dimension_semantics = [#tpu.dimension_semantics<parallel>], iteration_bounds = array<i64: 1>, scalar_prefetch = 0 : i64, scratch_operands = 0 : i64, tpu.core_type = #tpu.core_type<tc>, window_params = [{transform_indices = @transform_0, window_bounds = array<i64: 16, 128>}, {pipeline_mode = #tpu.pipeline_mode<synchronous>, transform_indices = @transform_1, window_bounds = array<i64: 32, 16>}, {transform_indices = @transform_2, window_bounds = array<i64: 32, 128>}]} {
    %c0 = arith.constant 0 : index
    %c0_0 = arith.constant 0 : index
    %0 = vector.load %arg1[%c0, %c0_0] : memref<16x128xf32, #tpu.memory_space<vmem>>, vector<16x128xf32>
    %cst = arith.constant 5.000000e-01 : f32
    %1 = vector.broadcast %cst : f32 to vector<16x128xf32>
    %2 = arith.mulf %1, %0 : vector<16x128xf32>
    %cst_1 = arith.constant 0.707106769 : f32
    %3 = vector.broadcast %cst_1 : f32 to vector<16x128xf32>
    %4 = arith.mulf %0, %3 : vector<16x128xf32>
    %5 = math.erf %4 : vector<16x128xf32>
    %cst_2 = arith.constant 1.000000e+00 : f32
    %6 = vector.broadcast %cst_2 : f32 to vector<16x128xf32>
    %7 = arith.addf %6, %5 : vector<16x128xf32>
    %8 = arith.mulf %2, %7 : vector<16x128xf32>
    %c0_3 = arith.constant 0 : index
    %c0_4 = arith.constant 0 : index
    %9 = vector.load %arg2[%c0_3, %c0_4] : memref<32x16xbf16, #tpu.memory_space<vmem>>, vector<32x16xbf16>
    %10 = arith.truncf %8 : vector<16x128xf32> to vector<16x128xbf16>
    %cst_5 = arith.constant dense<0.000000e+00> : vector<32x128xf32>
    %11 = tpu.matmul %9, %10, %cst_5 {dimension_numbers = #tpu.dot_dimension_numbers<[1], [0], [0], [1], [0, 0, 1, 1], [], []>} : vector<32x16xbf16>, vector<16x128xbf16>, vector<32x128xf32> -> vector<32x128xf32>
    %c0_6 = arith.constant 0 : index
    %c0_7 = arith.constant 0 : index
    %12 = vector.load %arg3[%c0_6, %c0_7] : memref<32x128xf32, #tpu.memory_space<vmem>>, vector<32x128xf32>
    tpu.vector_store %arg3[%c0_6, %c0_7], %11 {strides = array<i32>} : memref<32x128xf32, #tpu.memory_space<vmem>>, vector<32x128xf32>,
    return
  }
  func.func @transform_0(%arg0: i32) -> (i32, i32) {
    %c0_i32 = arith.constant 0 : i32
    %c0_i32_0 = arith.constant 0 : i32
    return %c0_i32, %arg0 : i32, i32
  }
  func.func @transform_1(%arg0: i32) -> (i32, i32) {
    %c0_i32 = arith.constant 0 : i32
    %c0_i32_0 = arith.constant 0 : i32
    %c0_i32_1 = arith.constant 0 : i32
    return %c0_i32, %c0_i32_0 : i32, i32
  }
  func.func @transform_2(%arg0: i32) -> (i32, i32) {
    %c0_i32 = arith.constant 0 : i32
    %c0_i32_0 = arith.constant 0 : i32
    return %c0_i32, %arg0 : i32, i32
  }
}

module attributes {stable_mosaic.version = 11 : i64} {
  func.func @_mm_nt2_kernel(%arg0: i32, %arg1: memref<16x128xbf16, #tpu.memory_space<vmem>>, %arg2: memref<16x16xbf16, #tpu.memory_space<vmem>>, %arg3: memref<16x16xbf16, #tpu.memory_space<vmem>>, %arg4: memref<16x128xf32, #tpu.memory_space<vmem>>) attributes {dimension_semantics = [#tpu.dimension_semantics<parallel>], iteration_bounds = array<i64: 1>, scalar_prefetch = 0 : i64, scratch_operands = 0 : i64, tpu.core_type = #tpu.core_type<tc>, window_params = [{transform_indices = @transform_0, window_bounds = array<i64: 16, 128>}, {pipeline_mode = #tpu.pipeline_mode<synchronous>, transform_indices = @transform_1, window_bounds = array<i64: 16, 16>}, {pipeline_mode = #tpu.pipeline_mode<synchronous>, transform_indices = @transform_2, window_bounds = array<i64: 16, 16>}, {transform_indices = @transform_3, window_bounds = array<i64: 16, 128>}]} {
    %c0 = arith.constant 0 : index
    %c0_0 = arith.constant 0 : index
    %0 = vector.load %arg2[%c0, %c0_0] : memref<16x16xbf16, #tpu.memory_space<vmem>>, vector<16x16xbf16>
    %c0_1 = arith.constant 0 : index
    %c0_2 = arith.constant 0 : index
    %1 = vector.load %arg1[%c0_1, %c0_2] : memref<16x128xbf16, #tpu.memory_space<vmem>>, vector<16x128xbf16>
    %cst = arith.constant dense<0.000000e+00> : vector<16x128xf32>
    %2 = tpu.matmul %0, %1, %cst {dimension_numbers = #tpu.dot_dimension_numbers<[1], [0], [0], [1], [0, 0, 1, 1], [], []>} : vector<16x16xbf16>, vector<16x128xbf16>, vector<16x128xf32> -> vector<16x128xf32>
    %cst_3 = arith.constant 5.000000e-01 : f32
    %3 = vector.broadcast %cst_3 : f32 to vector<16x128xf32>
    %4 = arith.mulf %3, %2 : vector<16x128xf32>
    %cst_4 = arith.constant 0.707106769 : f32
    %5 = vector.broadcast %cst_4 : f32 to vector<16x128xf32>
    %6 = arith.mulf %2, %5 : vector<16x128xf32>
    %7 = math.erf %6 : vector<16x128xf32>
    %cst_5 = arith.constant 1.000000e+00 : f32
    %8 = vector.broadcast %cst_5 : f32 to vector<16x128xf32>
    %9 = arith.addf %8, %7 : vector<16x128xf32>
    %10 = arith.mulf %4, %9 : vector<16x128xf32>
    %c0_6 = arith.constant 0 : index
    %c0_7 = arith.constant 0 : index
    %11 = vector.load %arg3[%c0_6, %c0_7] : memref<16x16xbf16, #tpu.memory_space<vmem>>, vector<16x16xbf16>
    %12 = arith.truncf %10 : vector<16x128xf32> to vector<16x128xbf16>
    %cst_8 = arith.constant dense<0.000000e+00> : vector<16x128xf32>
    %13 = tpu.matmul %11, %12, %cst_8 {dimension_numbers = #tpu.dot_dimension_numbers<[1], [0], [0], [1], [0, 0, 1, 1], [], []>} : vector<16x16xbf16>, vector<16x128xbf16>, vector<16x128xf32> -> vector<16x128xf32>
    %c0_9 = arith.constant 0 : index
    %c0_10 = arith.constant 0 : index
    %14 = vector.load %arg4[%c0_9, %c0_10] : memref<16x128xf32, #tpu.memory_space<vmem>>, vector<16x128xf32>
    tpu.vector_store %arg4[%c0_9, %c0_10], %13 {strides = array<i32>} : memref<16x128xf32, #tpu.memory_space<vmem>>, vector<16x128xf32>,
    return
  }
  func.func @transform_0(%arg0: i32) -> (i32, i32) {
    %c0_i32 = arith.constant 0 : i32
    %c0_i32_0 = arith.constant 0 : i32
    return %c0_i32, %arg0 : i32, i32
  }
  func.func @transform_1(%arg0: i32) -> (i32, i32) {
    %c0_i32 = arith.constant 0 : i32
    %c0_i32_0 = arith.constant 0 : i32
    %c0_i32_1 = arith.constant 0 : i32
    return %c0_i32, %c0_i32_0 : i32, i32
  }
  func.func @transform_2(%arg0: i32) -> (i32, i32) {
    %c0_i32 = arith.constant 0 : i32
    %c0_i32_0 = arith.constant 0 : i32
    %c0_i32_1 = arith.constant 0 : i32
    return %c0_i32, %c0_i32_0 : i32, i32
  }
  func.func @transform_3(%arg0: i32) -> (i32, i32) {
    %c0_i32 = arith.constant 0 : i32
    %c0_i32_0 = arith.constant 0 : i32
    return %c0_i32, %arg0 : i32, i32
  }
}

module attributes {stable_mosaic.version = 11 : i64} {
  func.func @_conv3_kernel(%arg0: i32, %arg1: memref<16x256xf32, #tpu.memory_space<vmem>>, %arg2: memref<9x8x16xbf16, #tpu.memory_space<vmem>>, %arg3: memref<8x128xf32, #tpu.memory_space<vmem>>) attributes {dimension_semantics = [#tpu.dimension_semantics<arbitrary>], iteration_bounds = array<i64: 1>, scalar_prefetch = 0 : i64, scratch_operands = 0 : i64, tpu.core_type = #tpu.core_type<tc>, window_params = [{pipeline_mode = #tpu.pipeline_mode<synchronous>, transform_indices = @transform_0, window_bounds = array<i64: 16, 256>}, {pipeline_mode = #tpu.pipeline_mode<synchronous>, transform_indices = @transform_1, window_bounds = array<i64: 9, 8, 16>}, {pipeline_mode = #tpu.pipeline_mode<synchronous>, transform_indices = @transform_2, window_bounds = array<i64: 8, 128>}]} {
    %c0 = arith.constant 0 : index
    %c0_0 = arith.constant 0 : index
    %0 = vector.load %arg1[%c0, %c0_0] : memref<16x256xf32, #tpu.memory_space<vmem>>, vector<16x256xf32>
    %cst = arith.constant 5.000000e-01 : f32
    %1 = vector.broadcast %cst : f32 to vector<16x256xf32>
    %2 = arith.mulf %1, %0 : vector<16x256xf32>
    %cst_1 = arith.constant 0.707106769 : f32
    %3 = vector.broadcast %cst_1 : f32 to vector<16x256xf32>
    %4 = arith.mulf %0, %3 : vector<16x256xf32>
    %5 = math.erf %4 : vector<16x256xf32>
    %cst_2 = arith.constant 1.000000e+00 : f32
    %6 = vector.broadcast %cst_2 : f32 to vector<16x256xf32>
    %7 = arith.addf %6, %5 : vector<16x256xf32>
    %8 = arith.mulf %2, %7 : vector<16x256xf32>
    %9 = arith.truncf %8 : vector<16x256xf32> to vector<16x256xbf16>
    %cst_3 = arith.constant 0.000000e+00 : f32
    %10 = vector.broadcast %cst_3 : f32 to vector<8x128xf32>
    %c0_4 = arith.constant 0 : index
    %c0_5 = arith.constant 0 : index
    %c0_6 = arith.constant 0 : index
    %11 = vector.load %arg2[%c0_4, %c0_5, %c0_6] : memref<9x8x16xbf16, #tpu.memory_space<vmem>>, vector<1x8x16xbf16>
    %12 = vector.shape_cast %11 : vector<1x8x16xbf16> to vector<8x16xbf16>
    %13 = vector.extract_strided_slice %9 {offsets = [0, 0], sizes = [16, 128], strides = [1, 1]} : vector<16x256xbf16> to vector<16x128xbf16>
    %cst_7 = arith.constant dense<0.000000e+00> : vector<8x128xf32>
    %14 = tpu.matmul %12, %13, %cst_7 {dimension_numbers = #tpu.dot_dimension_numbers<[1], [0], [0], [1], [0, 0, 1, 1], [], []>} : vector<8x16xbf16>, vector<16x128xbf16>, vector<8x128xf32> -> vector<8x128xf32>
    %15 = arith.addf %10, %14 : vector<8x128xf32>
    %c1 = arith.constant 1 : index
    %c0_8 = arith.constant 0 : index
    %c0_9 = arith.constant 0 : index
    %16 = vector.load %arg2[%c1, %c0_8, %c0_9] : memref<9x8x16xbf16, #tpu.memory_space<vmem>>, vector<1x8x16xbf16>
    %17 = vector.shape_cast %16 : vector<1x8x16xbf16> to vector<8x16xbf16>
    %18 = vector.extract_strided_slice %9 {offsets = [0, 1], sizes = [16, 128], strides = [1, 1]} : vector<16x256xbf16> to vector<16x128xbf16>
    %cst_10 = arith.constant dense<0.000000e+00> : vector<8x128xf32>
    %19 = tpu.matmul %17, %18, %cst_10 {dimension_numbers = #tpu.dot_dimension_numbers<[1], [0], [0], [1], [0, 0, 1, 1], [], []>} : vector<8x16xbf16>, vector<16x128xbf16>, vector<8x128xf32> -> vector<8x128xf32>
    %20 = arith.addf %15, %19 : vector<8x128xf32>
    %c2 = arith.constant 2 : index
    %c0_11 = arith.constant 0 : index
    %c0_12 = arith.constant 0 : index
    %21 = vector.load %arg2[%c2, %c0_11, %c0_12] : memref<9x8x16xbf16, #tpu.memory_space<vmem>>, vector<1x8x16xbf16>
    %22 = vector.shape_cast %21 : vector<1x8x16xbf16> to vector<8x16xbf16>
    %23 = vector.extract_strided_slice %9 {offsets = [0, 2], sizes = [16, 128], strides = [1, 1]} : vector<16x256xbf16> to vector<16x128xbf16>
    %cst_13 = arith.constant dense<0.000000e+00> : vector<8x128xf32>
    %24 = tpu.matmul %22, %23, %cst_13 {dimension_numbers = #tpu.dot_dimension_numbers<[1], [0], [0], [1], [0, 0, 1, 1], [], []>} : vector<8x16xbf16>, vector<16x128xbf16>, vector<8x128xf32> -> vector<8x128xf32>
    %25 = arith.addf %20, %24 : vector<8x128xf32>
    %c3 = arith.constant 3 : index
    %c0_14 = arith.constant 0 : index
    %c0_15 = arith.constant 0 : index
    %26 = vector.load %arg2[%c3, %c0_14, %c0_15] : memref<9x8x16xbf16, #tpu.memory_space<vmem>>, vector<1x8x16xbf16>
    %27 = vector.shape_cast %26 : vector<1x8x16xbf16> to vector<8x16xbf16>
    %28 = vector.extract_strided_slice %9 {offsets = [0, 10], sizes = [16, 128], strides = [1, 1]} : vector<16x256xbf16> to vector<16x128xbf16>
    %cst_16 = arith.constant dense<0.000000e+00> : vector<8x128xf32>
    %29 = tpu.matmul %27, %28, %cst_16 {dimension_numbers = #tpu.dot_dimension_numbers<[1], [0], [0], [1], [0, 0, 1, 1], [], []>} : vector<8x16xbf16>, vector<16x128xbf16>, vector<8x128xf32> -> vector<8x128xf32>
    %30 = arith.addf %25, %29 : vector<8x128xf32>
    %c4 = arith.constant 4 : index
    %c0_17 = arith.constant 0 : index
    %c0_18 = arith.constant 0 : index
    %31 = vector.load %arg2[%c4, %c0_17, %c0_18] : memref<9x8x16xbf16, #tpu.memory_space<vmem>>, vector<1x8x16xbf16>
    %32 = vector.shape_cast %31 : vector<1x8x16xbf16> to vector<8x16xbf16>
    %33 = vector.extract_strided_slice %9 {offsets = [0, 11], sizes = [16, 128], strides = [1, 1]} : vector<16x256xbf16> to vector<16x128xbf16>
    %cst_19 = arith.constant dense<0.000000e+00> : vector<8x128xf32>
    %34 = tpu.matmul %32, %33, %cst_19 {dimension_numbers = #tpu.dot_dimension_numbers<[1], [0], [0], [1], [0, 0, 1, 1], [], []>} : vector<8x16xbf16>, vector<16x128xbf16>, vector<8x128xf32> -> vector<8x128xf32>
    %35 = arith.addf %30, %34 : vector<8x128xf32>
    %c5 = arith.constant 5 : index
    %c0_20 = arith.constant 0 : index
    %c0_21 = arith.constant 0 : index
    %36 = vector.load %arg2[%c5, %c0_20, %c0_21] : memref<9x8x16xbf16, #tpu.memory_space<vmem>>, vector<1x8x16xbf16>
    %37 = vector.shape_cast %36 : vector<1x8x16xbf16> to vector<8x16xbf16>
    %38 = vector.extract_strided_slice %9 {offsets = [0, 12], sizes = [16, 128], strides = [1, 1]} : vector<16x256xbf16> to vector<16x128xbf16>
    %cst_22 = arith.constant dense<0.000000e+00> : vector<8x128xf32>
    %39 = tpu.matmul %37, %38, %cst_22 {dimension_numbers = #tpu.dot_dimension_numbers<[1], [0], [0], [1], [0, 0, 1, 1], [], []>} : vector<8x16xbf16>, vector<16x128xbf16>, vector<8x128xf32> -> vector<8x128xf32>
    %40 = arith.addf %35, %39 : vector<8x128xf32>
    %c6 = arith.constant 6 : index
    %c0_23 = arith.constant 0 : index
    %c0_24 = arith.constant 0 : index
    %41 = vector.load %arg2[%c6, %c0_23, %c0_24] : memref<9x8x16xbf16, #tpu.memory_space<vmem>>, vector<1x8x16xbf16>
    %42 = vector.shape_cast %41 : vector<1x8x16xbf16> to vector<8x16xbf16>
    %43 = vector.extract_strided_slice %9 {offsets = [0, 20], sizes = [16, 128], strides = [1, 1]} : vector<16x256xbf16> to vector<16x128xbf16>
    %cst_25 = arith.constant dense<0.000000e+00> : vector<8x128xf32>
    %44 = tpu.matmul %42, %43, %cst_25 {dimension_numbers = #tpu.dot_dimension_numbers<[1], [0], [0], [1], [0, 0, 1, 1], [], []>} : vector<8x16xbf16>, vector<16x128xbf16>, vector<8x128xf32> -> vector<8x128xf32>
    %45 = arith.addf %40, %44 : vector<8x128xf32>
    %c7 = arith.constant 7 : index
    %c0_26 = arith.constant 0 : index
    %c0_27 = arith.constant 0 : index
    %46 = vector.load %arg2[%c7, %c0_26, %c0_27] : memref<9x8x16xbf16, #tpu.memory_space<vmem>>, vector<1x8x16xbf16>
    %47 = vector.shape_cast %46 : vector<1x8x16xbf16> to vector<8x16xbf16>
    %48 = vector.extract_strided_slice %9 {offsets = [0, 21], sizes = [16, 128], strides = [1, 1]} : vector<16x256xbf16> to vector<16x128xbf16>
    %cst_28 = arith.constant dense<0.000000e+00> : vector<8x128xf32>
    %49 = tpu.matmul %47, %48, %cst_28 {dimension_numbers = #tpu.dot_dimension_numbers<[1], [0], [0], [1], [0, 0, 1, 1], [], []>} : vector<8x16xbf16>, vector<16x128xbf16>, vector<8x128xf32> -> vector<8x128xf32>
    %50 = arith.addf %45, %49 : vector<8x128xf32>
    %c8 = arith.constant 8 : index
    %c0_29 = arith.constant 0 : index
    %c0_30 = arith.constant 0 : index
    %51 = vector.load %arg2[%c8, %c0_29, %c0_30] : memref<9x8x16xbf16, #tpu.memory_space<vmem>>, vector<1x8x16xbf16>
    %52 = vector.shape_cast %51 : vector<1x8x16xbf16> to vector<8x16xbf16>
    %53 = vector.extract_strided_slice %9 {offsets = [0, 22], sizes = [16, 128], strides = [1, 1]} : vector<16x256xbf16> to vector<16x128xbf16>
    %cst_31 = arith.constant dense<0.000000e+00> : vector<8x128xf32>
    %54 = tpu.matmul %52, %53, %cst_31 {dimension_numbers = #tpu.dot_dimension_numbers<[1], [0], [0], [1], [0, 0, 1, 1], [], []>} : vector<8x16xbf16>, vector<16x128xbf16>, vector<8x128xf32> -> vector<8x128xf32>
    %55 = arith.addf %50, %54 : vector<8x128xf32>
    %c0_32 = arith.constant 0 : index
    %c0_33 = arith.constant 0 : index
    %56 = vector.load %arg3[%c0_32, %c0_33] : memref<8x128xf32, #tpu.memory_space<vmem>>, vector<8x128xf32>
    tpu.vector_store %arg3[%c0_32, %c0_33], %55 {strides = array<i32>} : memref<8x128xf32, #tpu.memory_space<vmem>>, vector<8x128xf32>,
    return
  }
  func.func @transform_0(%arg0: i32) -> (i32, i32) {
    %c0_i32 = arith.constant 0 : i32
    %c0_i32_0 = arith.constant 0 : i32
    %c0_i32_1 = arith.constant 0 : i32
    return %c0_i32, %c0_i32_0 : i32, i32
  }
  func.func @transform_1(%arg0: i32) -> (i32, i32, i32) {
    %c0_i32 = arith.constant 0 : i32
    %c0_i32_0 = arith.constant 0 : i32
    %c0_i32_1 = arith.constant 0 : i32
    %c0_i32_2 = arith.constant 0 : i32
    return %c0_i32, %c0_i32_0, %c0_i32_1 : i32, i32, i32
  }
  func.func @transform_2(%arg0: i32) -> (i32, i32) {
    %c0_i32 = arith.constant 0 : i32
    %c0_i32_0 = arith.constant 0 : i32
    %c0_i32_1 = arith.constant 0 : i32
    return %c0_i32, %c0_i32_0 : i32, i32
  }
}

</mosaic_0001>

<llo_original>
// kernel: forward.21
$region0: #{forward.21}
  #allocation0 [shape = 'u32[]', space=smem, size = 0x4, offset = 0x4, fixed_abs, tag = 'smem constant byte address 0x4 - core index']
  #allocation1 [shape = 'u32[144,128]{1,0:T(1,128)}', space=vmem, size = 0x12000, scoped, tag = 'internal scratch']
  %s0 = inlined_call_operand.vmem [shape: f32[32,128], index: 0, kind: input, shape index: {}]
  %s1 = inlined_call_operand.vmem [shape: f32[32,32], index: 1, kind: input, shape index: {}]
  %s2 = inlined_call_operand.vmem [shape: f32[32,128], index: 2, kind: output, shape index: {}]
  %s3 = sld [smem:[#allocation0]]
  $region18: #{forward.21} parent=0
    _
  %s5 = ssub.s32 1, %s3
  %s6 = scalar_select 0, %s5, %s3
  // Predicated region
  $region2: #{forward.21} parent=0 // pred_check
    _
  $region3: #{forward.21} parent=0 // pred_check_branch
    %8 = sbr.rel (0) target = $region5
  $region4: #{forward.21} parent=0 // pred_region
    _
  $region5: #{forward.21} parent=0 // pred_fallthru
    _
  // Predicated region
  $region6: #{forward.21} parent=0 // pred_check
    _
  $region7: #{forward.21} parent=0 // pred_check_branch
    %10 = sbr.rel (0) target = $region9
  $region8: #{forward.21} parent=0 // pred_region
    _
  $region9: #{forward.21} parent=0 // pred_fallthru
    _
  %v11 = vld [vmem:[%s0] sm:$0xff]
  %v12 = vld [vmem:[%s0 + $0x8] sm:$0xff]
  %v13 = vld [vmem:[%s0 + $0x10] sm:$0xff]
  %v14 = vld [vmem:[%s0 + $0x18] sm:$0xff]
  %v15 = vld [vmem:[%s1] sm:$0xff]
  %v16 = vld [vmem:[%s1 + $0x8] sm:$0xff]
  %v17 = vld [vmem:[%s1 + $0x10] sm:$0xff]
  %v18 = vld [vmem:[%s1 + $0x18] sm:$0xff]
  %vm19 = vcmask 261120
  %v21 = vsel %vm19, %v15, 0
  %v24 = vsel %vm19, %v16, 0
  %v27 = vsel %vm19, %v17, 0
  %v30 = vsel %vm19, %v18, 0
  %32 = vmatprep.subr.mxu0 0.0
  %33 = vmatpush1.msra.mxu0 %v11
  %34 = vmatprep.subr.mxu0 0.0
  %35 = vmatpush1.msra.mxu0 %v12
  %36 = vmatprep.subr.mxu0 0.0
  %37 = vmatpush1.msra.mxu0 %v13
  %38 = vmatprep.subr.mxu0 0.0
  %39 = vmatpush1.msra.mxu0 %v14
  %40 = vmatprep.subr.mxu0 0.0
  %41 = vmatpush1.msra.mxu0 0.0
  %42 = vmatprep.subr.mxu0 0.0
  %43 = vmatpush1.msra.mxu0 0.0
  %44 = vmatprep.subr.mxu0 0.0
  %45 = vmatpush1.msra.mxu0 0.0
  %46 = vmatprep.subr.mxu0 0.0
  %47 = vmatpush1.msra.mxu0 0.0
  %48 = vmatprep.subr.mxu0 0.0
  %49 = vmatpush1.msra.mxu0 0.0
  %50 = vmatprep.subr.mxu0 0.0
  %51 = vmatpush1.msra.mxu0 0.0
  %52 = vmatprep.subr.mxu0 0.0
  %53 = vmatpush1.msra.mxu0 0.0
  %54 = vmatprep.subr.mxu0 0.0
  %55 = vmatpush1.msra.mxu0 0.0
  %56 = vmatprep.subr.mxu0 0.0
  %57 = vmatpush1.msra.mxu0 0.0
  %58 = vmatprep.subr.mxu0 0.0
  %59 = vmatpush1.msra.mxu0 0.0
  %60 = vmatprep.subr.mxu0 0.0
  %61 = vmatpush1.msra.mxu0 0.0
  %62 = vmatprep.subr.mxu0 0.0
  %63 = vmatpush1.msra.mxu0 0.0
  %64 = vmatprep.subr.mxu0 0.0
  %65 = vmatpush1.msra.mxu0 0.0
  %66 = vmatprep.subr.mxu0 0.0
  %67 = vmatpush1.msra.mxu0 0.0
  %68 = vmatprep.subr.mxu0 0.0
  %69 = vmatpush1.msra.mxu0 0.0
  %70 = vmatprep.subr.mxu0 0.0
  %71 = vmatpush1.msra.mxu0 0.0
  %72 = vmatprep.subr.mxu0 0.0
  %73 = vmatpush1.msra.mxu0 0.0
  %74 = vmatprep.subr.mxu0 0.0
  %75 = vmatpush1.msra.mxu0 0.0
  %76 = vmatprep.subr.mxu0 0.0
  %77 = vmatpush1.msra.mxu0 0.0
  %78 = vmatprep.subr.mxu0 0.0
  %79 = vmatpush1.msra.mxu0 0.0
  %80 = vmatprep.subr.mxu0 0.0
  %81 = vmatpush1.msra.mxu0 0.0
  %82 = vmatprep.subr.mxu0 0.0
  %83 = vmatpush1.msra.mxu0 0.0
  %84 = vmatprep.subr.mxu0 0.0
  %85 = vmatpush1.msra.mxu0 0.0
  %86 = vmatprep.subr.mxu0 0.0
  %87 = vmatpush1.msra.mxu0 0.0
  %88 = vmatprep.subr.mxu0 0.0
  %89 = vmatpush1.msra.mxu0 0.0
  %90 = vmatprep.subr.mxu0 0.0
  %91 = vmatpush1.msra.mxu0 0.0
  %92 = vmatprep.subr.mxu0 0.0
  %93 = vmatpush1.msra.mxu0 0.0
  %94 = vmatprep.subr.mxu0 0.0
  %95 = vmatpush1.msra.mxu0 0.0
  %96 = vmatprep.mubr.f32.mxu0 0.0
  %97 = vmatmul.mubr.f32.gmra.mrb[0].mxu0 %v21
  %v98 = vpop.f32.mrb[0].mxu0
  %v99 = vadd.f32 0.0, %v98
  %v100 = vpop.f32.mrb[0].mxu0
  %101 = vmatprep.mubr.f32.mxu0 0.0
  %102 = vmatmul.mubr.f32.gmra.mrb[0].mxu0 %v24
  %v103 = vpop.f32.mrb[0].mxu0
  %v104 = vadd.f32 0.0, %v103
  %v105 = vpop.f32.mrb[0].mxu0
  %106 = vmatprep.mubr.f32.mxu0 0.0
  %107 = vmatmul.mubr.f32.gmra.mrb[0].mxu0 %v27
  %v108 = vpop.f32.mrb[0].mxu0
  %v109 = vadd.f32 0.0, %v108
  %v110 = vpop.f32.mrb[0].mxu0
  %111 = vmatprep.mubr.f32.mxu0 0.0
  %112 = vmatmul.mubr.f32.gmra.mrb[0].mxu0 %v30
  %v113 = vpop.f32.mrb[0].mxu0
  %v114 = vadd.f32 0.0, %v113
  %v115 = vpop.f32.mrb[0].mxu0
  %116 = vdwg.mxu0
  %117 = vst [vmem:[%s2] sm:$0xff] %v99
  %118 = vst [vmem:[%s2 + $0x8] sm:$0xff] %v104
  %119 = vst [vmem:[%s2 + $0x10] sm:$0xff] %v109
  %120 = vst [vmem:[%s2 + $0x18] sm:$0xff] %v114
  // Predicated region
  $region10: #{forward.21} parent=0 // pred_check
    _
  $region11: #{forward.21} parent=0 // pred_check_branch
    %122 = sbr.rel (0) target = $region13
  $region12: #{forward.21} parent=0 // pred_region
    _
  $region13: #{forward.21} parent=0 // pred_fallthru
    _
  // Predicated region
  $region14: #{forward.21} parent=0 // pred_check
    _
  $region15: #{forward.21} parent=0 // pred_check_branch
    %124 = sbr.rel (0) target = $region17
  $region16: #{forward.21} parent=0 // pred_region
    _
  $region17: #{forward.21} parent=0 // pred_fallthru
    _

// kernel: forward.22
$region0: #{forward.22}
  #allocation0 [shape = 'u32[]', space=smem, size = 0x4, offset = 0x4, fixed_abs, tag = 'smem constant byte address 0x4 - core index']
  #allocation1 [shape = 'u32[144,128]{1,0:T(1,128)}', space=vmem, size = 0x12000, scoped, tag = 'internal scratch']
  %s0 = inlined_call_operand.vmem [shape: bf16[16,128], index: 0, kind: input, shape index: {}]
  %s1 = inlined_call_operand.vmem [shape: bf16[8,16], index: 1, kind: input, shape index: {}]
  %s2 = inlined_call_operand.vmem [shape: f32[8,128], index: 2, kind: output, shape index: {}]
  %s3 = sld [smem:[#allocation0]]
  $region18: #{forward.22} parent=0
    _
  %s5 = ssub.s32 1, %s3
  %s6 = scalar_select 0, %s5, %s3
  // Predicated region
  $region2: #{forward.22} parent=0 // pred_check
    _
  $region3: #{forward.22} parent=0 // pred_check_branch
    %8 = sbr.rel (0) target = $region5
  $region4: #{forward.22} parent=0 // pred_region
    _
  $region5: #{forward.22} parent=0 // pred_fallthru
    _
  // Predicated region
  $region6: #{forward.22} parent=0 // pred_check
    _
  $region7: #{forward.22} parent=0 // pred_check_branch
    %10 = sbr.rel (0) target = $region9
  $region8: #{forward.22} parent=0 // pred_region
    _
  $region9: #{forward.22} parent=0 // pred_fallthru
    _
  %v12 = vld [vmem:[%s0] sm:$0xf]
  %v13 = vld [vmem:[%s0 + $0x4] sm:$0xf]
  %v14 = vld [vmem:[%s1] sm:$0xf]
  %v17 = vunpack.c.l.b16 %v12
  %v18 = vunpack.c.l.b16 %v13
  %v19 = vpack.c.b16 %v18, %v17
  %vm21 = vcmask 130048
  %v23 = vsel %vm21, %v14, 0
  %25 = vmatprep.subr.bf16.mxu0 0
  %26 = vmatpush1.bf16.msra.mxu0 %v19
  %27 = vmatprep.subr.bf16.mxu0 0
  %28 = vmatpush1.bf16.msra.mxu0 0
  %29 = vmatprep.subr.bf16.mxu0 0
  %30 = vmatpush1.bf16.msra.mxu0 0
  %31 = vmatprep.subr.bf16.mxu0 0
  %32 = vmatpush1.bf16.msra.mxu0 0
  %33 = vmatprep.subr.bf16.mxu0 0
  %34 = vmatpush1.bf16.msra.mxu0 0
  %35 = vmatprep.subr.bf16.mxu0 0
  %36 = vmatpush1.bf16.msra.mxu0 0
  %37 = vmatprep.subr.bf16.mxu0 0
  %38 = vmatpush1.bf16.msra.mxu0 0
  %39 = vmatprep.subr.bf16.mxu0 0
  %40 = vmatpush1.bf16.msra.mxu0 0
  %41 = vmatprep.subr.bf16.mxu0 0
  %42 = vmatpush1.bf16.msra.mxu0 0
  %43 = vmatprep.subr.bf16.mxu0 0
  %44 = vmatpush1.bf16.msra.mxu0 0
  %45 = vmatprep.subr.bf16.mxu0 0
  %46 = vmatpush1.bf16.msra.mxu0 0
  %47 = vmatprep.subr.bf16.mxu0 0
  %48 = vmatpush1.bf16.msra.mxu0 0
  %49 = vmatprep.subr.bf16.mxu0 0
  %50 = vmatpush1.bf16.msra.mxu0 0
  %51 = vmatprep.subr.bf16.mxu0 0
  %52 = vmatpush1.bf16.msra.mxu0 0
  %53 = vmatprep.subr.bf16.mxu0 0
  %54 = vmatpush1.bf16.msra.mxu0 0
  %55 = vmatprep.subr.bf16.mxu0 0
  %56 = vmatpush1.bf16.msra.mxu0 0
  %57 = vmatprep.mubr.bf16.mxu0 0
  %58 = vmatmul.mubr.bf16.gmra.mrb[0].mxu0 %v23
  %v59 = vpop.f32.mrb[0].mxu0
  %v60 = vadd.f32 0.0, %v59
  %v61 = vpop.f32.mrb[0].mxu0
  %v62 = vpop.f32.mrb[0].mxu0
  %v63 = vpop.f32.mrb[0].mxu0
  %64 = vdwg.mxu0
  %65 = vst [vmem:[%s2] sm:$0xff] %v60
  // Predicated region
  $region10: #{forward.22} parent=0 // pred_check
    _
  $region11: #{forward.22} parent=0 // pred_check_branch
    %67 = sbr.rel (0) target = $region13
  $region12: #{forward.22} parent=0 // pred_region
    _
  $region13: #{forward.22} parent=0 // pred_fallthru
    _
  // Predicated region
  $region14: #{forward.22} parent=0 // pred_check
    _
  $region15: #{forward.22} parent=0 // pred_check_branch
    %69 = sbr.rel (0) target = $region17
  $region16: #{forward.22} parent=0 // pred_region
    _
  $region17: #{forward.22} parent=0 // pred_fallthru
    _

// kernel: forward.23
$region0: #{forward.23}
  #allocation0 [shape = 'u32[]', space=smem, size = 0x4, offset = 0x4, fixed_abs, tag = 'smem constant byte address 0x4 - core index']
  #allocation1 [shape = 'u32[144,128]{1,0:T(1,128)}', space=vmem, size = 0x12000, scoped, tag = 'internal scratch']
  %s0 = inlined_call_operand.vmem [shape: f32[8,256], index: 0, kind: input, shape index: {}]
  %s1 = inlined_call_operand.vmem [shape: bf16[9,8,8], index: 1, kind: input, shape index: {}]
  %s2 = inlined_call_operand.vmem [shape: f32[8,128], index: 2, kind: output, shape index: {}]
  %s3 = sld [smem:[#allocation0]]
  $region18: #{forward.23} parent=0
    _
  %s5 = ssub.s32 1, %s3
  %s6 = scalar_select 0, %s5, %s3
  // Predicated region
  $region2: #{forward.23} parent=0 // pred_check
    _
  $region3: #{forward.23} parent=0 // pred_check_branch
    %8 = sbr.rel (0) target = $region5
  $region4: #{forward.23} parent=0 // pred_region
    _
  $region5: #{forward.23} parent=0 // pred_fallthru
    _
  // Predicated region
  $region6: #{forward.23} parent=0 // pred_check
    _
  $region7: #{forward.23} parent=0 // pred_check_branch
    %10 = sbr.rel (0) target = $region9
  $region8: #{forward.23} parent=0 // pred_region
    _
  $region9: #{forward.23} parent=0 // pred_fallthru
    _
  %v12 = vld [vmem:[%s0] sm:$0xff]
  %v13 = vld [vmem:[%s0 + $0x8] sm:$0xff]
  %v14 = vmul.f32 %v12, 0.5
  %v15 = vmul.f32 %v13, 0.5
  %v16 = vmul.f32 %v12, 0.70710677
  %v17 = vmul.f32 %v13, 0.70710677
  %v18 = verf.f32.pop %v16
  %v19 = verf.f32.pop %v17
  %v20 = vadd.f32 %v18, 1.0
  %v21 = vadd.f32 %v19, 1.0
  %v22 = vmul.f32 %v14, %v20
  %v23 = vmul.f32 %v15, %v21
  %v24 = vpack.c.bf16 %v22, %v22
  %v25 = vpack.c.bf16 %v23, %v23
  %v26 = vld [vmem:[%s1] sm:$0xf]
  %s27 = scalar_lea.vmem %s1, 4
  %v28 = vld [vmem:[%s27] sm:$0xf]
  %31 = vrot.lane.b32.xlu0 %v24, 127
  %v32 = vpop.permute.xlu0 %31
  %33 = vrot.lane.b32.xlu0 %v25, 127
  %v34 = vpop.permute.xlu0 %33
  %vm35 = vcmask 1039360
  %v36 = vsel %vm35, %v32, %v34
  %vm37 = vcmask 64512
  %v39 = vsel %vm37, %v28, 0
  %vm41 = vcmask 1043456
  %v43 = vsel %vm41, %v36, 0
  %45 = vmatprep.subr.bf16.mxu0 0
  %46 = vmatpush1.bf16.msra.mxu0 %v43
  %47 = vmatprep.subr.bf16.mxu0 0
  %48 = vmatpush1.bf16.msra.mxu0 0
  %49 = vmatprep.subr.bf16.mxu0 0
  %50 = vmatpush1.bf16.msra.mxu0 0
  %51 = vmatprep.subr.bf16.mxu0 0
  %52 = vmatpush1.bf16.msra.mxu0 0
  %53 = vmatprep.subr.bf16.mxu0 0
  %54 = vmatpush1.bf16.msra.mxu0 0
  %55 = vmatprep.subr.bf16.mxu0 0
  %56 = vmatpush1.bf16.msra.mxu0 0
  %57 = vmatprep.subr.bf16.mxu0 0
  %58 = vmatpush1.bf16.msra.mxu0 0
  %59 = vmatprep.subr.bf16.mxu0 0
  %60 = vmatpush1.bf16.msra.mxu0 0
  %61 = vmatprep.subr.bf16.mxu0 0
  %62 = vmatpush1.bf16.msra.mxu0 0
  %63 = vmatprep.subr.bf16.mxu0 0
  %64 = vmatpush1.bf16.msra.mxu0 0
  %65 = vmatprep.subr.bf16.mxu0 0
  %66 = vmatpush1.bf16.msra.mxu0 0
  %67 = vmatprep.subr.bf16.mxu0 0
  %68 = vmatpush1.bf16.msra.mxu0 0
  %69 = vmatprep.subr.bf16.mxu0 0
  %70 = vmatpush1.bf16.msra.mxu0 0
  %71 = vmatprep.subr.bf16.mxu0 0
  %72 = vmatpush1.bf16.msra.mxu0 0
  %73 = vmatprep.subr.bf16.mxu0 0
  %74 = vmatpush1.bf16.msra.mxu0 0
  %75 = vmatprep.subr.bf16.mxu0 0
  %76 = vmatpush1.bf16.msra.mxu0 0
  %77 = vmatprep.mubr.bf16.mxu0 0
  %78 = vmatmul.mubr.bf16.gmra.mrb[0].mxu0 %v39
  %v79 = vpop.f32.mrb[0].mxu0
  %v80 = vadd.f32 0.0, %v79
  %v81 = vpop.f32.mrb[0].mxu0
  %v82 = vpop.f32.mrb[0].mxu0
  %v83 = vpop.f32.mrb[0].mxu0
  %84 = vdwg.mxu0
  %v86 = vsel %vm37, %v26, 0
  %v89 = vsel %vm41, %v24, 0
  %91 = vmatprep.subr.bf16.mxu0 0
  %92 = vmatpush1.bf16.msra.mxu0 %v89
  %93 = vmatprep.subr.bf16.mxu0 0
  %94 = vmatpush1.bf16.msra.mxu0 0
  %95 = vmatprep.subr.bf16.mxu0 0
  %96 = vmatpush1.bf16.msra.mxu0 0
  %97 = vmatprep.subr.bf16.mxu0 0
  %98 = vmatpush1.bf16.msra.mxu0 0
  %99 = vmatprep.subr.bf16.mxu0 0
  %100 = vmatpush1.bf16.msra.mxu0 0
  %101 = vmatprep.subr.bf16.mxu0 0
  %102 = vmatpush1.bf16.msra.mxu0 0
  %103 = vmatprep.subr.bf16.mxu0 0
  %104 = vmatpush1.bf16.msra.mxu0 0
  %105 = vmatprep.subr.bf16.mxu0 0
  %106 = vmatpush1.bf16.msra.mxu0 0
  %107 = vmatprep.subr.bf16.mxu0 0
  %108 = vmatpush1.bf16.msra.mxu0 0
  %109 = vmatprep.subr.bf16.mxu0 0
  %110 = vmatpush1.bf16.msra.mxu0 0
  %111 = vmatprep.subr.bf16.mxu0 0
  %112 = vmatpush1.bf16.msra.mxu0 0
  %113 = vmatprep.subr.bf16.mxu0 0
  %114 = vmatpush1.bf16.msra.mxu0 0
  %115 = vmatprep.subr.bf16.mxu0 0
  %116 = vmatpush1.bf16.msra.mxu0 0
  %117 = vmatprep.subr.bf16.mxu0 0
  %118 = vmatpush1.bf16.msra.mxu0 0
  %119 = vmatprep.subr.bf16.mxu0 0
  %120 = vmatpush1.bf16.msra.mxu0 0
  %121 = vmatprep.subr.bf16.mxu0 0
  %122 = vmatpush1.bf16.msra.mxu0 0
  %123 = vmatprep.mubr.bf16.mxu0 0
  %124 = vmatmul.mubr.bf16.gmra.mrb[0].mxu0 %v86
  %v125 = vpop.f32.mrb[0].mxu0
  %v126 = vadd.f32 %v80, %v125
  %v127 = vpop.f32.mrb[0].mxu0
  %v128 = vpop.f32.mrb[0].mxu0
  %v129 = vpop.f32.mrb[0].mxu0
  %130 = vdwg.mxu0
  %s131 = scalar_lea.vmem %s1, 8
  %v132 = vld [vmem:[%s131] sm:$0xf]
  %133 = vrot.lane.b32.xlu0 %v24, 126
  %v134 = vpop.permute.xlu0 %133
  %135 = vrot.lane.b32.xlu0 %v25, 126
  %v136 = vpop.permute.xlu0 %135
  %vm137 = vcmask 1031168
  %v138 = vsel %vm137, %v134, %v136
  %v140 = vsel %vm37, %v132, 0
  %v143 = vsel %vm41, %v138, 0
  %145 = vmatprep.subr.bf16.mxu0 0
  %146 = vmatpush1.bf16.msra.mxu0 %v143
  %147 = vmatprep.subr.bf16.mxu0 0
  %148 = vmatpush1.bf16.msra.mxu0 0
  %149 = vmatprep.subr.bf16.mxu0 0
  %150 = vmatpush1.bf16.msra.mxu0 0
  %151 = vmatprep.subr.bf16.mxu0 0
  %152 = vmatpush1.bf16.msra.mxu0 0
  %153 = vmatprep.subr.bf16.mxu0 0
  %154 = vmatpush1.bf16.msra.mxu0 0
  %155 = vmatprep.subr.bf16.mxu0 0
  %156 = vmatpush1.bf16.msra.mxu0 0
  %157 = vmatprep.subr.bf16.mxu0 0
  %158 = vmatpush1.bf16.msra.mxu0 0
  %159 = vmatprep.subr.bf16.mxu0 0
  %160 = vmatpush1.bf16.msra.mxu0 0
  %161 = vmatprep.subr.bf16.mxu0 0
  %162 = vmatpush1.bf16.msra.mxu0 0
  %163 = vmatprep.subr.bf16.mxu0 0
  %164 = vmatpush1.bf16.msra.mxu0 0
  %165 = vmatprep.subr.bf16.mxu0 0
  %166 = vmatpush1.bf16.msra.mxu0 0
  %167 = vmatprep.subr.bf16.mxu0 0
  %168 = vmatpush1.bf16.msra.mxu0 0
  %169 = vmatprep.subr.bf16.mxu0 0
  %170 = vmatpush1.bf16.msra.mxu0 0
  %171 = vmatprep.subr.bf16.mxu0 0
  %172 = vmatpush1.bf16.msra.mxu0 0
  %173 = vmatprep.subr.bf16.mxu0 0
  %174 = vmatpush1.bf16.msra.mxu0 0
  %175 = vmatprep.subr.bf16.mxu0 0
  %176 = vmatpush1.bf16.msra.mxu0 0
  %177 = vmatprep.mubr.bf16.mxu0 0
  %178 = vmatmul.mubr.bf16.gmra.mrb[0].mxu0 %v140
  %v179 = vpop.f32.mrb[0].mxu0
  %v180 = vadd.f32 0.0, %v179
  %v181 = vpop.f32.mrb[0].mxu0
  %v182 = vpop.f32.mrb[0].mxu0
  %v183 = vpop.f32.mrb[0].mxu0
  %184 = vdwg.mxu0
  %v185 = vadd.f32 %v126, %v180
  %s186 = scalar_lea.vmem %s1, 12
  %v187 = vld [vmem:[%s186] sm:$0xf]
  %188 = vrot.lane.b32.xlu0 %v24, 118
  %v189 = vpop.permute.xlu0 %188
  %190 = vrot.lane.b32.xlu0 %v25, 118
  %v191 = vpop.permute.xlu0 %190
  %vm192 = vcmask 965632
  %v193 = vsel %vm192, %v189, %v191
  %v195 = vsel %vm37, %v187, 0
  %v198 = vsel %vm41, %v193, 0
  %200 = vmatprep.subr.bf16.mxu0 0
  %201 = vmatpush1.bf16.msra.mxu0 %v198
  %202 = vmatprep.subr.bf16.mxu0 0
  %203 = vmatpush1.bf16.msra.mxu0 0
  %204 = vmatprep.subr.bf16.mxu0 0
  %205 = vmatpush1.bf16.msra.mxu0 0
  %206 = vmatprep.subr.bf16.mxu0 0
  %207 = vmatpush1.bf16.msra.mxu0 0
  %208 = vmatprep.subr.bf16.mxu0 0
  %209 = vmatpush1.bf16.msra.mxu0 0
  %210 = vmatprep.subr.bf16.mxu0 0
  %211 = vmatpush1.bf16.msra.mxu0 0
  %212 = vmatprep.subr.bf16.mxu0 0
  %213 = vmatpush1.bf16.msra.mxu0 0
  %214 = vmatprep.subr.bf16.mxu0 0
  %215 = vmatpush1.bf16.msra.mxu0 0
  %216 = vmatprep.subr.bf16.mxu0 0
  %217 = vmatpush1.bf16.msra.mxu0 0
  %218 = vmatprep.subr.bf16.mxu0 0
  %219 = vmatpush1.bf16.msra.mxu0 0
  %220 = vmatprep.subr.bf16.mxu0 0
  %221 = vmatpush1.bf16.msra.mxu0 0
  %222 = vmatprep.subr.bf16.mxu0 0
  %223 = vmatpush1.bf16.msra.mxu0 0
  %224 = vmatprep.subr.bf16.mxu0 0
  %225 = vmatpush1.bf16.msra.mxu0 0
  %226 = vmatprep.subr.bf16.mxu0 0
  %227 = vmatpush1.bf16.msra.mxu0 0
  %228 = vmatprep.subr.bf16.mxu0 0
  %229 = vmatpush1.bf16.msra.mxu0 0
  %230 = vmatprep.subr.bf16.mxu0 0
  %231 = vmatpush1.bf16.msra.mxu0 0
  %232 = vmatprep.mubr.bf16.mxu0 0
  %233 = vmatmul.mubr.bf16.gmra.mrb[0].mxu0 %v195
  %v234 = vpop.f32.mrb[0].mxu0
  %v235 = vadd.f32 0.0, %v234
  %v236 = vpop.f32.mrb[0].mxu0
  %v237 = vpop.f32.mrb[0].mxu0
  %v238 = vpop.f32.mrb[0].mxu0
  %239 = vdwg.mxu0
  %v240 = vadd.f32 %v185, %v235
  %s241 = scalar_lea.vmem %s1, 16
  %v242 = vld [vmem:[%s241] sm:$0xf]
  %243 = vrot.lane.b32.xlu0 %v24, 117
  %v244 = vpop.permute.xlu0 %243
  %245 = vrot.lane.b32.xlu0 %v25, 117
  %v246 = vpop.permute.xlu0 %245
  %vm247 = vcmask 957440
  %v248 = vsel %vm247, %v244, %v246
  %v250 = vsel %vm37, %v242, 0
  %v253 = vsel %vm41, %v248, 0
  %255 = vmatprep.subr.bf16.mxu0 0
  %256 = vmatpush1.bf16.msra.mxu0 %v253
  %257 = vmatprep.subr.bf16.mxu0 0
  %258 = vmatpush1.bf16.msra.mxu0 0
  %259 = vmatprep.subr.bf16.mxu0 0
  %260 = vmatpush1.bf16.msra.mxu0 0
  %261 = vmatprep.subr.bf16.mxu0 0
  %262 = vmatpush1.bf16.msra.mxu0 0
  %263 = vmatprep.subr.bf16.mxu0 0
  %264 = vmatpush1.bf16.msra.mxu0 0
  %265 = vmatprep.subr.bf16.mxu0 0
  %266 = vmatpush1.bf16.msra.mxu0 0
  %267 = vmatprep.subr.bf16.mxu0 0
  %268 = vmatpush1.bf16.msra.mxu0 0
  %269 = vmatprep.subr.bf16.mxu0 0
  %270 = vmatpush1.bf16.msra.mxu0 0
  %271 = vmatprep.subr.bf16.mxu0 0
  %272 = vmatpush1.bf16.msra.mxu0 0
  %273 = vmatprep.subr.bf16.mxu0 0
  %274 = vmatpush1.bf16.msra.mxu0 0
  %275 = vmatprep.subr.bf16.mxu0 0
  %276 = vmatpush1.bf16.msra.mxu0 0
  %277 = vmatprep.subr.bf16.mxu0 0
  %278 = vmatpush1.bf16.msra.mxu0 0
  %279 = vmatprep.subr.bf16.mxu0 0
  %280 = vmatpush1.bf16.msra.mxu0 0
  %281 = vmatprep.subr.bf16.mxu0 0
  %282 = vmatpush1.bf16.msra.mxu0 0
  %283 = vmatprep.subr.bf16.mxu0 0
  %284 = vmatpush1.bf16.msra.mxu0 0
  %285 = vmatprep.subr.bf16.mxu0 0
  %286 = vmatpush1.bf16.msra.mxu0 0
  %287 = vmatprep.mubr.bf16.mxu0 0
  %288 = vmatmul.mubr.bf16.gmra.mrb[0].mxu0 %v250
  %v289 = vpop.f32.mrb[0].mxu0
  %v290 = vadd.f32 0.0, %v289
  %v291 = vpop.f32.mrb[0].mxu0
  %v292 = vpop.f32.mrb[0].mxu0
  %v293 = vpop.f32.mrb[0].mxu0
  %294 = vdwg.mxu0
  %v295 = vadd.f32 %v240, %v290
  %s296 = scalar_lea.vmem %s1, 20
  %v297 = vld [vmem:[%s296] sm:$0xf]
  %298 = vrot.lane.b32.xlu0 %v24, 116
  %v299 = vpop.permute.xlu0 %298
  %300 = vrot.lane.b32.xlu0 %v25, 116
  %v301 = vpop.permute.xlu0 %300
  %vm302 = vcmask 949248
  %v303 = vsel %vm302, %v299, %v301
  %v305 = vsel %vm37, %v297, 0
  %v308 = vsel %vm41, %v303, 0
  %310 = vmatprep.subr.bf16.mxu0 0
  %311 = vmatpush1.bf16.msra.mxu0 %v308
  %312 = vmatprep.subr.bf16.mxu0 0
  %313 = vmatpush1.bf16.msra.mxu0 0
  %314 = vmatprep.subr.bf16.mxu0 0
  %315 = vmatpush1.bf16.msra.mxu0 0
  %316 = vmatprep.subr.bf16.mxu0 0
  %317 = vmatpush1.bf16.msra.mxu0 0
  %318 = vmatprep.subr.bf16.mxu0 0
  %319 = vmatpush1.bf16.msra.mxu0 0
  %320 = vmatprep.subr.bf16.mxu0 0
  %321 = vmatpush1.bf16.msra.mxu0 0
  %322 = vmatprep.subr.bf16.mxu0 0
  %323 = vmatpush1.bf16.msra.mxu0 0
  %324 = vmatprep.subr.bf16.mxu0 0
  %325 = vmatpush1.bf16.msra.mxu0 0
  %326 = vmatprep.subr.bf16.mxu0 0
  %327 = vmatpush1.bf16.msra.mxu0 0
  %328 = vmatprep.subr.bf16.mxu0 0
  %329 = vmatpush1.bf16.msra.mxu0 0
  %330 = vmatprep.subr.bf16.mxu0 0
  %331 = vmatpush1.bf16.msra.mxu0 0
  %332 = vmatprep.subr.bf16.mxu0 0
  %333 = vmatpush1.bf16.msra.mxu0 0
  %334 = vmatprep.subr.bf16.mxu0 0
  %335 = vmatpush1.bf16.msra.mxu0 0
  %336 = vmatprep.subr.bf16.mxu0 0
  %337 = vmatpush1.bf16.msra.mxu0 0
  %338 = vmatprep.subr.bf16.mxu0 0
  %339 = vmatpush1.bf16.msra.mxu0 0
  %340 = vmatprep.subr.bf16.mxu0 0
  %341 = vmatpush1.bf16.msra.mxu0 0
  %342 = vmatprep.mubr.bf16.mxu0 0
  %343 = vmatmul.mubr.bf16.gmra.mrb[0].mxu0 %v305
  %v344 = vpop.f32.mrb[0].mxu0
  %v345 = vadd.f32 0.0, %v344
  %v346 = vpop.f32.mrb[0].mxu0
  %v347 = vpop.f32.mrb[0].mxu0
  %v348 = vpop.f32.mrb[0].mxu0
  %349 = vdwg.mxu0
  %v350 = vadd.f32 %v295, %v345
  %s351 = scalar_lea.vmem %s1, 24
  %v352 = vld [vmem:[%s351] sm:$0xf]
  %353 = vrot.lane.b32.xlu0 %v24, 108
  %v354 = vpop.permute.xlu0 %353
  %355 = vrot.lane.b32.xlu0 %v25, 108
  %v356 = vpop.permute.xlu0 %355
  %vm357 = vcmask 883712
  %v358 = vsel %vm357, %v354, %v356
  %v360 = vsel %vm37, %v352, 0
  %v363 = vsel %vm41, %v358, 0
  %365 = vmatprep.subr.bf16.mxu0 0
  %366 = vmatpush1.bf16.msra.mxu0 %v363
  %367 = vmatprep.subr.bf16.mxu0 0
  %368 = vmatpush1.bf16.msra.mxu0 0
  %369 = vmatprep.subr.bf16.mxu0 0
  %370 = vmatpush1.bf16.msra.mxu0 0
  %371 = vmatprep.subr.bf16.mxu0 0
  %372 = vmatpush1.bf16.msra.mxu0 0
  %373 = vmatprep.subr.bf16.mxu0 0
  %374 = vmatpush1.bf16.msra.mxu0 0
  %375 = vmatprep.subr.bf16.mxu0 0
  %376 = vmatpush1.bf16.msra.mxu0 0
  %377 = vmatprep.subr.bf16.mxu0 0
  %378 = vmatpush1.bf16.msra.mxu0 0
  %379 = vmatprep.subr.bf16.mxu0 0
  %380 = vmatpush1.bf16.msra.mxu0 0
  %381 = vmatprep.subr.bf16.mxu0 0
  %382 = vmatpush1.bf16.msra.mxu0 0
  %383 = vmatprep.subr.bf16.mxu0 0
  %384 = vmatpush1.bf16.msra.mxu0 0
  %385 = vmatprep.subr.bf16.mxu0 0
  %386 = vmatpush1.bf16.msra.mxu0 0
  %387 = vmatprep.subr.bf16.mxu0 0
  %388 = vmatpush1.bf16.msra.mxu0 0
  %389 = vmatprep.subr.bf16.mxu0 0
  %390 = vmatpush1.bf16.msra.mxu0 0
  %391 = vmatprep.subr.bf16.mxu0 0
  %392 = vmatpush1.bf16.msra.mxu0 0
  %393 = vmatprep.subr.bf16.mxu0 0
  %394 = vmatpush1.bf16.msra.mxu0 0
  %395 = vmatprep.subr.bf16.mxu0 0
  %396 = vmatpush1.bf16.msra.mxu0 0
  %397 = vmatprep.mubr.bf16.mxu0 0
  %398 = vmatmul.mubr.bf16.gmra.mrb[0].mxu0 %v360
  %v399 = vpop.f32.mrb[0].mxu0
  %v400 = vadd.f32 0.0, %v399
  %v401 = vpop.f32.mrb[0].mxu0
  %v402 = vpop.f32.mrb[0].mxu0
  %v403 = vpop.f32.mrb[0].mxu0
  %404 = vdwg.mxu0
  %v405 = vadd.f32 %v350, %v400
  %s406 = scalar_lea.vmem %s1, 28
  %v407 = vld [vmem:[%s406] sm:$0xf]
  %408 = vrot.lane.b32.xlu0 %v24, 107
  %v409 = vpop.permute.xlu0 %408
  %410 = vrot.lane.b32.xlu0 %v25, 107
  %v411 = vpop.permute.xlu0 %410
  %vm412 = vcmask 875520
  %v413 = vsel %vm412, %v409, %v411
  %v415 = vsel %vm37, %v407, 0
  %v418 = vsel %vm41, %v413, 0
  %420 = vmatprep.subr.bf16.mxu0 0
  %421 = vmatpush1.bf16.msra.mxu0 %v418
  %422 = vmatprep.subr.bf16.mxu0 0
  %423 = vmatpush1.bf16.msra.mxu0 0
  %424 = vmatprep.subr.bf16.mxu0 0
  %425 = vmatpush1.bf16.msra.mxu0 0
  %426 = vmatprep.subr.bf16.mxu0 0
  %427 = vmatpush1.bf16.msra.mxu0 0
  %428 = vmatprep.subr.bf16.mxu0 0
  %429 = vmatpush1.bf16.msra.mxu0 0
  %430 = vmatprep.subr.bf16.mxu0 0
  %431 = vmatpush1.bf16.msra.mxu0 0
  %432 = vmatprep.subr.bf16.mxu0 0
  %433 = vmatpush1.bf16.msra.mxu0 0
  %434 = vmatprep.subr.bf16.mxu0 0
  %435 = vmatpush1.bf16.msra.mxu0 0
  %436 = vmatprep.subr.bf16.mxu0 0
  %437 = vmatpush1.bf16.msra.mxu0 0
  %438 = vmatprep.subr.bf16.mxu0 0
  %439 = vmatpush1.bf16.msra.mxu0 0
  %440 = vmatprep.subr.bf16.mxu0 0
  %441 = vmatpush1.bf16.msra.mxu0 0
  %442 = vmatprep.subr.bf16.mxu0 0
  %443 = vmatpush1.bf16.msra.mxu0 0
  %444 = vmatprep.subr.bf16.mxu0 0
  %445 = vmatpush1.bf16.msra.mxu0 0
  %446 = vmatprep.subr.bf16.mxu0 0
  %447 = vmatpush1.bf16.msra.mxu0 0
  %448 = vmatprep.subr.bf16.mxu0 0
  %449 = vmatpush1.bf16.msra.mxu0 0
  %450 = vmatprep.subr.bf16.mxu0 0
  %451 = vmatpush1.bf16.msra.mxu0 0
  %452 = vmatprep.mubr.bf16.mxu0 0
  %453 = vmatmul.mubr.bf16.gmra.mrb[0].mxu0 %v415
  %v454 = vpop.f32.mrb[0].mxu0
  %v455 = vadd.f32 0.0, %v454
  %v456 = vpop.f32.mrb[0].mxu0
  %v457 = vpop.f32.mrb[0].mxu0
  %v458 = vpop.f32.mrb[0].mxu0
  %459 = vdwg.mxu0
  %v460 = vadd.f32 %v405, %v455
  %s461 = scalar_lea.vmem %s1, 32
  %v462 = vld [vmem:[%s461] sm:$0xf]
  %463 = vrot.lane.b32.xlu0 %v24, 106
  %v464 = vpop.permute.xlu0 %463
  %465 = vrot.lane.b32.xlu0 %v25, 106
  %v466 = vpop.permute.xlu0 %465
  %vm467 = vcmask 867328
  %v468 = vsel %vm467, %v464, %v466
  %v470 = vsel %vm37, %v462, 0
  %v473 = vsel %vm41, %v468, 0
  %475 = vmatprep.subr.bf16.mxu0 0
  %476 = vmatpush1.bf16.msra.mxu0 %v473
  %477 = vmatprep.subr.bf16.mxu0 0
  %478 = vmatpush1.bf16.msra.mxu0 0
  %479 = vmatprep.subr.bf16.mxu0 0
  %480 = vmatpush1.bf16.msra.mxu0 0
  %481 = vmatprep.subr.bf16.mxu0 0
  %482 = vmatpush1.bf16.msra.mxu0 0
  %483 = vmatprep.subr.bf16.mxu0 0
  %484 = vmatpush1.bf16.msra.mxu0 0
  %485 = vmatprep.subr.bf16.mxu0 0
  %486 = vmatpush1.bf16.msra.mxu0 0
  %487 = vmatprep.subr.bf16.mxu0 0
  %488 = vmatpush1.bf16.msra.mxu0 0
  %489 = vmatprep.subr.bf16.mxu0 0
  %490 = vmatpush1.bf16.msra.mxu0 0
  %491 = vmatprep.subr.bf16.mxu0 0
  %492 = vmatpush1.bf16.msra.mxu0 0
  %493 = vmatprep.subr.bf16.mxu0 0
  %494 = vmatpush1.bf16.msra.mxu0 0
  %495 = vmatprep.subr.bf16.mxu0 0
  %496 = vmatpush1.bf16.msra.mxu0 0
  %497 = vmatprep.subr.bf16.mxu0 0
  %498 = vmatpush1.bf16.msra.mxu0 0
  %499 = vmatprep.subr.bf16.mxu0 0
  %500 = vmatpush1.bf16.msra.mxu0 0
  %501 = vmatprep.subr.bf16.mxu0 0
  %502 = vmatpush1.bf16.msra.mxu0 0
  %503 = vmatprep.subr.bf16.mxu0 0
  %504 = vmatpush1.bf16.msra.mxu0 0
  %505 = vmatprep.subr.bf16.mxu0 0
  %506 = vmatpush1.bf16.msra.mxu0 0
  %507 = vmatprep.mubr.bf16.mxu0 0
  %508 = vmatmul.mubr.bf16.gmra.mrb[0].mxu0 %v470
  %v509 = vpop.f32.mrb[0].mxu0
  %v510 = vadd.f32 0.0, %v509
  %v511 = vpop.f32.mrb[0].mxu0
  %v512 = vpop.f32.mrb[0].mxu0
  %v513 = vpop.f32.mrb[0].mxu0
  %514 = vdwg.mxu0
  %v515 = vadd.f32 %v460, %v510
  %516 = vst [vmem:[%s2] sm:$0xff] %v515
  // Predicated region
  $region10: #{forward.23} parent=0 // pred_check
    _
  $region11: #{forward.23} parent=0 // pred_check_branch
    %518 = sbr.rel (0) target = $region13
  $region12: #{forward.23} parent=0 // pred_region
    _
  $region13: #{forward.23} parent=0 // pred_fallthru
    _
  // Predicated region
  $region14: #{forward.23} parent=0 // pred_check
    _
  $region15: #{forward.23} parent=0 // pred_check_branch
    %520 = sbr.rel (0) target = $region17
  $region16: #{forward.23} parent=0 // pred_region
    _
  $region17: #{forward.23} parent=0 // pred_fallthru
    _

// kernel: forward.24
$region0: #{forward.24}
  #allocation0 [shape = 'u32[]', space=smem, size = 0x4, offset = 0x4, fixed_abs, tag = 'smem constant byte address 0x4 - core index']
  #allocation1 [shape = 'u32[144,128]{1,0:T(1,128)}', space=vmem, size = 0x12000, scoped, tag = 'internal scratch']
  %s0 = inlined_call_operand.vmem [shape: f32[8,128], index: 0, kind: input, shape index: {}]
  %s1 = inlined_call_operand.vmem [shape: bf16[8,8], index: 1, kind: input, shape index: {}]
  %s2 = inlined_call_operand.vmem [shape: f32[1,128], index: 2, kind: input, shape index: {}]
  %s3 = inlined_call_operand.vmem [shape: f32[1,128], index: 3, kind: input, shape index: {}]
  %s4 = inlined_call_operand.vmem [shape: f32[8,128], index: 4, kind: output, shape index: {}]
  %s5 = sld [smem:[#allocation0]]
  $region26: #{forward.24} parent=0
    _
  %s7 = ssub.s32 1, %s5
  %s8 = scalar_select 0, %s7, %s5
  // Predicated region
  $region2: #{forward.24} parent=0 // pred_check
    _
  $region3: #{forward.24} parent=0 // pred_check_branch
    %10 = sbr.rel (0) target = $region5
  $region4: #{forward.24} parent=0 // pred_region
    _
  $region5: #{forward.24} parent=0 // pred_fallthru
    _
  // Predicated region
  $region6: #{forward.24} parent=0 // pred_check
    _
  $region7: #{forward.24} parent=0 // pred_check_branch
    %12 = sbr.rel (0) target = $region9
  $region8: #{forward.24} parent=0 // pred_region
    _
  $region9: #{forward.24} parent=0 // pred_fallthru
    _
  // Predicated region
  $region10: #{forward.24} parent=0 // pred_check
    _
  $region11: #{forward.24} parent=0 // pred_check_branch
    %14 = sbr.rel (0) target = $region13
  $region12: #{forward.24} parent=0 // pred_region
    _
  $region13: #{forward.24} parent=0 // pred_fallthru
    _
  // Predicated region
  $region14: #{forward.24} parent=0 // pred_check
    _
  $region15: #{forward.24} parent=0 // pred_check_branch
    %16 = sbr.rel (0) target = $region17
  $region16: #{forward.24} parent=0 // pred_region
    _
  $region17: #{forward.24} parent=0 // pred_fallthru
    _
  %v18 = vld [vmem:[%s0] sm:$0xff]
  %v19 = vld [vmem:[%s2] sm:$0x1]
  %v21 = vlaneseq
  %v22 = vshrl.u32 %v21, 7
  %v23 = vsub.s32 0, %v22
  %v24 = vrot.slane %v19, %v23
  %v26 = vmul.f32 %v18, %v24
  %v27 = vld [vmem:[%s3] sm:$0x1]
  %v29 = vlaneseq
  %v30 = vshrl.u32 %v29, 7
  %v31 = vsub.s32 0, %v30
  %v32 = vrot.slane %v27, %v31
  %v34 = vadd.f32 %v26, %v32
  %v35 = vmul.f32 %v34, 0.5
  %v36 = vmul.f32 %v34, 0.70710677
  %v37 = verf.f32.pop %v36
  %v38 = vadd.f32 %v37, 1.0
  %v39 = vmul.f32 %v35, %v38
  %v40 = vld [vmem:[%s1] sm:$0xf]
  %v41 = vpack.c.bf16 %v39, %v39
  %vm42 = vcmask 64512
  %v44 = vsel %vm42, %v40, 0
  %vm46 = vcmask 1043456
  %v48 = vsel %vm46, %v41, 0
  %50 = vmatprep.subr.bf16.mxu0 0
  %51 = vmatpush1.bf16.msra.mxu0 %v48
  %52 = vmatprep.subr.bf16.mxu0 0
  %53 = vmatpush1.bf16.msra.mxu0 0
  %54 = vmatprep.subr.bf16.mxu0 0
  %55 = vmatpush1.bf16.msra.mxu0 0
  %56 = vmatprep.subr.bf16.mxu0 0
  %57 = vmatpush1.bf16.msra.mxu0 0
  %58 = vmatprep.subr.bf16.mxu0 0
  %59 = vmatpush1.bf16.msra.mxu0 0
  %60 = vmatprep.subr.bf16.mxu0 0
  %61 = vmatpush1.bf16.msra.mxu0 0
  %62 = vmatprep.subr.bf16.mxu0 0
  %63 = vmatpush1.bf16.msra.mxu0 0
  %64 = vmatprep.subr.bf16.mxu0 0
  %65 = vmatpush1.bf16.msra.mxu0 0
  %66 = vmatprep.subr.bf16.mxu0 0
  %67 = vmatpush1.bf16.msra.mxu0 0
  %68 = vmatprep.subr.bf16.mxu0 0
  %69 = vmatpush1.bf16.msra.mxu0 0
  %70 = vmatprep.subr.bf16.mxu0 0
  %71 = vmatpush1.bf16.msra.mxu0 0
  %72 = vmatprep.subr.bf16.mxu0 0
  %73 = vmatpush1.bf16.msra.mxu0 0
  %74 = vmatprep.subr.bf16.mxu0 0
  %75 = vmatpush1.bf16.msra.mxu0 0
  %76 = vmatprep.subr.bf16.mxu0 0
  %77 = vmatpush1.bf16.msra.mxu0 0
  %78 = vmatprep.subr.bf16.mxu0 0
  %79 = vmatpush1.bf16.msra.mxu0 0
  %80 = vmatprep.subr.bf16.mxu0 0
  %81 = vmatpush1.bf16.msra.mxu0 0
  %82 = vmatprep.mubr.bf16.mxu0 0
  %83 = vmatmul.mubr.bf16.gmra.mrb[0].mxu0 %v44
  %v84 = vpop.f32.mrb[0].mxu0
  %v85 = vadd.f32 0.0, %v84
  %v86 = vpop.f32.mrb[0].mxu0
  %v87 = vpop.f32.mrb[0].mxu0
  %v88 = vpop.f32.mrb[0].mxu0
  %89 = vdwg.mxu0
  %90 = vst [vmem:[%s4] sm:$0xff] %v85
  // Predicated region
  $region18: #{forward.24} parent=0 // pred_check
    _
  $region19: #{forward.24} parent=0 // pred_check_branch
    %92 = sbr.rel (0) target = $region21
  $region20: #{forward.24} parent=0 // pred_region
    _
  $region21: #{forward.24} parent=0 // pred_fallthru
    _
  // Predicated region
  $region22: #{forward.24} parent=0 // pred_check
    _
  $region23: #{forward.24} parent=0 // pred_check_branch
    %94 = sbr.rel (0) target = $region25
  $region24: #{forward.24} parent=0 // pred_region
    _
  $region25: #{forward.24} parent=0 // pred_fallthru
    _

// kernel: forward.25
$region0: #{forward.25}
  #allocation0 [shape = 'u32[]', space=smem, size = 0x4, offset = 0x4, fixed_abs, tag = 'smem constant byte address 0x4 - core index']
  #allocation1 [shape = 'u32[144,128]{1,0:T(1,128)}', space=vmem, size = 0x12000, scoped, tag = 'internal scratch']
  %s0 = inlined_call_operand.vmem [shape: f32[8,128], index: 0, kind: input, shape index: {}]
  %s1 = inlined_call_operand.vmem [shape: bf16[8,8], index: 1, kind: input, shape index: {}]
  %s2 = inlined_call_operand.vmem [shape: f32[1,128], index: 2, kind: input, shape index: {}]
  %s3 = inlined_call_operand.vmem [shape: f32[1,128], index: 3, kind: input, shape index: {}]
  %s4 = inlined_call_operand.vmem [shape: f32[8,128], index: 4, kind: input, shape index: {}]
  %s5 = inlined_call_operand.vmem [shape: f32[8,128], index: 5, kind: output, shape index: {}]
  %s6 = sld [smem:[#allocation0]]
  $region30: #{forward.25} parent=0
    _
  %s8 = ssub.s32 1, %s6
  %s9 = scalar_select 0, %s8, %s6
  // Predicated region
  $region2: #{forward.25} parent=0 // pred_check
    _
  $region3: #{forward.25} parent=0 // pred_check_branch
    %11 = sbr.rel (0) target = $region5
  $region4: #{forward.25} parent=0 // pred_region
    _
  $region5: #{forward.25} parent=0 // pred_fallthru
    _
  // Predicated region
  $region6: #{forward.25} parent=0 // pred_check
    _
  $region7: #{forward.25} parent=0 // pred_check_branch
    %13 = sbr.rel (0) target = $region9
  $region8: #{forward.25} parent=0 // pred_region
    _
  $region9: #{forward.25} parent=0 // pred_fallthru
    _
  // Predicated region
  $region10: #{forward.25} parent=0 // pred_check
    _
  $region11: #{forward.25} parent=0 // pred_check_branch
    %15 = sbr.rel (0) target = $region13
  $region12: #{forward.25} parent=0 // pred_region
    _
  $region13: #{forward.25} parent=0 // pred_fallthru
    _
  // Predicated region
  $region14: #{forward.25} parent=0 // pred_check
    _
  $region15: #{forward.25} parent=0 // pred_check_branch
    %17 = sbr.rel (0) target = $region17
  $region16: #{forward.25} parent=0 // pred_region
    _
  $region17: #{forward.25} parent=0 // pred_fallthru
    _
  // Predicated region
  $region18: #{forward.25} parent=0 // pred_check
    _
  $region19: #{forward.25} parent=0 // pred_check_branch
    %19 = sbr.rel (0) target = $region21
  $region20: #{forward.25} parent=0 // pred_region
    _
  $region21: #{forward.25} parent=0 // pred_fallthru
    _
  %v21 = vld [vmem:[%s0] sm:$0xff]
  %v22 = vld [vmem:[%s2] sm:$0x1]
  %v24 = vlaneseq
  %v25 = vshrl.u32 %v24, 7
  %v26 = vsub.s32 0, %v25
  %v27 = vrot.slane %v22, %v26
  %v29 = vmul.f32 %v21, %v27
  %v30 = vld [vmem:[%s3] sm:$0x1]
  %v32 = vlaneseq
  %v33 = vshrl.u32 %v32, 7
  %v34 = vsub.s32 0, %v33
  %v35 = vrot.slane %v30, %v34
  %v37 = vadd.f32 %v29, %v35
  %v38 = vmul.f32 %v37, 0.5
  %v39 = vmul.f32 %v37, 0.70710677
  %v40 = verf.f32.pop %v39
  %v41 = vadd.f32 %v40, 1.0
  %v42 = vmul.f32 %v38, %v41
  %v43 = vld [vmem:[%s1] sm:$0xf]
  %v44 = vpack.c.bf16 %v42, %v42
  %v45 = vld [vmem:[%s4] sm:$0xff]
  %vm46 = vcmask 64512
  %v48 = vsel %vm46, %v43, 0
  %vm50 = vcmask 1043456
  %v52 = vsel %vm50, %v44, 0
  %54 = vmatprep.subr.bf16.mxu0 0
  %55 = vmatpush1.bf16.msra.mxu0 %v52
  %56 = vmatprep.subr.bf16.mxu0 0
  %57 = vmatpush1.bf16.msra.mxu0 0
  %58 = vmatprep.subr.bf16.mxu0 0
  %59 = vmatpush1.bf16.msra.mxu0 0
  %60 = vmatprep.subr.bf16.mxu0 0
  %61 = vmatpush1.bf16.msra.mxu0 0
  %62 = vmatprep.subr.bf16.mxu0 0
  %63 = vmatpush1.bf16.msra.mxu0 0
  %64 = vmatprep.subr.bf16.mxu0 0
  %65 = vmatpush1.bf16.msra.mxu0 0
  %66 = vmatprep.subr.bf16.mxu0 0
  %67 = vmatpush1.bf16.msra.mxu0 0
  %68 = vmatprep.subr.bf16.mxu0 0
  %69 = vmatpush1.bf16.msra.mxu0 0
  %70 = vmatprep.subr.bf16.mxu0 0
  %71 = vmatpush1.bf16.msra.mxu0 0
  %72 = vmatprep.subr.bf16.mxu0 0
  %73 = vmatpush1.bf16.msra.mxu0 0
  %74 = vmatprep.subr.bf16.mxu0 0
  %75 = vmatpush1.bf16.msra.mxu0 0
  %76 = vmatprep.subr.bf16.mxu0 0
  %77 = vmatpush1.bf16.msra.mxu0 0
  %78 = vmatprep.subr.bf16.mxu0 0
  %79 = vmatpush1.bf16.msra.mxu0 0
  %80 = vmatprep.subr.bf16.mxu0 0
  %81 = vmatpush1.bf16.msra.mxu0 0
  %82 = vmatprep.subr.bf16.mxu0 0
  %83 = vmatpush1.bf16.msra.mxu0 0
  %84 = vmatprep.subr.bf16.mxu0 0
  %85 = vmatpush1.bf16.msra.mxu0 0
  %86 = vmatprep.mubr.bf16.mxu0 0
  %87 = vmatmul.mubr.bf16.gmra.mrb[0].mxu0 %v48
  %v88 = vpop.f32.mrb[0].mxu0
  %v89 = vadd.f32 %v45, %v88
  %v90 = vpop.f32.mrb[0].mxu0
  %v91 = vpop.f32.mrb[0].mxu0
  %v92 = vpop.f32.mrb[0].mxu0
  %93 = vdwg.mxu0
  %94 = vst [vmem:[%s5] sm:$0xff] %v89
  // Predicated region
  $region22: #{forward.25} parent=0 // pred_check
    _
  $region23: #{forward.25} parent=0 // pred_check_branch
    %96 = sbr.rel (0) target = $region25
  $region24: #{forward.25} parent=0 // pred_region
    _
  $region25: #{forward.25} parent=0 // pred_fallthru
    _
  // Predicated region
  $region26: #{forward.25} parent=0 // pred_check
    _
  $region27: #{forward.25} parent=0 // pred_check_branch
    %98 = sbr.rel (0) target = $region29
  $region28: #{forward.25} parent=0 // pred_region
    _
  $region29: #{forward.25} parent=0 // pred_fallthru
    _

// kernel: forward.27
$region0: #{forward.27}
  #allocation0 [shape = 'u32[]', space=smem, size = 0x4, offset = 0x4, fixed_abs, tag = 'smem constant byte address 0x4 - core index']
  #allocation1 [shape = 'u32[144,128]{1,0:T(1,128)}', space=vmem, size = 0x12000, scoped, tag = 'internal scratch']
  %s0 = inlined_call_operand.vmem [shape: bf16[16,128], index: 0, kind: input, shape index: {}]
  %s1 = inlined_call_operand.vmem [shape: bf16[8,16], index: 1, kind: input, shape index: {}]
  %s2 = inlined_call_operand.vmem [shape: f32[8,128], index: 2, kind: input, shape index: {}]
  %s3 = inlined_call_operand.vmem [shape: f32[8,128], index: 3, kind: output, shape index: {}]
  %s4 = sld [smem:[#allocation0]]
  $region22: #{forward.27} parent=0
    _
  %s6 = ssub.s32 1, %s4
  %s7 = scalar_select 0, %s6, %s4
  // Predicated region
  $region2: #{forward.27} parent=0 // pred_check
    _
  $region3: #{forward.27} parent=0 // pred_check_branch
    %9 = sbr.rel (0) target = $region5
  $region4: #{forward.27} parent=0 // pred_region
    _
  $region5: #{forward.27} parent=0 // pred_fallthru
    _
  // Predicated region
  $region6: #{forward.27} parent=0 // pred_check
    _
  $region7: #{forward.27} parent=0 // pred_check_branch
    %11 = sbr.rel (0) target = $region9
  $region8: #{forward.27} parent=0 // pred_region
    _
  $region9: #{forward.27} parent=0 // pred_fallthru
    _
  // Predicated region
  $region10: #{forward.27} parent=0 // pred_check
    _
  $region11: #{forward.27} parent=0 // pred_check_branch
    %13 = sbr.rel (0) target = $region13
  $region12: #{forward.27} parent=0 // pred_region
    _
  $region13: #{forward.27} parent=0 // pred_fallthru
    _
  %v15 = vld [vmem:[%s0] sm:$0xf]
  %v16 = vld [vmem:[%s0 + $0x4] sm:$0xf]
  %v17 = vld [vmem:[%s1] sm:$0xf]
  %v18 = vld [vmem:[%s2] sm:$0xff]
  %v21 = vunpack.c.l.b16 %v15
  %v22 = vunpack.c.l.b16 %v16
  %v23 = vpack.c.b16 %v22, %v21
  %vm25 = vcmask 130048
  %v27 = vsel %vm25, %v17, 0
  %29 = vmatprep.subr.bf16.mxu0 0
  %30 = vmatpush1.bf16.msra.mxu0 %v23
  %31 = vmatprep.subr.bf16.mxu0 0
  %32 = vmatpush1.bf16.msra.mxu0 0
  %33 = vmatprep.subr.bf16.mxu0 0
  %34 = vmatpush1.bf16.msra.mxu0 0
  %35 = vmatprep.subr.bf16.mxu0 0
  %36 = vmatpush1.bf16.msra.mxu0 0
  %37 = vmatprep.subr.bf16.mxu0 0
  %38 = vmatpush1.bf16.msra.mxu0 0
  %39 = vmatprep.subr.bf16.mxu0 0
  %40 = vmatpush1.bf16.msra.mxu0 0
  %41 = vmatprep.subr.bf16.mxu0 0
  %42 = vmatpush1.bf16.msra.mxu0 0
  %43 = vmatprep.subr.bf16.mxu0 0
  %44 = vmatpush1.bf16.msra.mxu0 0
  %45 = vmatprep.subr.bf16.mxu0 0
  %46 = vmatpush1.bf16.msra.mxu0 0
  %47 = vmatprep.subr.bf16.mxu0 0
  %48 = vmatpush1.bf16.msra.mxu0 0
  %49 = vmatprep.subr.bf16.mxu0 0
  %50 = vmatpush1.bf16.msra.mxu0 0
  %51 = vmatprep.subr.bf16.mxu0 0
  %52 = vmatpush1.bf16.msra.mxu0 0
  %53 = vmatprep.subr.bf16.mxu0 0
  %54 = vmatpush1.bf16.msra.mxu0 0
  %55 = vmatprep.subr.bf16.mxu0 0
  %56 = vmatpush1.bf16.msra.mxu0 0
  %57 = vmatprep.subr.bf16.mxu0 0
  %58 = vmatpush1.bf16.msra.mxu0 0
  %59 = vmatprep.subr.bf16.mxu0 0
  %60 = vmatpush1.bf16.msra.mxu0 0
  %61 = vmatprep.mubr.bf16.mxu0 0
  %62 = vmatmul.mubr.bf16.gmra.mrb[0].mxu0 %v27
  %v63 = vpop.f32.mrb[0].mxu0
  %v64 = vadd.f32 %v18, %v63
  %v65 = vpop.f32.mrb[0].mxu0
  %v66 = vpop.f32.mrb[0].mxu0
  %v67 = vpop.f32.mrb[0].mxu0
  %68 = vdwg.mxu0
  %69 = vst [vmem:[%s3] sm:$0xff] %v64
  // Predicated region
  $region14: #{forward.27} parent=0 // pred_check
    _
  $region15: #{forward.27} parent=0 // pred_check_branch
    %71 = sbr.rel (0) target = $region17
  $region16: #{forward.27} parent=0 // pred_region
    _
  $region17: #{forward.27} parent=0 // pred_fallthru
    _
  // Predicated region
  $region18: #{forward.27} parent=0 // pred_check
    _
  $region19: #{forward.27} parent=0 // pred_check_branch
    %73 = sbr.rel (0) target = $region21
  $region20: #{forward.27} parent=0 // pred_region
    _
  $region21: #{forward.27} parent=0 // pred_fallthru
    _

// kernel: forward.28
$region0: #{forward.28}
  #allocation0 [shape = 'u32[]', space=smem, size = 0x4, offset = 0x4, fixed_abs, tag = 'smem constant byte address 0x4 - core index']
  #allocation1 [shape = 'u32[144,128]{1,0:T(1,128)}', space=vmem, size = 0x12000, scoped, tag = 'internal scratch']
  %s0 = inlined_call_operand.vmem [shape: f32[32,128], index: 0, kind: input, shape index: {}]
  %s1 = inlined_call_operand.vmem [shape: bf16[16,32], index: 1, kind: input, shape index: {}]
  %s2 = inlined_call_operand.vmem [shape: f32[16,128], index: 2, kind: output, shape index: {}]
  %s3 = sld [smem:[#allocation0]]
  $region18: #{forward.28} parent=0
    _
  %s5 = ssub.s32 1, %s3
  %s6 = scalar_select 0, %s5, %s3
  // Predicated region
  $region2: #{forward.28} parent=0 // pred_check
    _
  $region3: #{forward.28} parent=0 // pred_check_branch
    %8 = sbr.rel (0) target = $region5
  $region4: #{forward.28} parent=0 // pred_region
    _
  $region5: #{forward.28} parent=0 // pred_fallthru
    _
  // Predicated region
  $region6: #{forward.28} parent=0 // pred_check
    _
  $region7: #{forward.28} parent=0 // pred_check_branch
    %10 = sbr.rel (0) target = $region9
  $region8: #{forward.28} parent=0 // pred_region
    _
  $region9: #{forward.28} parent=0 // pred_fallthru
    _
  %v12 = vld [vmem:[%s0] sm:$0xff]
  %v13 = vld [vmem:[%s0 + $0x8] sm:$0xff]
  %v14 = vld [vmem:[%s0 + $0x10] sm:$0xff]
  %v15 = vld [vmem:[%s0 + $0x18] sm:$0xff]
  %v16 = vmul.f32 %v12, 0.5
  %v17 = vmul.f32 %v13, 0.5
  %v18 = vmul.f32 %v14, 0.5
  %v19 = vmul.f32 %v15, 0.5
  %v20 = vmul.f32 %v12, 0.70710677
  %v21 = vmul.f32 %v13, 0.70710677
  %v22 = vmul.f32 %v14, 0.70710677
  %v23 = vmul.f32 %v15, 0.70710677
  %v24 = verf.f32.pop %v20
  %v25 = verf.f32.pop %v21
  %v26 = verf.f32.pop %v22
  %v27 = verf.f32.pop %v23
  %v28 = vadd.f32 %v24, 1.0
  %v29 = vadd.f32 %v25, 1.0
  %v30 = vadd.f32 %v26, 1.0
  %v31 = vadd.f32 %v27, 1.0
  %v32 = vmul.f32 %v16, %v28
  %v33 = vmul.f32 %v17, %v29
  %v34 = vmul.f32 %v18, %v30
  %v35 = vmul.f32 %v19, %v31
  %v36 = vld [vmem:[%s1] sm:$0xf]
  %v37 = vld [vmem:[%s1 + $0x4] sm:$0xf]
  %v38 = vpack.c.bf16 %v33, %v32
  %v39 = vpack.c.bf16 %v35, %v34
  %v42 = vunpack.c.l.b16 %v36
  %v43 = vunpack.c.l.b16 %v37
  %v44 = vpack.c.b16 %v43, %v42
  %vm45 = vcmask 261120
  %v47 = vsel %vm45, %v44, 0
  %49 = vmatprep.subr.bf16.mxu0 0
  %50 = vmatpush1.bf16.msra.mxu0 %v38
  %51 = vmatprep.subr.bf16.mxu0 0
  %52 = vmatpush1.bf16.msra.mxu0 %v39
  %53 = vmatprep.subr.bf16.mxu0 0
  %54 = vmatpush1.bf16.msra.mxu0 0
  %55 = vmatprep.subr.bf16.mxu0 0
  %56 = vmatpush1.bf16.msra.mxu0 0
  %57 = vmatprep.subr.bf16.mxu0 0
  %58 = vmatpush1.bf16.msra.mxu0 0
  %59 = vmatprep.subr.bf16.mxu0 0
  %60 = vmatpush1.bf16.msra.mxu0 0
  %61 = vmatprep.subr.bf16.mxu0 0
  %62 = vmatpush1.bf16.msra.mxu0 0
  %63 = vmatprep.subr.bf16.mxu0 0
  %64 = vmatpush1.bf16.msra.mxu0 0
  %65 = vmatprep.subr.bf16.mxu0 0
  %66 = vmatpush1.bf16.msra.mxu0 0
  %67 = vmatprep.subr.bf16.mxu0 0
  %68 = vmatpush1.bf16.msra.mxu0 0
  %69 = vmatprep.subr.bf16.mxu0 0
  %70 = vmatpush1.bf16.msra.mxu0 0
  %71 = vmatprep.subr.bf16.mxu0 0
  %72 = vmatpush1.bf16.msra.mxu0 0
  %73 = vmatprep.subr.bf16.mxu0 0
  %74 = vmatpush1.bf16.msra.mxu0 0
  %75 = vmatprep.subr.bf16.mxu0 0
  %76 = vmatpush1.bf16.msra.mxu0 0
  %77 = vmatprep.subr.bf16.mxu0 0
  %78 = vmatpush1.bf16.msra.mxu0 0
  %79 = vmatprep.subr.bf16.mxu0 0
  %80 = vmatpush1.bf16.msra.mxu0 0
  %81 = vmatprep.mubr.bf16.mxu0 0
  %82 = vmatmul.mubr.bf16.gmra.mrb[0].mxu0 %v47
  %v83 = vpop.f32.mrb[0].mxu0
  %v84 = vadd.f32 0.0, %v83
  %v85 = vpop.f32.mrb[0].mxu0
  %v86 = vpop.f32.mrb[0].mxu0
  %v87 = vadd.f32 0.0, %v86
  %v88 = vpop.f32.mrb[0].mxu0
  %89 = vdwg.mxu0
  %90 = vst [vmem:[%s2] sm:$0xff] %v84
  %91 = vst [vmem:[%s2 + $0x8] sm:$0xff] %v87
  // Predicated region
  $region10: #{forward.28} parent=0 // pred_check
    _
  $region11: #{forward.28} parent=0 // pred_check_branch
    %93 = sbr.rel (0) target = $region13
  $region12: #{forward.28} parent=0 // pred_region
    _
  $region13: #{forward.28} parent=0 // pred_fallthru
    _
  // Predicated region
  $region14: #{forward.28} parent=0 // pred_check
    _
  $region15: #{forward.28} parent=0 // pred_check_branch
    %95 = sbr.rel (0) target = $region17
  $region16: #{forward.28} parent=0 // pred_region
    _
  $region17: #{forward.28} parent=0 // pred_fallthru
    _

// kernel: forward.29
$region0: #{forward.29}
  #allocation0 [shape = 'u32[]', space=smem, size = 0x4, offset = 0x4, fixed_abs, tag = 'smem constant byte address 0x4 - core index']
  #allocation1 [shape = 'u32[144,128]{1,0:T(1,128)}', space=vmem, size = 0x12000, scoped, tag = 'internal scratch']
  %s0 = inlined_call_operand.vmem [shape: f32[16,256], index: 0, kind: input, shape index: {}]
  %s1 = inlined_call_operand.vmem [shape: bf16[9,16,16], index: 1, kind: input, shape index: {}]
  %s2 = inlined_call_operand.vmem [shape: f32[16,128], index: 2, kind: output, shape index: {}]
  %s3 = sld [smem:[#allocation0]]
  $region18: #{forward.29} parent=0
    _
  %s5 = ssub.s32 1, %s3
  %s6 = scalar_select 0, %s5, %s3
  // Predicated region
  $region2: #{forward.29} parent=0 // pred_check
    _
  $region3: #{forward.29} parent=0 // pred_check_branch
    %8 = sbr.rel (0) target = $region5
  $region4: #{forward.29} parent=0 // pred_region
    _
  $region5: #{forward.29} parent=0 // pred_fallthru
    _
  // Predicated region
  $region6: #{forward.29} parent=0 // pred_check
    _
  $region7: #{forward.29} parent=0 // pred_check_branch
    %10 = sbr.rel (0) target = $region9
  $region8: #{forward.29} parent=0 // pred_region
    _
  $region9: #{forward.29} parent=0 // pred_fallthru
    _
  %v12 = vld [vmem:[%s0] sm:$0xff]
  %v13 = vld [vmem:[%s0 + $0x8] sm:$0xff]
  %v14 = vld [vmem:[%s0 + $0x10] sm:$0xff]
  %v15 = vld [vmem:[%s0 + $0x18] sm:$0xff]
  %v16 = vmul.f32 %v12, 0.5
  %v17 = vmul.f32 %v13, 0.5
  %v18 = vmul.f32 %v14, 0.5
  %v19 = vmul.f32 %v15, 0.5
  %v20 = vmul.f32 %v12, 0.70710677
  %v21 = vmul.f32 %v13, 0.70710677
  %v22 = vmul.f32 %v14, 0.70710677
  %v23 = vmul.f32 %v15, 0.70710677
  %v24 = verf.f32.pop %v20
  %v25 = verf.f32.pop %v21
  %v26 = verf.f32.pop %v22
  %v27 = verf.f32.pop %v23
  %v28 = vadd.f32 %v24, 1.0
  %v29 = vadd.f32 %v25, 1.0
  %v30 = vadd.f32 %v26, 1.0
  %v31 = vadd.f32 %v27, 1.0
  %v32 = vmul.f32 %v16, %v28
  %v33 = vmul.f32 %v17, %v29
  %v34 = vmul.f32 %v18, %v30
  %v35 = vmul.f32 %v19, %v31
  %v36 = vpack.c.bf16 %v34, %v32
  %v37 = vpack.c.bf16 %v35, %v33
  %v38 = vld [vmem:[%s1] sm:$0xf]
  %v39 = vld [vmem:[%s1 + $0x4] sm:$0xf]
  %s40 = scalar_lea.vmem %s1, 8
  %v41 = vld [vmem:[%s40] sm:$0xf]
  %v42 = vld [vmem:[%s40 + $0x4] sm:$0xf]
  %v45 = vunpack.c.l.b16 %v41
  %v46 = vunpack.c.l.b16 %v42
  %v47 = vpack.c.b16 %v46, %v45
  %50 = vrot.lane.b32.xlu0 %v36, 127
  %v51 = vpop.permute.xlu0 %50
  %52 = vrot.lane.b32.xlu0 %v37, 127
  %v53 = vpop.permute.xlu0 %52
  %vm54 = vcmask 1039360
  %v55 = vsel %vm54, %v51, %v53
  %vm57 = vcmask 130048
  %v59 = vsel %vm57, %v47, 0
  %61 = vmatprep.subr.bf16.mxu0 0
  %62 = vmatpush1.bf16.msra.mxu0 %v55
  %63 = vmatprep.subr.bf16.mxu0 0
  %64 = vmatpush1.bf16.msra.mxu0 0
  %65 = vmatprep.subr.bf16.mxu0 0
  %66 = vmatpush1.bf16.msra.mxu0 0
  %67 = vmatprep.subr.bf16.mxu0 0
  %68 = vmatpush1.bf16.msra.mxu0 0
  %69 = vmatprep.subr.bf16.mxu0 0
  %70 = vmatpush1.bf16.msra.mxu0 0
  %71 = vmatprep.subr.bf16.mxu0 0
  %72 = vmatpush1.bf16.msra.mxu0 0
  %73 = vmatprep.subr.bf16.mxu0 0
  %74 = vmatpush1.bf16.msra.mxu0 0
  %75 = vmatprep.subr.bf16.mxu0 0
  %76 = vmatpush1.bf16.msra.mxu0 0
  %77 = vmatprep.subr.bf16.mxu0 0
  %78 = vmatpush1.bf16.msra.mxu0 0
  %79 = vmatprep.subr.bf16.mxu0 0
  %80 = vmatpush1.bf16.msra.mxu0 0
  %81 = vmatprep.subr.bf16.mxu0 0
  %82 = vmatpush1.bf16.msra.mxu0 0
  %83 = vmatprep.subr.bf16.mxu0 0
  %84 = vmatpush1.bf16.msra.mxu0 0
  %85 = vmatprep.subr.bf16.mxu0 0
  %86 = vmatpush1.bf16.msra.mxu0 0
  %87 = vmatprep.subr.bf16.mxu0 0
  %88 = vmatpush1.bf16.msra.mxu0 0
  %89 = vmatprep.subr.bf16.mxu0 0
  %90 = vmatpush1.bf16.msra.mxu0 0
  %91 = vmatprep.subr.bf16.mxu0 0
  %92 = vmatpush1.bf16.msra.mxu0 0
  %93 = vmatprep.mubr.bf16.mxu0 0
  %94 = vmatmul.mubr.bf16.gmra.mrb[0].mxu0 %v59
  %v95 = vpop.f32.mrb[0].mxu0
  %v96 = vadd.f32 0.0, %v95
  %v97 = vpop.f32.mrb[0].mxu0
  %v98 = vpop.f32.mrb[0].mxu0
  %v99 = vadd.f32 0.0, %v98
  %v100 = vpop.f32.mrb[0].mxu0
  %101 = vdwg.mxu0
  %v104 = vunpack.c.l.b16 %v38
  %v105 = vunpack.c.l.b16 %v39
  %v106 = vpack.c.b16 %v105, %v104
  %v108 = vsel %vm57, %v106, 0
  %110 = vmatprep.subr.bf16.mxu0 0
  %111 = vmatpush1.bf16.msra.mxu0 %v36
  %112 = vmatprep.subr.bf16.mxu0 0
  %113 = vmatpush1.bf16.msra.mxu0 0
  %114 = vmatprep.subr.bf16.mxu0 0
  %115 = vmatpush1.bf16.msra.mxu0 0
  %116 = vmatprep.subr.bf16.mxu0 0
  %117 = vmatpush1.bf16.msra.mxu0 0
  %118 = vmatprep.subr.bf16.mxu0 0
  %119 = vmatpush1.bf16.msra.mxu0 0
  %120 = vmatprep.subr.bf16.mxu0 0
  %121 = vmatpush1.bf16.msra.mxu0 0
  %122 = vmatprep.subr.bf16.mxu0 0
  %123 = vmatpush1.bf16.msra.mxu0 0
  %124 = vmatprep.subr.bf16.mxu0 0
  %125 = vmatpush1.bf16.msra.mxu0 0
  %126 = vmatprep.subr.bf16.mxu0 0
  %127 = vmatpush1.bf16.msra.mxu0 0
  %128 = vmatprep.subr.bf16.mxu0 0
  %129 = vmatpush1.bf16.msra.mxu0 0
  %130 = vmatprep.subr.bf16.mxu0 0
  %131 = vmatpush1.bf16.msra.mxu0 0
  %132 = vmatprep.subr.bf16.mxu0 0
  %133 = vmatpush1.bf16.msra.mxu0 0
  %134 = vmatprep.subr.bf16.mxu0 0
  %135 = vmatpush1.bf16.msra.mxu0 0
  %136 = vmatprep.subr.bf16.mxu0 0
  %137 = vmatpush1.bf16.msra.mxu0 0
  %138 = vmatprep.subr.bf16.mxu0 0
  %139 = vmatpush1.bf16.msra.mxu0 0
  %140 = vmatprep.subr.bf16.mxu0 0
  %141 = vmatpush1.bf16.msra.mxu0 0
  %142 = vmatprep.mubr.bf16.mxu0 0
  %143 = vmatmul.mubr.bf16.gmra.mrb[0].mxu0 %v108
  %v144 = vpop.f32.mrb[0].mxu0
  %v145 = vadd.f32 %v96, %v144
  %v146 = vpop.f32.mrb[0].mxu0
  %v147 = vpop.f32.mrb[0].mxu0
  %v148 = vadd.f32 %v99, %v147
  %v149 = vpop.f32.mrb[0].mxu0
  %150 = vdwg.mxu0
  %s151 = scalar_lea.vmem %s1, 16
  %v152 = vld [vmem:[%s151] sm:$0xf]
  %v153 = vld [vmem:[%s151 + $0x4] sm:$0xf]
  %v156 = vunpack.c.l.b16 %v152
  %v157 = vunpack.c.l.b16 %v153
  %v158 = vpack.c.b16 %v157, %v156
  %159 = vrot.lane.b32.xlu0 %v36, 126
  %v160 = vpop.permute.xlu0 %159
  %161 = vrot.lane.b32.xlu0 %v37, 126
  %v162 = vpop.permute.xlu0 %161
  %vm163 = vcmask 1031168
  %v164 = vsel %vm163, %v160, %v162
  %v167 = vsel %vm57, %v158, 0
  %169 = vmatprep.subr.bf16.mxu0 0
  %170 = vmatpush1.bf16.msra.mxu0 %v164
  %171 = vmatprep.subr.bf16.mxu0 0
  %172 = vmatpush1.bf16.msra.mxu0 0
  %173 = vmatprep.subr.bf16.mxu0 0
  %174 = vmatpush1.bf16.msra.mxu0 0
  %175 = vmatprep.subr.bf16.mxu0 0
  %176 = vmatpush1.bf16.msra.mxu0 0
  %177 = vmatprep.subr.bf16.mxu0 0
  %178 = vmatpush1.bf16.msra.mxu0 0
  %179 = vmatprep.subr.bf16.mxu0 0
  %180 = vmatpush1.bf16.msra.mxu0 0
  %181 = vmatprep.subr.bf16.mxu0 0
  %182 = vmatpush1.bf16.msra.mxu0 0
  %183 = vmatprep.subr.bf16.mxu0 0
  %184 = vmatpush1.bf16.msra.mxu0 0
  %185 = vmatprep.subr.bf16.mxu0 0
  %186 = vmatpush1.bf16.msra.mxu0 0
  %187 = vmatprep.subr.bf16.mxu0 0
  %188 = vmatpush1.bf16.msra.mxu0 0
  %189 = vmatprep.subr.bf16.mxu0 0
  %190 = vmatpush1.bf16.msra.mxu0 0
  %191 = vmatprep.subr.bf16.mxu0 0
  %192 = vmatpush1.bf16.msra.mxu0 0
  %193 = vmatprep.subr.bf16.mxu0 0
  %194 = vmatpush1.bf16.msra.mxu0 0
  %195 = vmatprep.subr.bf16.mxu0 0
  %196 = vmatpush1.bf16.msra.mxu0 0
  %197 = vmatprep.subr.bf16.mxu0 0
  %198 = vmatpush1.bf16.msra.mxu0 0
  %199 = vmatprep.subr.bf16.mxu0 0
  %200 = vmatpush1.bf16.msra.mxu0 0
  %201 = vmatprep.mubr.bf16.mxu0 0
  %202 = vmatmul.mubr.bf16.gmra.mrb[0].mxu0 %v167
  %v203 = vpop.f32.mrb[0].mxu0
  %v204 = vadd.f32 0.0, %v203
  %v205 = vpop.f32.mrb[0].mxu0
  %v206 = vpop.f32.mrb[0].mxu0
  %v207 = vadd.f32 0.0, %v206
  %v208 = vpop.f32.mrb[0].mxu0
  %209 = vdwg.mxu0
  %v210 = vadd.f32 %v145, %v204
  %v211 = vadd.f32 %v148, %v207
  %s212 = scalar_lea.vmem %s1, 24
  %v213 = vld [vmem:[%s212] sm:$0xf]
  %v214 = vld [vmem:[%s212 + $0x4] sm:$0xf]
  %v217 = vunpack.c.l.b16 %v213
  %v218 = vunpack.c.l.b16 %v214
  %v219 = vpack.c.b16 %v218, %v217
  %220 = vrot.lane.b32.xlu0 %v36, 122
  %v221 = vpop.permute.xlu0 %220
  %222 = vrot.lane.b32.xlu0 %v37, 122
  %v223 = vpop.permute.xlu0 %222
  %vm224 = vcmask 998400
  %v225 = vsel %vm224, %v221, %v223
  %v228 = vsel %vm57, %v219, 0
  %230 = vmatprep.subr.bf16.mxu0 0
  %231 = vmatpush1.bf16.msra.mxu0 %v225
  %232 = vmatprep.subr.bf16.mxu0 0
  %233 = vmatpush1.bf16.msra.mxu0 0
  %234 = vmatprep.subr.bf16.mxu0 0
  %235 = vmatpush1.bf16.msra.mxu0 0
  %236 = vmatprep.subr.bf16.mxu0 0
  %237 = vmatpush1.bf16.msra.mxu0 0
  %238 = vmatprep.subr.bf16.mxu0 0
  %239 = vmatpush1.bf16.msra.mxu0 0
  %240 = vmatprep.subr.bf16.mxu0 0
  %241 = vmatpush1.bf16.msra.mxu0 0
  %242 = vmatprep.subr.bf16.mxu0 0
  %243 = vmatpush1.bf16.msra.mxu0 0
  %244 = vmatprep.subr.bf16.mxu0 0
  %245 = vmatpush1.bf16.msra.mxu0 0
  %246 = vmatprep.subr.bf16.mxu0 0
  %247 = vmatpush1.bf16.msra.mxu0 0
  %248 = vmatprep.subr.bf16.mxu0 0
  %249 = vmatpush1.bf16.msra.mxu0 0
  %250 = vmatprep.subr.bf16.mxu0 0
  %251 = vmatpush1.bf16.msra.mxu0 0
  %252 = vmatprep.subr.bf16.mxu0 0
  %253 = vmatpush1.bf16.msra.mxu0 0
  %254 = vmatprep.subr.bf16.mxu0 0
  %255 = vmatpush1.bf16.msra.mxu0 0
  %256 = vmatprep.subr.bf16.mxu0 0
  %257 = vmatpush1.bf16.msra.mxu0 0
  %258 = vmatprep.subr.bf16.mxu0 0
  %259 = vmatpush1.bf16.msra.mxu0 0
  %260 = vmatprep.subr.bf16.mxu0 0
  %261 = vmatpush1.bf16.msra.mxu0 0
  %262 = vmatprep.mubr.bf16.mxu0 0
  %263 = vmatmul.mubr.bf16.gmra.mrb[0].mxu0 %v228
  %v264 = vpop.f32.mrb[0].mxu0
  %v265 = vadd.f32 0.0, %v264
  %v266 = vpop.f32.mrb[0].mxu0
  %v267 = vpop.f32.mrb[0].mxu0
  %v268 = vadd.f32 0.0, %v267
  %v269 = vpop.f32.mrb[0].mxu0
  %270 = vdwg.mxu0
  %v271 = vadd.f32 %v210, %v265
  %v272 = vadd.f32 %v211, %v268
  %s273 = scalar_lea.vmem %s1, 32
  %v274 = vld [vmem:[%s273] sm:$0xf]
  %v275 = vld [vmem:[%s273 + $0x4] sm:$0xf]
  %v278 = vunpack.c.l.b16 %v274
  %v279 = vunpack.c.l.b16 %v275
  %v280 = vpack.c.b16 %v279, %v278
  %281 = vrot.lane.b32.xlu0 %v36, 121
  %v282 = vpop.permute.xlu0 %281
  %283 = vrot.lane.b32.xlu0 %v37, 121
  %v284 = vpop.permute.xlu0 %283
  %vm285 = vcmask 990208
  %v286 = vsel %vm285, %v282, %v284
  %v289 = vsel %vm57, %v280, 0
  %291 = vmatprep.subr.bf16.mxu0 0
  %292 = vmatpush1.bf16.msra.mxu0 %v286
  %293 = vmatprep.subr.bf16.mxu0 0
  %294 = vmatpush1.bf16.msra.mxu0 0
  %295 = vmatprep.subr.bf16.mxu0 0
  %296 = vmatpush1.bf16.msra.mxu0 0
  %297 = vmatprep.subr.bf16.mxu0 0
  %298 = vmatpush1.bf16.msra.mxu0 0
  %299 = vmatprep.subr.bf16.mxu0 0
  %300 = vmatpush1.bf16.msra.mxu0 0
  %301 = vmatprep.subr.bf16.mxu0 0
  %302 = vmatpush1.bf16.msra.mxu0 0
  %303 = vmatprep.subr.bf16.mxu0 0
  %304 = vmatpush1.bf16.msra.mxu0 0
  %305 = vmatprep.subr.bf16.mxu0 0
  %306 = vmatpush1.bf16.msra.mxu0 0
  %307 = vmatprep.subr.bf16.mxu0 0
  %308 = vmatpush1.bf16.msra.mxu0 0
  %309 = vmatprep.subr.bf16.mxu0 0
  %310 = vmatpush1.bf16.msra.mxu0 0
  %311 = vmatprep.subr.bf16.mxu0 0
  %312 = vmatpush1.bf16.msra.mxu0 0
  %313 = vmatprep.subr.bf16.mxu0 0
  %314 = vmatpush1.bf16.msra.mxu0 0
  %315 = vmatprep.subr.bf16.mxu0 0
  %316 = vmatpush1.bf16.msra.mxu0 0
  %317 = vmatprep.subr.bf16.mxu0 0
  %318 = vmatpush1.bf16.msra.mxu0 0
  %319 = vmatprep.subr.bf16.mxu0 0
  %320 = vmatpush1.bf16.msra.mxu0 0
  %321 = vmatprep.subr.bf16.mxu0 0
  %322 = vmatpush1.bf16.msra.mxu0 0
  %323 = vmatprep.mubr.bf16.mxu0 0
  %324 = vmatmul.mubr.bf16.gmra.mrb[0].mxu0 %v289
  %v325 = vpop.f32.mrb[0].mxu0
  %v326 = vadd.f32 0.0, %v325
  %v327 = vpop.f32.mrb[0].mxu0
  %v328 = vpop.f32.mrb[0].mxu0
  %v329 = vadd.f32 0.0, %v328
  %v330 = vpop.f32.mrb[0].mxu0
  %331 = vdwg.mxu0
  %v332 = vadd.f32 %v271, %v326
  %v333 = vadd.f32 %v272, %v329
  %s334 = scalar_lea.vmem %s1, 40
  %v335 = vld [vmem:[%s334] sm:$0xf]
  %v336 = vld [vmem:[%s334 + $0x4] sm:$0xf]
  %v339 = vunpack.c.l.b16 %v335
  %v340 = vunpack.c.l.b16 %v336
  %v341 = vpack.c.b16 %v340, %v339
  %342 = vrot.lane.b32.xlu0 %v36, 120
  %v343 = vpop.permute.xlu0 %342
  %344 = vrot.lane.b32.xlu0 %v37, 120
  %v345 = vpop.permute.xlu0 %344
  %vm346 = vcmask 982016
  %v347 = vsel %vm346, %v343, %v345
  %v350 = vsel %vm57, %v341, 0
  %352 = vmatprep.subr.bf16.mxu0 0
  %353 = vmatpush1.bf16.msra.mxu0 %v347
  %354 = vmatprep.subr.bf16.mxu0 0
  %355 = vmatpush1.bf16.msra.mxu0 0
  %356 = vmatprep.subr.bf16.mxu0 0
  %357 = vmatpush1.bf16.msra.mxu0 0
  %358 = vmatprep.subr.bf16.mxu0 0
  %359 = vmatpush1.bf16.msra.mxu0 0
  %360 = vmatprep.subr.bf16.mxu0 0
  %361 = vmatpush1.bf16.msra.mxu0 0
  %362 = vmatprep.subr.bf16.mxu0 0
  %363 = vmatpush1.bf16.msra.mxu0 0
  %364 = vmatprep.subr.bf16.mxu0 0
  %365 = vmatpush1.bf16.msra.mxu0 0
  %366 = vmatprep.subr.bf16.mxu0 0
  %367 = vmatpush1.bf16.msra.mxu0 0
  %368 = vmatprep.subr.bf16.mxu0 0
  %369 = vmatpush1.bf16.msra.mxu0 0
  %370 = vmatprep.subr.bf16.mxu0 0
  %371 = vmatpush1.bf16.msra.mxu0 0
  %372 = vmatprep.subr.bf16.mxu0 0
  %373 = vmatpush1.bf16.msra.mxu0 0
  %374 = vmatprep.subr.bf16.mxu0 0
  %375 = vmatpush1.bf16.msra.mxu0 0
  %376 = vmatprep.subr.bf16.mxu0 0
  %377 = vmatpush1.bf16.msra.mxu0 0
  %378 = vmatprep.subr.bf16.mxu0 0
  %379 = vmatpush1.bf16.msra.mxu0 0
  %380 = vmatprep.subr.bf16.mxu0 0
  %381 = vmatpush1.bf16.msra.mxu0 0
  %382 = vmatprep.subr.bf16.mxu0 0
  %383 = vmatpush1.bf16.msra.mxu0 0
  %384 = vmatprep.mubr.bf16.mxu0 0
  %385 = vmatmul.mubr.bf16.gmra.mrb[0].mxu0 %v350
  %v386 = vpop.f32.mrb[0].mxu0
  %v387 = vadd.f32 0.0, %v386
  %v388 = vpop.f32.mrb[0].mxu0
  %v389 = vpop.f32.mrb[0].mxu0
  %v390 = vadd.f32 0.0, %v389
  %v391 = vpop.f32.mrb[0].mxu0
  %392 = vdwg.mxu0
  %v393 = vadd.f32 %v332, %v387
  %v394 = vadd.f32 %v333, %v390
  %s395 = scalar_lea.vmem %s1, 48
  %v396 = vld [vmem:[%s395] sm:$0xf]
  %v397 = vld [vmem:[%s395 + $0x4] sm:$0xf]
  %v400 = vunpack.c.l.b16 %v396
  %v401 = vunpack.c.l.b16 %v397
  %v402 = vpack.c.b16 %v401, %v400
  %403 = vrot.lane.b32.xlu0 %v36, 116
  %v404 = vpop.permute.xlu0 %403
  %405 = vrot.lane.b32.xlu0 %v37, 116
  %v406 = vpop.permute.xlu0 %405
  %vm407 = vcmask 949248
  %v408 = vsel %vm407, %v404, %v406
  %v411 = vsel %vm57, %v402, 0
  %413 = vmatprep.subr.bf16.mxu0 0
  %414 = vmatpush1.bf16.msra.mxu0 %v408
  %415 = vmatprep.subr.bf16.mxu0 0
  %416 = vmatpush1.bf16.msra.mxu0 0
  %417 = vmatprep.subr.bf16.mxu0 0
  %418 = vmatpush1.bf16.msra.mxu0 0
  %419 = vmatprep.subr.bf16.mxu0 0
  %420 = vmatpush1.bf16.msra.mxu0 0
  %421 = vmatprep.subr.bf16.mxu0 0
  %422 = vmatpush1.bf16.msra.mxu0 0
  %423 = vmatprep.subr.bf16.mxu0 0
  %424 = vmatpush1.bf16.msra.mxu0 0
  %425 = vmatprep.subr.bf16.mxu0 0
  %426 = vmatpush1.bf16.msra.mxu0 0
  %427 = vmatprep.subr.bf16.mxu0 0
  %428 = vmatpush1.bf16.msra.mxu0 0
  %429 = vmatprep.subr.bf16.mxu0 0
  %430 = vmatpush1.bf16.msra.mxu0 0
  %431 = vmatprep.subr.bf16.mxu0 0
  %432 = vmatpush1.bf16.msra.mxu0 0
  %433 = vmatprep.subr.bf16.mxu0 0
  %434 = vmatpush1.bf16.msra.mxu0 0
  %435 = vmatprep.subr.bf16.mxu0 0
  %436 = vmatpush1.bf16.msra.mxu0 0
  %437 = vmatprep.subr.bf16.mxu0 0
  %438 = vmatpush1.bf16.msra.mxu0 0
  %439 = vmatprep.subr.bf16.mxu0 0
  %440 = vmatpush1.bf16.msra.mxu0 0
  %441 = vmatprep.subr.bf16.mxu0 0
  %442 = vmatpush1.bf16.msra.mxu0 0
  %443 = vmatprep.subr.bf16.mxu0 0
  %444 = vmatpush1.bf16.msra.mxu0 0
  %445 = vmatprep.mubr.bf16.mxu0 0
  %446 = vmatmul.mubr.bf16.gmra.mrb[0].mxu0 %v411
  %v447 = vpop.f32.mrb[0].mxu0
  %v448 = vadd.f32 0.0, %v447
  %v449 = vpop.f32.mrb[0].mxu0
  %v450 = vpop.f32.mrb[0].mxu0
  %v451 = vadd.f32 0.0, %v450
  %v452 = vpop.f32.mrb[0].mxu0
  %453 = vdwg.mxu0
  %v454 = vadd.f32 %v393, %v448
  %v455 = vadd.f32 %v394, %v451
  %s456 = scalar_lea.vmem %s1, 56
  %v457 = vld [vmem:[%s456] sm:$0xf]
  %v458 = vld [vmem:[%s456 + $0x4] sm:$0xf]
  %v461 = vunpack.c.l.b16 %v457
  %v462 = vunpack.c.l.b16 %v458
  %v463 = vpack.c.b16 %v462, %v461
  %464 = vrot.lane.b32.xlu0 %v36, 115
  %v465 = vpop.permute.xlu0 %464
  %466 = vrot.lane.b32.xlu0 %v37, 115
  %v467 = vpop.permute.xlu0 %466
  %vm468 = vcmask 941056
  %v469 = vsel %vm468, %v465, %v467
  %v472 = vsel %vm57, %v463, 0
  %474 = vmatprep.subr.bf16.mxu0 0
  %475 = vmatpush1.bf16.msra.mxu0 %v469
  %476 = vmatprep.subr.bf16.mxu0 0
  %477 = vmatpush1.bf16.msra.mxu0 0
  %478 = vmatprep.subr.bf16.mxu0 0
  %479 = vmatpush1.bf16.msra.mxu0 0
  %480 = vmatprep.subr.bf16.mxu0 0
  %481 = vmatpush1.bf16.msra.mxu0 0
  %482 = vmatprep.subr.bf16.mxu0 0
  %483 = vmatpush1.bf16.msra.mxu0 0
  %484 = vmatprep.subr.bf16.mxu0 0
  %485 = vmatpush1.bf16.msra.mxu0 0
  %486 = vmatprep.subr.bf16.mxu0 0
  %487 = vmatpush1.bf16.msra.mxu0 0
  %488 = vmatprep.subr.bf16.mxu0 0
  %489 = vmatpush1.bf16.msra.mxu0 0
  %490 = vmatprep.subr.bf16.mxu0 0
  %491 = vmatpush1.bf16.msra.mxu0 0
  %492 = vmatprep.subr.bf16.mxu0 0
  %493 = vmatpush1.bf16.msra.mxu0 0
  %494 = vmatprep.subr.bf16.mxu0 0
  %495 = vmatpush1.bf16.msra.mxu0 0
  %496 = vmatprep.subr.bf16.mxu0 0
  %497 = vmatpush1.bf16.msra.mxu0 0
  %498 = vmatprep.subr.bf16.mxu0 0
  %499 = vmatpush1.bf16.msra.mxu0 0
  %500 = vmatprep.subr.bf16.mxu0 0
  %501 = vmatpush1.bf16.msra.mxu0 0
  %502 = vmatprep.subr.bf16.mxu0 0
  %503 = vmatpush1.bf16.msra.mxu0 0
  %504 = vmatprep.subr.bf16.mxu0 0
  %505 = vmatpush1.bf16.msra.mxu0 0
  %506 = vmatprep.mubr.bf16.mxu0 0
  %507 = vmatmul.mubr.bf16.gmra.mrb[0].mxu0 %v472
  %v508 = vpop.f32.mrb[0].mxu0
  %v509 = vadd.f32 0.0, %v508
  %v510 = vpop.f32.mrb[0].mxu0
  %v511 = vpop.f32.mrb[0].mxu0
  %v512 = vadd.f32 0.0, %v511
  %v513 = vpop.f32.mrb[0].mxu0
  %514 = vdwg.mxu0
  %v515 = vadd.f32 %v454, %v509
  %v516 = vadd.f32 %v455, %v512
  %s517 = scalar_lea.vmem %s1, 64
  %v518 = vld [vmem:[%s517] sm:$0xf]
  %v519 = vld [vmem:[%s517 + $0x4] sm:$0xf]
  %v522 = vunpack.c.l.b16 %v518
  %v523 = vunpack.c.l.b16 %v519
  %v524 = vpack.c.b16 %v523, %v522
  %525 = vrot.lane.b32.xlu0 %v36, 114
  %v526 = vpop.permute.xlu0 %525
  %527 = vrot.lane.b32.xlu0 %v37, 114
  %v528 = vpop.permute.xlu0 %527
  %vm529 = vcmask 932864
  %v530 = vsel %vm529, %v526, %v528
  %v533 = vsel %vm57, %v524, 0
  %535 = vmatprep.subr.bf16.mxu0 0
  %536 = vmatpush1.bf16.msra.mxu0 %v530
  %537 = vmatprep.subr.bf16.mxu0 0
  %538 = vmatpush1.bf16.msra.mxu0 0
  %539 = vmatprep.subr.bf16.mxu0 0
  %540 = vmatpush1.bf16.msra.mxu0 0
  %541 = vmatprep.subr.bf16.mxu0 0
  %542 = vmatpush1.bf16.msra.mxu0 0
  %543 = vmatprep.subr.bf16.mxu0 0
  %544 = vmatpush1.bf16.msra.mxu0 0
  %545 = vmatprep.subr.bf16.mxu0 0
  %546 = vmatpush1.bf16.msra.mxu0 0
  %547 = vmatprep.subr.bf16.mxu0 0
  %548 = vmatpush1.bf16.msra.mxu0 0
  %549 = vmatprep.subr.bf16.mxu0 0
  %550 = vmatpush1.bf16.msra.mxu0 0
  %551 = vmatprep.subr.bf16.mxu0 0
  %552 = vmatpush1.bf16.msra.mxu0 0
  %553 = vmatprep.subr.bf16.mxu0 0
  %554 = vmatpush1.bf16.msra.mxu0 0
  %555 = vmatprep.subr.bf16.mxu0 0
  %556 = vmatpush1.bf16.msra.mxu0 0
  %557 = vmatprep.subr.bf16.mxu0 0
  %558 = vmatpush1.bf16.msra.mxu0 0
  %559 = vmatprep.subr.bf16.mxu0 0
  %560 = vmatpush1.bf16.msra.mxu0 0
  %561 = vmatprep.subr.bf16.mxu0 0
  %562 = vmatpush1.bf16.msra.mxu0 0
  %563 = vmatprep.subr.bf16.mxu0 0
  %564 = vmatpush1.bf16.msra.mxu0 0
  %565 = vmatprep.subr.bf16.mxu0 0
  %566 = vmatpush1.bf16.msra.mxu0 0
  %567 = vmatprep.mubr.bf16.mxu0 0
  %568 = vmatmul.mubr.bf16.gmra.mrb[0].mxu0 %v533
  %v569 = vpop.f32.mrb[0].mxu0
  %v570 = vadd.f32 0.0, %v569
  %v571 = vpop.f32.mrb[0].mxu0
  %v572 = vpop.f32.mrb[0].mxu0
  %v573 = vadd.f32 0.0, %v572
  %v574 = vpop.f32.mrb[0].mxu0
  %575 = vdwg.mxu0
  %v576 = vadd.f32 %v515, %v570
  %v577 = vadd.f32 %v516, %v573
  %578 = vst [vmem:[%s2] sm:$0xff] %v576
  %579 = vst [vmem:[%s2 + $0x8] sm:$0xff] %v577
  // Predicated region
  $region10: #{forward.29} parent=0 // pred_check
    _
  $region11: #{forward.29} parent=0 // pred_check_branch
    %581 = sbr.rel (0) target = $region13
  $region12: #{forward.29} parent=0 // pred_region
    _
  $region13: #{forward.29} parent=0 // pred_fallthru
    _
  // Predicated region
  $region14: #{forward.29} parent=0 // pred_check
    _
  $region15: #{forward.29} parent=0 // pred_check_branch
    %583 = sbr.rel (0) target = $region17
  $region16: #{forward.29} parent=0 // pred_region
    _
  $region17: #{forward.29} parent=0 // pred_fallthru
    _

// kernel: forward.33
$region0: #{forward.33}
  #allocation0 [shape = 'u32[]', space=smem, size = 0x4, offset = 0x4, fixed_abs, tag = 'smem constant byte address 0x4 - core index']
  #allocation1 [shape = 'u32[144,128]{1,0:T(1,128)}', space=vmem, size = 0x12000, scoped, tag = 'internal scratch']
  %s0 = inlined_call_operand.vmem [shape: bf16[16,128], index: 0, kind: input, shape index: {}]
  %s1 = inlined_call_operand.vmem [shape: bf16[16,16], index: 1, kind: input, shape index: {}]
  %s2 = inlined_call_operand.vmem [shape: f32[16,128], index: 2, kind: input, shape index: {}]
  %s3 = inlined_call_operand.vmem [shape: f32[16,128], index: 3, kind: output, shape index: {}]
  %s4 = sld [smem:[#allocation0]]
  $region22: #{forward.33} parent=0
    _
  %s6 = ssub.s32 1, %s4
  %s7 = scalar_select 0, %s6, %s4
  // Predicated region
  $region2: #{forward.33} parent=0 // pred_check
    _
  $region3: #{forward.33} parent=0 // pred_check_branch
    %9 = sbr.rel (0) target = $region5
  $region4: #{forward.33} parent=0 // pred_region
    _
  $region5: #{forward.33} parent=0 // pred_fallthru
    _
  // Predicated region
  $region6: #{forward.33} parent=0 // pred_check
    _
  $region7: #{forward.33} parent=0 // pred_check_branch
    %11 = sbr.rel (0) target = $region9
  $region8: #{forward.33} parent=0 // pred_region
    _
  $region9: #{forward.33} parent=0 // pred_fallthru
    _
  // Predicated region
  $region10: #{forward.33} parent=0 // pred_check
    _
  $region11: #{forward.33} parent=0 // pred_check_branch
    %13 = sbr.rel (0) target = $region13
  $region12: #{forward.33} parent=0 // pred_region
    _
  $region13: #{forward.33} parent=0 // pred_fallthru
    _
  %v15 = vld [vmem:[%s0] sm:$0xf]
  %v16 = vld [vmem:[%s0 + $0x4] sm:$0xf]
  %v17 = vld [vmem:[%s1] sm:$0xf]
  %v18 = vld [vmem:[%s1 + $0x4] sm:$0xf]
  %v19 = vld [vmem:[%s2] sm:$0xff]
  %v20 = vld [vmem:[%s2 + $0x8] sm:$0xff]
  %v23 = vunpack.c.l.b16 %v17
  %v24 = vunpack.c.l.b16 %v18
  %v25 = vpack.c.b16 %v24, %v23
  %v28 = vunpack.c.l.b16 %v15
  %v29 = vunpack.c.l.b16 %v16
  %v30 = vpack.c.b16 %v29, %v28
  %vm32 = vcmask 130048
  %v34 = vsel %vm32, %v25, 0
  %36 = vmatprep.subr.bf16.mxu0 0
  %37 = vmatpush1.bf16.msra.mxu0 %v30
  %38 = vmatprep.subr.bf16.mxu0 0
  %39 = vmatpush1.bf16.msra.mxu0 0
  %40 = vmatprep.subr.bf16.mxu0 0
  %41 = vmatpush1.bf16.msra.mxu0 0
  %42 = vmatprep.subr.bf16.mxu0 0
  %43 = vmatpush1.bf16.msra.mxu0 0
  %44 = vmatprep.subr.bf16.mxu0 0
  %45 = vmatpush1.bf16.msra.mxu0 0
  %46 = vmatprep.subr.bf16.mxu0 0
  %47 = vmatpush1.bf16.msra.mxu0 0
  %48 = vmatprep.subr.bf16.mxu0 0
  %49 = vmatpush1.bf16.msra.mxu0 0
  %50 = vmatprep.subr.bf16.mxu0 0
  %51 = vmatpush1.bf16.msra.mxu0 0
  %52 = vmatprep.subr.bf16.mxu0 0
  %53 = vmatpush1.bf16.msra.mxu0 0
  %54 = vmatprep.subr.bf16.mxu0 0
  %55 = vmatpush1.bf16.msra.mxu0 0
  %56 = vmatprep.subr.bf16.mxu0 0
  %57 = vmatpush1.bf16.msra.mxu0 0
  %58 = vmatprep.subr.bf16.mxu0 0
  %59 = vmatpush1.bf16.msra.mxu0 0
  %60 = vmatprep.subr.bf16.mxu0 0
  %61 = vmatpush1.bf16.msra.mxu0 0
  %62 = vmatprep.subr.bf16.mxu0 0
  %63 = vmatpush1.bf16.msra.mxu0 0
  %64 = vmatprep.subr.bf16.mxu0 0
  %65 = vmatpush1.bf16.msra.mxu0 0
  %66 = vmatprep.subr.bf16.mxu0 0
  %67 = vmatpush1.bf16.msra.mxu0 0
  %68 = vmatprep.mubr.bf16.mxu0 0
  %69 = vmatmul.mubr.bf16.gmra.mrb[0].mxu0 %v34
  %v70 = vpop.f32.mrb[0].mxu0
  %v71 = vadd.f32 %v19, %v70
  %v72 = vpop.f32.mrb[0].mxu0
  %v73 = vpop.f32.mrb[0].mxu0
  %v74 = vadd.f32 %v20, %v73
  %v75 = vpop.f32.mrb[0].mxu0
  %76 = vdwg.mxu0
  %77 = vst [vmem:[%s3] sm:$0xff] %v71
  %78 = vst [vmem:[%s3 + $0x8] sm:$0xff] %v74
  // Predicated region
  $region14: #{forward.33} parent=0 // pred_check
    _
  $region15: #{forward.33} parent=0 // pred_check_branch
    %80 = sbr.rel (0) target = $region17
  $region16: #{forward.33} parent=0 // pred_region
    _
  $region17: #{forward.33} parent=0 // pred_fallthru
    _
  // Predicated region
  $region18: #{forward.33} parent=0 // pred_check
    _
  $region19: #{forward.33} parent=0 // pred_check_branch
    %82 = sbr.rel (0) target = $region21
  $region20: #{forward.33} parent=0 // pred_region
    _
  $region21: #{forward.33} parent=0 // pred_fallthru
    _

// kernel: forward.34
$region0: #{forward.34}
  #allocation0 [shape = 'u32[]', space=smem, size = 0x4, offset = 0x4, fixed_abs, tag = 'smem constant byte address 0x4 - core index']
  #allocation1 [shape = 'u32[144,128]{1,0:T(1,128)}', space=vmem, size = 0x12000, scoped, tag = 'internal scratch']
  %s0 = inlined_call_operand.vmem [shape: f32[16,128], index: 0, kind: input, shape index: {}]
  %s1 = inlined_call_operand.vmem [shape: bf16[32,16], index: 1, kind: input, shape index: {}]
  %s2 = inlined_call_operand.vmem [shape: f32[32,128], index: 2, kind: output, shape index: {}]
  %s3 = sld [smem:[#allocation0]]
  $region18: #{forward.34} parent=0
    _
  %s5 = ssub.s32 1, %s3
  %s6 = scalar_select 0, %s5, %s3
  // Predicated region
  $region2: #{forward.34} parent=0 // pred_check
    _
  $region3: #{forward.34} parent=0 // pred_check_branch
    %8 = sbr.rel (0) target = $region5
  $region4: #{forward.34} parent=0 // pred_region
    _
  $region5: #{forward.34} parent=0 // pred_fallthru
    _
  // Predicated region
  $region6: #{forward.34} parent=0 // pred_check
    _
  $region7: #{forward.34} parent=0 // pred_check_branch
    %10 = sbr.rel (0) target = $region9
  $region8: #{forward.34} parent=0 // pred_region
    _
  $region9: #{forward.34} parent=0 // pred_fallthru
    _
  %v12 = vld [vmem:[%s0] sm:$0xff]
  %v13 = vld [vmem:[%s0 + $0x8] sm:$0xff]
  %v14 = vmul.f32 %v12, 0.5
  %v15 = vmul.f32 %v13, 0.5
  %v16 = vmul.f32 %v12, 0.70710677
  %v17 = vmul.f32 %v13, 0.70710677
  %v18 = verf.f32.pop %v16
  %v19 = verf.f32.pop %v17
  %v20 = vadd.f32 %v18, 1.0
  %v21 = vadd.f32 %v19, 1.0
  %v22 = vmul.f32 %v14, %v20
  %v23 = vmul.f32 %v15, %v21
  %v24 = vld [vmem:[%s1] sm:$0xf]
  %v25 = vld [vmem:[%s1 + $0x4] sm:$0xf]
  %v26 = vld [vmem:[%s1 + $0x8] sm:$0xf]
  %v27 = vld [vmem:[%s1 + $0xc] sm:$0xf]
  %v28 = vpack.c.bf16 %v23, %v22
  %v33 = vunpack.c.l.b16 %v24
  %v34 = vunpack.c.l.b16 %v25
  %v35 = vunpack.c.l.b16 %v26
  %v36 = vunpack.c.l.b16 %v27
  %v37 = vpack.c.b16 %v34, %v33
  %v38 = vpack.c.b16 %v36, %v35
  %vm39 = vcmask 130048
  %v41 = vsel %vm39, %v37, 0
  %v44 = vsel %vm39, %v38, 0
  %46 = vmatprep.subr.bf16.mxu0 0
  %47 = vmatpush1.bf16.msra.mxu0 %v28
  %48 = vmatprep.subr.bf16.mxu0 0
  %49 = vmatpush1.bf16.msra.mxu0 0
  %50 = vmatprep.subr.bf16.mxu0 0
  %51 = vmatpush1.bf16.msra.mxu0 0
  %52 = vmatprep.subr.bf16.mxu0 0
  %53 = vmatpush1.bf16.msra.mxu0 0
  %54 = vmatprep.subr.bf16.mxu0 0
  %55 = vmatpush1.bf16.msra.mxu0 0
  %56 = vmatprep.subr.bf16.mxu0 0
  %57 = vmatpush1.bf16.msra.mxu0 0
  %58 = vmatprep.subr.bf16.mxu0 0
  %59 = vmatpush1.bf16.msra.mxu0 0
  %60 = vmatprep.subr.bf16.mxu0 0
  %61 = vmatpush1.bf16.msra.mxu0 0
  %62 = vmatprep.subr.bf16.mxu0 0
  %63 = vmatpush1.bf16.msra.mxu0 0
  %64 = vmatprep.subr.bf16.mxu0 0
  %65 = vmatpush1.bf16.msra.mxu0 0
  %66 = vmatprep.subr.bf16.mxu0 0
  %67 = vmatpush1.bf16.msra.mxu0 0
  %68 = vmatprep.subr.bf16.mxu0 0
  %69 = vmatpush1.bf16.msra.mxu0 0
  %70 = vmatprep.subr.bf16.mxu0 0
  %71 = vmatpush1.bf16.msra.mxu0 0
  %72 = vmatprep.subr.bf16.mxu0 0
  %73 = vmatpush1.bf16.msra.mxu0 0
  %74 = vmatprep.subr.bf16.mxu0 0
  %75 = vmatpush1.bf16.msra.mxu0 0
  %76 = vmatprep.subr.bf16.mxu0 0
  %77 = vmatpush1.bf16.msra.mxu0 0
  %78 = vmatprep.mubr.bf16.mxu0 0
  %79 = vmatmul.mubr.bf16.gmra.mrb[0].mxu0 %v41
  %v80 = vpop.f32.mrb[0].mxu0
  %v81 = vadd.f32 0.0, %v80
  %v82 = vpop.f32.mrb[0].mxu0
  %v83 = vpop.f32.mrb[0].mxu0
  %v84 = vadd.f32 0.0, %v83
  %v85 = vpop.f32.mrb[0].mxu0
  %86 = vmatprep.mubr.bf16.mxu0 0
  %87 = vmatmul.mubr.bf16.gmra.mrb[0].mxu0 %v44
  %v88 = vpop.f32.mrb[0].mxu0
  %v89 = vadd.f32 0.0, %v88
  %v90 = vpop.f32.mrb[0].mxu0
  %v91 = vpop.f32.mrb[0].mxu0
  %v92 = vadd.f32 0.0, %v91
  %v93 = vpop.f32.mrb[0].mxu0
  %94 = vdwg.mxu0
  %95 = vst [vmem:[%s2] sm:$0xff] %v81
  %96 = vst [vmem:[%s2 + $0x8] sm:$0xff] %v84
  %97 = vst [vmem:[%s2 + $0x10] sm:$0xff] %v89
  %98 = vst [vmem:[%s2 + $0x18] sm:$0xff] %v92
  // Predicated region
  $region10: #{forward.34} parent=0 // pred_check
    _
  $region11: #{forward.34} parent=0 // pred_check_branch
    %100 = sbr.rel (0) target = $region13
  $region12: #{forward.34} parent=0 // pred_region
    _
  $region13: #{forward.34} parent=0 // pred_fallthru
    _
  // Predicated region
  $region14: #{forward.34} parent=0 // pred_check
    _
  $region15: #{forward.34} parent=0 // pred_check_branch
    %102 = sbr.rel (0) target = $region17
  $region16: #{forward.34} parent=0 // pred_region
    _
  $region17: #{forward.34} parent=0 // pred_fallthru
    _

// kernel: forward.40
$region0: #{forward.40}
  #allocation0 [shape = 'u32[]', space=smem, size = 0x4, offset = 0x4, fixed_abs, tag = 'smem constant byte address 0x4 - core index']
  #allocation1 [shape = 'u32[144,128]{1,0:T(1,128)}', space=vmem, size = 0x12000, scoped, tag = 'internal scratch']
  %s0 = inlined_call_operand.vmem [shape: bf16[16,128], index: 0, kind: input, shape index: {}]
  %s1 = inlined_call_operand.vmem [shape: bf16[16,16], index: 1, kind: input, shape index: {}]
  %s2 = inlined_call_operand.vmem [shape: bf16[16,16], index: 2, kind: input, shape index: {}]
  %s3 = inlined_call_operand.vmem [shape: f32[16,128], index: 3, kind: output, shape index: {}]
  %s4 = sld [smem:[#allocation0]]
  $region22: #{forward.40} parent=0
    _
  %s6 = ssub.s32 1, %s4
  %s7 = scalar_select 0, %s6, %s4
  // Predicated region
  $region2: #{forward.40} parent=0 // pred_check
    _
  $region3: #{forward.40} parent=0 // pred_check_branch
    %9 = sbr.rel (0) target = $region5
  $region4: #{forward.40} parent=0 // pred_region
    _
  $region5: #{forward.40} parent=0 // pred_fallthru
    _
  // Predicated region
  $region6: #{forward.40} parent=0 // pred_check
    _
  $region7: #{forward.40} parent=0 // pred_check_branch
    %11 = sbr.rel (0) target = $region9
  $region8: #{forward.40} parent=0 // pred_region
    _
  $region9: #{forward.40} parent=0 // pred_fallthru
    _
  // Predicated region
  $region10: #{forward.40} parent=0 // pred_check
    _
  $region11: #{forward.40} parent=0 // pred_check_branch
    %13 = sbr.rel (0) target = $region13
  $region12: #{forward.40} parent=0 // pred_region
    _
  $region13: #{forward.40} parent=0 // pred_fallthru
    _
  %v15 = vld [vmem:[%s1] sm:$0xf]
  %v16 = vld [vmem:[%s1 + $0x4] sm:$0xf]
  %v17 = vld [vmem:[%s0] sm:$0xf]
  %v18 = vld [vmem:[%s0 + $0x4] sm:$0xf]
  %v21 = vunpack.c.l.b16 %v15
  %v22 = vunpack.c.l.b16 %v16
  %v23 = vpack.c.b16 %v22, %v21
  %v26 = vunpack.c.l.b16 %v17
  %v27 = vunpack.c.l.b16 %v18
  %v28 = vpack.c.b16 %v27, %v26
  %vm30 = vcmask 130048
  %v32 = vsel %vm30, %v23, 0
  %34 = vmatprep.subr.bf16.mxu0 0
  %35 = vmatpush1.bf16.msra.mxu0 %v28
  %36 = vmatprep.subr.bf16.mxu0 0
  %37 = vmatpush1.bf16.msra.mxu0 0
  %38 = vmatprep.subr.bf16.mxu0 0
  %39 = vmatpush1.bf16.msra.mxu0 0
  %40 = vmatprep.subr.bf16.mxu0 0
  %41 = vmatpush1.bf16.msra.mxu0 0
  %42 = vmatprep.subr.bf16.mxu0 0
  %43 = vmatpush1.bf16.msra.mxu0 0
  %44 = vmatprep.subr.bf16.mxu0 0
  %45 = vmatpush1.bf16.msra.mxu0 0
  %46 = vmatprep.subr.bf16.mxu0 0
  %47 = vmatpush1.bf16.msra.mxu0 0
  %48 = vmatprep.subr.bf16.mxu0 0
  %49 = vmatpush1.bf16.msra.mxu0 0
  %50 = vmatprep.subr.bf16.mxu0 0
  %51 = vmatpush1.bf16.msra.mxu0 0
  %52 = vmatprep.subr.bf16.mxu0 0
  %53 = vmatpush1.bf16.msra.mxu0 0
  %54 = vmatprep.subr.bf16.mxu0 0
  %55 = vmatpush1.bf16.msra.mxu0 0
  %56 = vmatprep.subr.bf16.mxu0 0
  %57 = vmatpush1.bf16.msra.mxu0 0
  %58 = vmatprep.subr.bf16.mxu0 0
  %59 = vmatpush1.bf16.msra.mxu0 0
  %60 = vmatprep.subr.bf16.mxu0 0
  %61 = vmatpush1.bf16.msra.mxu0 0
  %62 = vmatprep.subr.bf16.mxu0 0
  %63 = vmatpush1.bf16.msra.mxu0 0
  %64 = vmatprep.subr.bf16.mxu0 0
  %65 = vmatpush1.bf16.msra.mxu0 0
  %66 = vmatprep.mubr.bf16.mxu0 0
  %67 = vmatmul.mubr.bf16.gmra.mrb[0].mxu0 %v32
  %v68 = vpop.f32.mrb[0].mxu0
  %v69 = vadd.f32 0.0, %v68
  %v70 = vpop.f32.mrb[0].mxu0
  %v71 = vpop.f32.mrb[0].mxu0
  %v72 = vadd.f32 0.0, %v71
  %v73 = vpop.f32.mrb[0].mxu0
  %74 = vdwg.mxu0
  %v75 = vmul.f32 %v69, 0.5
  %v76 = vmul.f32 %v72, 0.5
  %v77 = vmul.f32 %v69, 0.70710677
  %v78 = vmul.f32 %v72, 0.70710677
  %v79 = verf.f32.pop %v77
  %v80 = verf.f32.pop %v78
  %v81 = vadd.f32 %v79, 1.0
  %v82 = vadd.f32 %v80, 1.0
  %v83 = vmul.f32 %v75, %v81
  %v84 = vmul.f32 %v76, %v82
  %v85 = vld [vmem:[%s2] sm:$0xf]
  %v86 = vld [vmem:[%s2 + $0x4] sm:$0xf]
  %v87 = vpack.c.bf16 %v84, %v83
  %v90 = vunpack.c.l.b16 %v85
  %v91 = vunpack.c.l.b16 %v86
  %v92 = vpack.c.b16 %v91, %v90
  %v94 = vsel %vm30, %v92, 0
  %96 = vmatprep.subr.bf16.mxu0 0
  %97 = vmatpush1.bf16.msra.mxu0 %v87
  %98 = vmatprep.subr.bf16.mxu0 0
  %99 = vmatpush1.bf16.msra.mxu0 0
  %100 = vmatprep.subr.bf16.mxu0 0
  %101 = vmatpush1.bf16.msra.mxu0 0
  %102 = vmatprep.subr.bf16.mxu0 0
  %103 = vmatpush1.bf16.msra.mxu0 0
  %104 = vmatprep.subr.bf16.mxu0 0
  %105 = vmatpush1.bf16.msra.mxu0 0
  %106 = vmatprep.subr.bf16.mxu0 0
  %107 = vmatpush1.bf16.msra.mxu0 0
  %108 = vmatprep.subr.bf16.mxu0 0
  %109 = vmatpush1.bf16.msra.mxu0 0
  %110 = vmatprep.subr.bf16.mxu0 0
  %111 = vmatpush1.bf16.msra.mxu0 0
  %112 = vmatprep.subr.bf16.mxu0 0
  %113 = vmatpush1.bf16.msra.mxu0 0
  %114 = vmatprep.subr.bf16.mxu0 0
  %115 = vmatpush1.bf16.msra.mxu0 0
  %116 = vmatprep.subr.bf16.mxu0 0
  %117 = vmatpush1.bf16.msra.mxu0 0
  %118 = vmatprep.subr.bf16.mxu0 0
  %119 = vmatpush1.bf16.msra.mxu0 0
  %120 = vmatprep.subr.bf16.mxu0 0
  %121 = vmatpush1.bf16.msra.mxu0 0
  %122 = vmatprep.subr.bf16.mxu0 0
  %123 = vmatpush1.bf16.msra.mxu0 0
  %124 = vmatprep.subr.bf16.mxu0 0
  %125 = vmatpush1.bf16.msra.mxu0 0
  %126 = vmatprep.subr.bf16.mxu0 0
  %127 = vmatpush1.bf16.msra.mxu0 0
  %128 = vmatprep.mubr.bf16.mxu0 0
  %129 = vmatmul.mubr.bf16.gmra.mrb[0].mxu0 %v94
  %v130 = vpop.f32.mrb[0].mxu0
  %v131 = vadd.f32 0.0, %v130
  %v132 = vpop.f32.mrb[0].mxu0
  %v133 = vpop.f32.mrb[0].mxu0
  %v134 = vadd.f32 0.0, %v133
  %v135 = vpop.f32.mrb[0].mxu0
  %136 = vdwg.mxu0
  %137 = vst [vmem:[%s3] sm:$0xff] %v131
  %138 = vst [vmem:[%s3 + $0x8] sm:$0xff] %v134
  // Predicated region
  $region14: #{forward.40} parent=0 // pred_check
    _
  $region15: #{forward.40} parent=0 // pred_check_branch
    %140 = sbr.rel (0) target = $region17
  $region16: #{forward.40} parent=0 // pred_region
    _
  $region17: #{forward.40} parent=0 // pred_fallthru
    _
  // Predicated region
  $region18: #{forward.40} parent=0 // pred_check
    _
  $region19: #{forward.40} parent=0 // pred_check_branch
    %142 = sbr.rel (0) target = $region21
  $region20: #{forward.40} parent=0 // pred_region
    _
  $region21: #{forward.40} parent=0 // pred_fallthru
    _

// kernel: forward.35
$region0: #{forward.35}
  #allocation0 [shape = 'u32[]', space=smem, size = 0x4, offset = 0x4, fixed_abs, tag = 'smem constant byte address 0x4 - core index']
  #allocation1 [shape = 'u32[144,128]{1,0:T(1,128)}', space=vmem, size = 0x12000, scoped, tag = 'internal scratch']
  %s0 = inlined_call_operand.vmem [shape: f32[16,256], index: 0, kind: input, shape index: {}]
  %s1 = inlined_call_operand.vmem [shape: bf16[9,8,16], index: 1, kind: input, shape index: {}]
  %s2 = inlined_call_operand.vmem [shape: f32[8,128], index: 2, kind: output, shape index: {}]
  %s3 = sld [smem:[#allocation0]]
  $region18: #{forward.35} parent=0
    _
  %s5 = ssub.s32 1, %s3
  %s6 = scalar_select 0, %s5, %s3
  // Predicated region
  $region2: #{forward.35} parent=0 // pred_check
    _
  $region3: #{forward.35} parent=0 // pred_check_branch
    %8 = sbr.rel (0) target = $region5
  $region4: #{forward.35} parent=0 // pred_region
    _
  $region5: #{forward.35} parent=0 // pred_fallthru
    _
  // Predicated region
  $region6: #{forward.35} parent=0 // pred_check
    _
  $region7: #{forward.35} parent=0 // pred_check_branch
    %10 = sbr.rel (0) target = $region9
  $region8: #{forward.35} parent=0 // pred_region
    _
  $region9: #{forward.35} parent=0 // pred_fallthru
    _
  %v12 = vld [vmem:[%s0] sm:$0xff]
  %v13 = vld [vmem:[%s0 + $0x8] sm:$0xff]
  %v14 = vld [vmem:[%s0 + $0x10] sm:$0xff]
  %v15 = vld [vmem:[%s0 + $0x18] sm:$0xff]
  %v16 = vmul.f32 %v12, 0.5
  %v17 = vmul.f32 %v13, 0.5
  %v18 = vmul.f32 %v14, 0.5
  %v19 = vmul.f32 %v15, 0.5
  %v20 = vmul.f32 %v12, 0.70710677
  %v21 = vmul.f32 %v13, 0.70710677
  %v22 = vmul.f32 %v14, 0.70710677
  %v23 = vmul.f32 %v15, 0.70710677
  %v24 = verf.f32.pop %v20
  %v25 = verf.f32.pop %v21
  %v26 = verf.f32.pop %v22
  %v27 = verf.f32.pop %v23
  %v28 = vadd.f32 %v24, 1.0
  %v29 = vadd.f32 %v25, 1.0
  %v30 = vadd.f32 %v26, 1.0
  %v31 = vadd.f32 %v27, 1.0
  %v32 = vmul.f32 %v16, %v28
  %v33 = vmul.f32 %v17, %v29
  %v34 = vmul.f32 %v18, %v30
  %v35 = vmul.f32 %v19, %v31
  %v36 = vpack.c.bf16 %v34, %v32
  %v37 = vpack.c.bf16 %v35, %v33
  %v38 = vld [vmem:[%s1] sm:$0xf]
  %s39 = scalar_lea.vmem %s1, 4
  %v40 = vld [vmem:[%s39] sm:$0xf]
  %43 = vrot.lane.b32.xlu0 %v36, 127
  %v44 = vpop.permute.xlu0 %43
  %45 = vrot.lane.b32.xlu0 %v37, 127
  %v46 = vpop.permute.xlu0 %45
  %vm47 = vcmask 1039360
  %v48 = vsel %vm47, %v44, %v46
  %vm50 = vcmask 130048
  %v52 = vsel %vm50, %v40, 0
  %54 = vmatprep.subr.bf16.mxu0 0
  %55 = vmatpush1.bf16.msra.mxu0 %v48
  %56 = vmatprep.subr.bf16.mxu0 0
  %57 = vmatpush1.bf16.msra.mxu0 0
  %58 = vmatprep.subr.bf16.mxu0 0
  %59 = vmatpush1.bf16.msra.mxu0 0
  %60 = vmatprep.subr.bf16.mxu0 0
  %61 = vmatpush1.bf16.msra.mxu0 0
  %62 = vmatprep.subr.bf16.mxu0 0
  %63 = vmatpush1.bf16.msra.mxu0 0
  %64 = vmatprep.subr.bf16.mxu0 0
  %65 = vmatpush1.bf16.msra.mxu0 0
  %66 = vmatprep.subr.bf16.mxu0 0
  %67 = vmatpush1.bf16.msra.mxu0 0
  %68 = vmatprep.subr.bf16.mxu0 0
  %69 = vmatpush1.bf16.msra.mxu0 0
  %70 = vmatprep.subr.bf16.mxu0 0
  %71 = vmatpush1.bf16.msra.mxu0 0
  %72 = vmatprep.subr.bf16.mxu0 0
  %73 = vmatpush1.bf16.msra.mxu0 0
  %74 = vmatprep.subr.bf16.mxu0 0
  %75 = vmatpush1.bf16.msra.mxu0 0
  %76 = vmatprep.subr.bf16.mxu0 0
  %77 = vmatpush1.bf16.msra.mxu0 0
  %78 = vmatprep.subr.bf16.mxu0 0
  %79 = vmatpush1.bf16.msra.mxu0 0
  %80 = vmatprep.subr.bf16.mxu0 0
  %81 = vmatpush1.bf16.msra.mxu0 0
  %82 = vmatprep.subr.bf16.mxu0 0
  %83 = vmatpush1.bf16.msra.mxu0 0
  %84 = vmatprep.subr.bf16.mxu0 0
  %85 = vmatpush1.bf16.msra.mxu0 0
  %86 = vmatprep.mubr.bf16.mxu0 0
  %87 = vmatmul.mubr.bf16.gmra.mrb[0].mxu0 %v52
  %v88 = vpop.f32.mrb[0].mxu0
  %v89 = vadd.f32 0.0, %v88
  %v90 = vpop.f32.mrb[0].mxu0
  %v91 = vpop.f32.mrb[0].mxu0
  %v92 = vpop.f32.mrb[0].mxu0
  %93 = vdwg.mxu0
  %v95 = vsel %vm50, %v38, 0
  %97 = vmatprep.subr.bf16.mxu0 0
  %98 = vmatpush1.bf16.msra.mxu0 %v36
  %99 = vmatprep.subr.bf16.mxu0 0
  %100 = vmatpush1.bf16.msra.mxu0 0
  %101 = vmatprep.subr.bf16.mxu0 0
  %102 = vmatpush1.bf16.msra.mxu0 0
  %103 = vmatprep.subr.bf16.mxu0 0
  %104 = vmatpush1.bf16.msra.mxu0 0
  %105 = vmatprep.subr.bf16.mxu0 0
  %106 = vmatpush1.bf16.msra.mxu0 0
  %107 = vmatprep.subr.bf16.mxu0 0
  %108 = vmatpush1.bf16.msra.mxu0 0
  %109 = vmatprep.subr.bf16.mxu0 0
  %110 = vmatpush1.bf16.msra.mxu0 0
  %111 = vmatprep.subr.bf16.mxu0 0
  %112 = vmatpush1.bf16.msra.mxu0 0
  %113 = vmatprep.subr.bf16.mxu0 0
  %114 = vmatpush1.bf16.msra.mxu0 0
  %115 = vmatprep.subr.bf16.mxu0 0
  %116 = vmatpush1.bf16.msra.mxu0 0
  %117 = vmatprep.subr.bf16.mxu0 0
  %118 = vmatpush1.bf16.msra.mxu0 0
  %119 = vmatprep.subr.bf16.mxu0 0
  %120 = vmatpush1.bf16.msra.mxu0 0
  %121 = vmatprep.subr.bf16.mxu0 0
  %122 = vmatpush1.bf16.msra.mxu0 0
  %123 = vmatprep.subr.bf16.mxu0 0
  %124 = vmatpush1.bf16.msra.mxu0 0
  %125 = vmatprep.subr.bf16.mxu0 0
  %126 = vmatpush1.bf16.msra.mxu0 0
  %127 = vmatprep.subr.bf16.mxu0 0
  %128 = vmatpush1.bf16.msra.mxu0 0
  %129 = vmatprep.mubr.bf16.mxu0 0
  %130 = vmatmul.mubr.bf16.gmra.mrb[0].mxu0 %v95
  %v131 = vpop.f32.mrb[0].mxu0
  %v132 = vadd.f32 %v89, %v131
  %v133 = vpop.f32.mrb[0].mxu0
  %v134 = vpop.f32.mrb[0].mxu0
  %v135 = vpop.f32.mrb[0].mxu0
  %136 = vdwg.mxu0
  %s137 = scalar_lea.vmem %s1, 8
  %v138 = vld [vmem:[%s137] sm:$0xf]
  %139 = vrot.lane.b32.xlu0 %v36, 126
  %v140 = vpop.permute.xlu0 %139
  %141 = vrot.lane.b32.xlu0 %v37, 126
  %v142 = vpop.permute.xlu0 %141
  %vm143 = vcmask 1031168
  %v144 = vsel %vm143, %v140, %v142
  %v147 = vsel %vm50, %v138, 0
  %149 = vmatprep.subr.bf16.mxu0 0
  %150 = vmatpush1.bf16.msra.mxu0 %v144
  %151 = vmatprep.subr.bf16.mxu0 0
  %152 = vmatpush1.bf16.msra.mxu0 0
  %153 = vmatprep.subr.bf16.mxu0 0
  %154 = vmatpush1.bf16.msra.mxu0 0
  %155 = vmatprep.subr.bf16.mxu0 0
  %156 = vmatpush1.bf16.msra.mxu0 0
  %157 = vmatprep.subr.bf16.mxu0 0
  %158 = vmatpush1.bf16.msra.mxu0 0
  %159 = vmatprep.subr.bf16.mxu0 0
  %160 = vmatpush1.bf16.msra.mxu0 0
  %161 = vmatprep.subr.bf16.mxu0 0
  %162 = vmatpush1.bf16.msra.mxu0 0
  %163 = vmatprep.subr.bf16.mxu0 0
  %164 = vmatpush1.bf16.msra.mxu0 0
  %165 = vmatprep.subr.bf16.mxu0 0
  %166 = vmatpush1.bf16.msra.mxu0 0
  %167 = vmatprep.subr.bf16.mxu0 0
  %168 = vmatpush1.bf16.msra.mxu0 0
  %169 = vmatprep.subr.bf16.mxu0 0
  %170 = vmatpush1.bf16.msra.mxu0 0
  %171 = vmatprep.subr.bf16.mxu0 0
  %172 = vmatpush1.bf16.msra.mxu0 0
  %173 = vmatprep.subr.bf16.mxu0 0
  %174 = vmatpush1.bf16.msra.mxu0 0
  %175 = vmatprep.subr.bf16.mxu0 0
  %176 = vmatpush1.bf16.msra.mxu0 0
  %177 = vmatprep.subr.bf16.mxu0 0
  %178 = vmatpush1.bf16.msra.mxu0 0
  %179 = vmatprep.subr.bf16.mxu0 0
  %180 = vmatpush1.bf16.msra.mxu0 0
  %181 = vmatprep.mubr.bf16.mxu0 0
  %182 = vmatmul.mubr.bf16.gmra.mrb[0].mxu0 %v147
  %v183 = vpop.f32.mrb[0].mxu0
  %v184 = vadd.f32 0.0, %v183
  %v185 = vpop.f32.mrb[0].mxu0
  %v186 = vpop.f32.mrb[0].mxu0
  %v187 = vpop.f32.mrb[0].mxu0
  %188 = vdwg.mxu0
  %v189 = vadd.f32 %v132, %v184
  %s190 = scalar_lea.vmem %s1, 12
  %v191 = vld [vmem:[%s190] sm:$0xf]
  %192 = vrot.lane.b32.xlu0 %v36, 118
  %v193 = vpop.permute.xlu0 %192
  %194 = vrot.lane.b32.xlu0 %v37, 118
  %v195 = vpop.permute.xlu0 %194
  %vm196 = vcmask 965632
  %v197 = vsel %vm196, %v193, %v195
  %v200 = vsel %vm50, %v191, 0
  %202 = vmatprep.subr.bf16.mxu0 0
  %203 = vmatpush1.bf16.msra.mxu0 %v197
  %204 = vmatprep.subr.bf16.mxu0 0
  %205 = vmatpush1.bf16.msra.mxu0 0
  %206 = vmatprep.subr.bf16.mxu0 0
  %207 = vmatpush1.bf16.msra.mxu0 0
  %208 = vmatprep.subr.bf16.mxu0 0
  %209 = vmatpush1.bf16.msra.mxu0 0
  %210 = vmatprep.subr.bf16.mxu0 0
  %211 = vmatpush1.bf16.msra.mxu0 0
  %212 = vmatprep.subr.bf16.mxu0 0
  %213 = vmatpush1.bf16.msra.mxu0 0
  %214 = vmatprep.subr.bf16.mxu0 0
  %215 = vmatpush1.bf16.msra.mxu0 0
  %216 = vmatprep.subr.bf16.mxu0 0
  %217 = vmatpush1.bf16.msra.mxu0 0
  %218 = vmatprep.subr.bf16.mxu0 0
  %219 = vmatpush1.bf16.msra.mxu0 0
  %220 = vmatprep.subr.bf16.mxu0 0
  %221 = vmatpush1.bf16.msra.mxu0 0
  %222 = vmatprep.subr.bf16.mxu0 0
  %223 = vmatpush1.bf16.msra.mxu0 0
  %224 = vmatprep.subr.bf16.mxu0 0
  %225 = vmatpush1.bf16.msra.mxu0 0
  %226 = vmatprep.subr.bf16.mxu0 0
  %227 = vmatpush1.bf16.msra.mxu0 0
  %228 = vmatprep.subr.bf16.mxu0 0
  %229 = vmatpush1.bf16.msra.mxu0 0
  %230 = vmatprep.subr.bf16.mxu0 0
  %231 = vmatpush1.bf16.msra.mxu0 0
  %232 = vmatprep.subr.bf16.mxu0 0
  %233 = vmatpush1.bf16.msra.mxu0 0
  %234 = vmatprep.mubr.bf16.mxu0 0
  %235 = vmatmul.mubr.bf16.gmra.mrb[0].mxu0 %v200
  %v236 = vpop.f32.mrb[0].mxu0
  %v237 = vadd.f32 0.0, %v236
  %v238 = vpop.f32.mrb[0].mxu0
  %v239 = vpop.f32.mrb[0].mxu0
  %v240 = vpop.f32.mrb[0].mxu0
  %241 = vdwg.mxu0
  %v242 = vadd.f32 %v189, %v237
  %s243 = scalar_lea.vmem %s1, 16
  %v244 = vld [vmem:[%s243] sm:$0xf]
  %245 = vrot.lane.b32.xlu0 %v36, 117
  %v246 = vpop.permute.xlu0 %245
  %247 = vrot.lane.b32.xlu0 %v37, 117
  %v248 = vpop.permute.xlu0 %247
  %vm249 = vcmask 957440
  %v250 = vsel %vm249, %v246, %v248
  %v253 = vsel %vm50, %v244, 0
  %255 = vmatprep.subr.bf16.mxu0 0
  %256 = vmatpush1.bf16.msra.mxu0 %v250
  %257 = vmatprep.subr.bf16.mxu0 0
  %258 = vmatpush1.bf16.msra.mxu0 0
  %259 = vmatprep.subr.bf16.mxu0 0
  %260 = vmatpush1.bf16.msra.mxu0 0
  %261 = vmatprep.subr.bf16.mxu0 0
  %262 = vmatpush1.bf16.msra.mxu0 0
  %263 = vmatprep.subr.bf16.mxu0 0
  %264 = vmatpush1.bf16.msra.mxu0 0
  %265 = vmatprep.subr.bf16.mxu0 0
  %266 = vmatpush1.bf16.msra.mxu0 0
  %267 = vmatprep.subr.bf16.mxu0 0
  %268 = vmatpush1.bf16.msra.mxu0 0
  %269 = vmatprep.subr.bf16.mxu0 0
  %270 = vmatpush1.bf16.msra.mxu0 0
  %271 = vmatprep.subr.bf16.mxu0 0
  %272 = vmatpush1.bf16.msra.mxu0 0
  %273 = vmatprep.subr.bf16.mxu0 0
  %274 = vmatpush1.bf16.msra.mxu0 0
  %275 = vmatprep.subr.bf16.mxu0 0
  %276 = vmatpush1.bf16.msra.mxu0 0
  %277 = vmatprep.subr.bf16.mxu0 0
  %278 = vmatpush1.bf16.msra.mxu0 0
  %279 = vmatprep.subr.bf16.mxu0 0
  %280 = vmatpush1.bf16.msra.mxu0 0
  %281 = vmatprep.subr.bf16.mxu0 0
  %282 = vmatpush1.bf16.msra.mxu0 0
  %283 = vmatprep.subr.bf16.mxu0 0
  %284 = vmatpush1.bf16.msra.mxu0 0
  %285 = vmatprep.subr.bf16.mxu0 0
  %286 = vmatpush1.bf16.msra.mxu0 0
  %287 = vmatprep.mubr.bf16.mxu0 0
  %288 = vmatmul.mubr.bf16.gmra.mrb[0].mxu0 %v253
  %v289 = vpop.f32.mrb[0].mxu0
  %v290 = vadd.f32 0.0, %v289
  %v291 = vpop.f32.mrb[0].mxu0
  %v292 = vpop.f32.mrb[0].mxu0
  %v293 = vpop.f32.mrb[0].mxu0
  %294 = vdwg.mxu0
  %v295 = vadd.f32 %v242, %v290
  %s296 = scalar_lea.vmem %s1, 20
  %v297 = vld [vmem:[%s296] sm:$0xf]
  %298 = vrot.lane.b32.xlu0 %v36, 116
  %v299 = vpop.permute.xlu0 %298
  %300 = vrot.lane.b32.xlu0 %v37, 116
  %v301 = vpop.permute.xlu0 %300
  %vm302 = vcmask 949248
  %v303 = vsel %vm302, %v299, %v301
  %v306 = vsel %vm50, %v297, 0
  %308 = vmatprep.subr.bf16.mxu0 0
  %309 = vmatpush1.bf16.msra.mxu0 %v303
  %310 = vmatprep.subr.bf16.mxu0 0
  %311 = vmatpush1.bf16.msra.mxu0 0
  %312 = vmatprep.subr.bf16.mxu0 0
  %313 = vmatpush1.bf16.msra.mxu0 0
  %314 = vmatprep.subr.bf16.mxu0 0
  %315 = vmatpush1.bf16.msra.mxu0 0
  %316 = vmatprep.subr.bf16.mxu0 0
  %317 = vmatpush1.bf16.msra.mxu0 0
  %318 = vmatprep.subr.bf16.mxu0 0
  %319 = vmatpush1.bf16.msra.mxu0 0
  %320 = vmatprep.subr.bf16.mxu0 0
  %321 = vmatpush1.bf16.msra.mxu0 0
  %322 = vmatprep.subr.bf16.mxu0 0
  %323 = vmatpush1.bf16.msra.mxu0 0
  %324 = vmatprep.subr.bf16.mxu0 0
  %325 = vmatpush1.bf16.msra.mxu0 0
  %326 = vmatprep.subr.bf16.mxu0 0
  %327 = vmatpush1.bf16.msra.mxu0 0
  %328 = vmatprep.subr.bf16.mxu0 0
  %329 = vmatpush1.bf16.msra.mxu0 0
  %330 = vmatprep.subr.bf16.mxu0 0
  %331 = vmatpush1.bf16.msra.mxu0 0
  %332 = vmatprep.subr.bf16.mxu0 0
  %333 = vmatpush1.bf16.msra.mxu0 0
  %334 = vmatprep.subr.bf16.mxu0 0
  %335 = vmatpush1.bf16.msra.mxu0 0
  %336 = vmatprep.subr.bf16.mxu0 0
  %337 = vmatpush1.bf16.msra.mxu0 0
  %338 = vmatprep.subr.bf16.mxu0 0
  %339 = vmatpush1.bf16.msra.mxu0 0
  %340 = vmatprep.mubr.bf16.mxu0 0
  %341 = vmatmul.mubr.bf16.gmra.mrb[0].mxu0 %v306
  %v342 = vpop.f32.mrb[0].mxu0
  %v343 = vadd.f32 0.0, %v342
  %v344 = vpop.f32.mrb[0].mxu0
  %v345 = vpop.f32.mrb[0].mxu0
  %v346 = vpop.f32.mrb[0].mxu0
  %347 = vdwg.mxu0
  %v348 = vadd.f32 %v295, %v343
  %s349 = scalar_lea.vmem %s1, 24
  %v350 = vld [vmem:[%s349] sm:$0xf]
  %351 = vrot.lane.b32.xlu0 %v36, 108
  %v352 = vpop.permute.xlu0 %351
  %353 = vrot.lane.b32.xlu0 %v37, 108
  %v354 = vpop.permute.xlu0 %353
  %vm355 = vcmask 883712
  %v356 = vsel %vm355, %v352, %v354
  %v359 = vsel %vm50, %v350, 0
  %361 = vmatprep.subr.bf16.mxu0 0
  %362 = vmatpush1.bf16.msra.mxu0 %v356
  %363 = vmatprep.subr.bf16.mxu0 0
  %364 = vmatpush1.bf16.msra.mxu0 0
  %365 = vmatprep.subr.bf16.mxu0 0
  %366 = vmatpush1.bf16.msra.mxu0 0
  %367 = vmatprep.subr.bf16.mxu0 0
  %368 = vmatpush1.bf16.msra.mxu0 0
  %369 = vmatprep.subr.bf16.mxu0 0
  %370 = vmatpush1.bf16.msra.mxu0 0
  %371 = vmatprep.subr.bf16.mxu0 0
  %372 = vmatpush1.bf16.msra.mxu0 0
  %373 = vmatprep.subr.bf16.mxu0 0
  %374 = vmatpush1.bf16.msra.mxu0 0
  %375 = vmatprep.subr.bf16.mxu0 0
  %376 = vmatpush1.bf16.msra.mxu0 0
  %377 = vmatprep.subr.bf16.mxu0 0
  %378 = vmatpush1.bf16.msra.mxu0 0
  %379 = vmatprep.subr.bf16.mxu0 0
  %380 = vmatpush1.bf16.msra.mxu0 0
  %381 = vmatprep.subr.bf16.mxu0 0
  %382 = vmatpush1.bf16.msra.mxu0 0
  %383 = vmatprep.subr.bf16.mxu0 0
  %384 = vmatpush1.bf16.msra.mxu0 0
  %385 = vmatprep.subr.bf16.mxu0 0
  %386 = vmatpush1.bf16.msra.mxu0 0
  %387 = vmatprep.subr.bf16.mxu0 0
  %388 = vmatpush1.bf16.msra.mxu0 0
  %389 = vmatprep.subr.bf16.mxu0 0
  %390 = vmatpush1.bf16.msra.mxu0 0
  %391 = vmatprep.subr.bf16.mxu0 0
  %392 = vmatpush1.bf16.msra.mxu0 0
  %393 = vmatprep.mubr.bf16.mxu0 0
  %394 = vmatmul.mubr.bf16.gmra.mrb[0].mxu0 %v359
  %v395 = vpop.f32.mrb[0].mxu0
  %v396 = vadd.f32 0.0, %v395
  %v397 = vpop.f32.mrb[0].mxu0
  %v398 = vpop.f32.mrb[0].mxu0
  %v399 = vpop.f32.mrb[0].mxu0
  %400 = vdwg.mxu0
  %v401 = vadd.f32 %v348, %v396
  %s402 = scalar_lea.vmem %s1, 28
  %v403 = vld [vmem:[%s402] sm:$0xf]
  %404 = vrot.lane.b32.xlu0 %v36, 107
  %v405 = vpop.permute.xlu0 %404
  %406 = vrot.lane.b32.xlu0 %v37, 107
  %v407 = vpop.permute.xlu0 %406
  %vm408 = vcmask 875520
  %v409 = vsel %vm408, %v405, %v407
  %v412 = vsel %vm50, %v403, 0
  %414 = vmatprep.subr.bf16.mxu0 0
  %415 = vmatpush1.bf16.msra.mxu0 %v409
  %416 = vmatprep.subr.bf16.mxu0 0
  %417 = vmatpush1.bf16.msra.mxu0 0
  %418 = vmatprep.subr.bf16.mxu0 0
  %419 = vmatpush1.bf16.msra.mxu0 0
  %420 = vmatprep.subr.bf16.mxu0 0
  %421 = vmatpush1.bf16.msra.mxu0 0
  %422 = vmatprep.subr.bf16.mxu0 0
  %423 = vmatpush1.bf16.msra.mxu0 0
  %424 = vmatprep.subr.bf16.mxu0 0
  %425 = vmatpush1.bf16.msra.mxu0 0
  %426 = vmatprep.subr.bf16.mxu0 0
  %427 = vmatpush1.bf16.msra.mxu0 0
  %428 = vmatprep.subr.bf16.mxu0 0
  %429 = vmatpush1.bf16.msra.mxu0 0
  %430 = vmatprep.subr.bf16.mxu0 0
  %431 = vmatpush1.bf16.msra.mxu0 0
  %432 = vmatprep.subr.bf16.mxu0 0
  %433 = vmatpush1.bf16.msra.mxu0 0
  %434 = vmatprep.subr.bf16.mxu0 0
  %435 = vmatpush1.bf16.msra.mxu0 0
  %436 = vmatprep.subr.bf16.mxu0 0
  %437 = vmatpush1.bf16.msra.mxu0 0
  %438 = vmatprep.subr.bf16.mxu0 0
  %439 = vmatpush1.bf16.msra.mxu0 0
  %440 = vmatprep.subr.bf16.mxu0 0
  %441 = vmatpush1.bf16.msra.mxu0 0
  %442 = vmatprep.subr.bf16.mxu0 0
  %443 = vmatpush1.bf16.msra.mxu0 0
  %444 = vmatprep.subr.bf16.mxu0 0
  %445 = vmatpush1.bf16.msra.mxu0 0
  %446 = vmatprep.mubr.bf16.mxu0 0
  %447 = vmatmul.mubr.bf16.gmra.mrb[0].mxu0 %v412
  %v448 = vpop.f32.mrb[0].mxu0
  %v449 = vadd.f32 0.0, %v448
  %v450 = vpop.f32.mrb[0].mxu0
  %v451 = vpop.f32.mrb[0].mxu0
  %v452 = vpop.f32.mrb[0].mxu0
  %453 = vdwg.mxu0
  %v454 = vadd.f32 %v401, %v449
  %s455 = scalar_lea.vmem %s1, 32
  %v456 = vld [vmem:[%s455] sm:$0xf]
  %457 = vrot.lane.b32.xlu0 %v36, 106
  %v458 = vpop.permute.xlu0 %457
  %459 = vrot.lane.b32.xlu0 %v37, 106
  %v460 = vpop.permute.xlu0 %459
  %vm461 = vcmask 867328
  %v462 = vsel %vm461, %v458, %v460
  %v465 = vsel %vm50, %v456, 0
  %467 = vmatprep.subr.bf16.mxu0 0
  %468 = vmatpush1.bf16.msra.mxu0 %v462
  %469 = vmatprep.subr.bf16.mxu0 0
  %470 = vmatpush1.bf16.msra.mxu0 0
  %471 = vmatprep.subr.bf16.mxu0 0
  %472 = vmatpush1.bf16.msra.mxu0 0
  %473 = vmatprep.subr.bf16.mxu0 0
  %474 = vmatpush1.bf16.msra.mxu0 0
  %475 = vmatprep.subr.bf16.mxu0 0
  %476 = vmatpush1.bf16.msra.mxu0 0
  %477 = vmatprep.subr.bf16.mxu0 0
  %478 = vmatpush1.bf16.msra.mxu0 0
  %479 = vmatprep.subr.bf16.mxu0 0
  %480 = vmatpush1.bf16.msra.mxu0 0
  %481 = vmatprep.subr.bf16.mxu0 0
  %482 = vmatpush1.bf16.msra.mxu0 0
  %483 = vmatprep.subr.bf16.mxu0 0
  %484 = vmatpush1.bf16.msra.mxu0 0
  %485 = vmatprep.subr.bf16.mxu0 0
  %486 = vmatpush1.bf16.msra.mxu0 0
  %487 = vmatprep.subr.bf16.mxu0 0
  %488 = vmatpush1.bf16.msra.mxu0 0
  %489 = vmatprep.subr.bf16.mxu0 0
  %490 = vmatpush1.bf16.msra.mxu0 0
  %491 = vmatprep.subr.bf16.mxu0 0
  %492 = vmatpush1.bf16.msra.mxu0 0
  %493 = vmatprep.subr.bf16.mxu0 0
  %494 = vmatpush1.bf16.msra.mxu0 0
  %495 = vmatprep.subr.bf16.mxu0 0
  %496 = vmatpush1.bf16.msra.mxu0 0
  %497 = vmatprep.subr.bf16.mxu0 0
  %498 = vmatpush1.bf16.msra.mxu0 0
  %499 = vmatprep.mubr.bf16.mxu0 0
  %500 = vmatmul.mubr.bf16.gmra.mrb[0].mxu0 %v465
  %v501 = vpop.f32.mrb[0].mxu0
  %v502 = vadd.f32 0.0, %v501
  %v503 = vpop.f32.mrb[0].mxu0
  %v504 = vpop.f32.mrb[0].mxu0
  %v505 = vpop.f32.mrb[0].mxu0
  %506 = vdwg.mxu0
  %v507 = vadd.f32 %v454, %v502
  %508 = vst [vmem:[%s2] sm:$0xff] %v507
  // Predicated region
  $region10: #{forward.35} parent=0 // pred_check
    _
  $region11: #{forward.35} parent=0 // pred_check_branch
    %510 = sbr.rel (0) target = $region13
  $region12: #{forward.35} parent=0 // pred_region
    _
  $region13: #{forward.35} parent=0 // pred_fallthru
    _
  // Predicated region
  $region14: #{forward.35} parent=0 // pred_check
    _
  $region15: #{forward.35} parent=0 // pred_check_branch
    %512 = sbr.rel (0) target = $region17
  $region16: #{forward.35} parent=0 // pred_region
    _
  $region17: #{forward.35} parent=0 // pred_fallthru
    _

</llo_original>
